<compile_context>
chip_gen: v6e
topology: v6e:2x2x1
jax: 0.10.0
libtpu: 0.0.40
codegen_flags: <defaults>
</compile_context>

<pallas_src>
import functools

import jax
import jax.numpy as jnp
from jax.experimental import pallas as pl
from jax.experimental.pallas import tpu as pltpu

LANE = 128
_VMEM_LIMIT = 32 * 1024 * 1024


def _round_up(v, m):
    return (v + m - 1) // m * m


# ------------------------------ plain-JAX glue ------------------------------

def reflect_pad(x, pad):
    if pad == 0:
        return x
    return jnp.pad(x, ((0, 0), (0, 0), (pad, pad), (pad, pad)), mode="reflect")


def im2col_lanes(x, kh, kw, stride):
    """(N, C, H, W) -> (N, C*kh*kw, M_pad) bf16 patches, K ordered (C, kh, kw).

    M = OH*OW is zero-padded to a multiple of 128 so the Pallas kernels see a
    lane-dense RHS and produce lane-dense (unmasked) stores.
    """
    N, C, H, W = x.shape
    assert H >= kh and W >= kw, (
        f"spatial size ({H},{W}) smaller than kernel ({kh},{kw})")
    oh = (H - kh) // stride + 1
    ow = (W - kw) // stride + 1
    taps = []
    for i in range(kh):
        for j in range(kw):
            taps.append(x[:, :, i:i + stride * (oh - 1) + 1:stride,
                              j:j + stride * (ow - 1) + 1:stride])
    p = jnp.stack(taps, axis=2)                        # (N, C, kh*kw, OH, OW)
    m = oh * ow
    m_pad = _round_up(m, LANE)
    a = p.reshape(N, C * kh * kw, m)
    a = jnp.pad(a, ((0, 0), (0, 0), (0, m_pad - m)))
    return a.astype(jnp.bfloat16), oh, ow, m_pad


# ------------------------------ Pallas kernels -------------------------------

def _conv_in_lrelu_kernel(a_ref, w_ref, g_ref, b_ref, o_ref, acc_ref, *,
                          m_valid, eps, slope):
    """Fused Conv(k4, no bias) -> InstanceNorm2d(affine) -> LeakyReLU(0.2).

    Grid = (batch, K-tiles).  Per step:
      a_ref: (tk, M_pad)   bf16  transposed im2col patches of one sample
      w_ref: (C_out, tk)   bf16  conv-weight K slice
    acc_ref (C_out, M_pad) f32 accumulates the matmul over K; the IN + affine +
    LeakyReLU epilogue and the single lane-dense store run on the last K step.
    """
    k = pl.program_id(1)

    @pl.when(k == 0)
    def _init():
        acc_ref[...] = jnp.zeros_like(acc_ref)

    acc_ref[...] += jnp.dot(w_ref[...], a_ref[...],
                            preferred_element_type=jnp.float32)

    @pl.when(k == pl.num_programs(1) - 1)
    def _finalize():
        y = acc_ref[...]                                   # (C_out, M_pad) f32
        col = jax.lax.broadcasted_iota(jnp.int32, y.shape, 1)
        valid = col < m_valid
        inv_m = 1.0 / float(m_valid)
        # Padded lanes of y are exactly 0 (zero-padded patches, no bias), so
        # the sums below already only see the valid columns.
        mean = jnp.sum(y, axis=-1, keepdims=True) * inv_m
        yc = jnp.where(valid, y - mean, 0.0)
        var = jnp.sum(yc * yc, axis=-1, keepdims=True) * inv_m
        y = yc * jax.lax.rsqrt(var + eps) * g_ref[...] + b_ref[...]
        y = jnp.maximum(y, slope * y)                      # LeakyReLU(0.2)
        o_ref[...] = jnp.where(valid, y, 0.0).astype(o_ref.dtype)


def _conv_bias_mxu_kernel(a_ref, w_ref, b_ref, o_ref, *, slope, apply_lrelu):
    """Conv(k4) + bias [+ LeakyReLU]; batch folded into the lane axis:
    one MXU matmul (C_out, K) @ (K, N*M_pad)."""
    y = jnp.dot(w_ref[...], a_ref[...], preferred_element_type=jnp.float32)
    y = y + b_ref[...]
    if apply_lrelu:
        y = jnp.maximum(y, slope * y)
    o_ref[...] = y.astype(o_ref.dtype)


def _conv_bias_vpu_kernel(a_ref, w_ref, b_ref, o_ref, *, slope, apply_lrelu):
    """C_out == 1 conv: broadcast-multiply + sublane reduction on the VPU/XLU
    (a single-row MXU matmul would be pure fill/drain latency)."""
    prod = w_ref[...] * a_ref[...].astype(jnp.float32)     # (K, 1) * (K, L)
    y = jnp.sum(prod, axis=0, keepdims=True) + b_ref[...]  # (1, L)
    if apply_lrelu:
        y = jnp.maximum(y, slope * y)
    o_ref[...] = y.astype(o_ref.dtype)


# ------------------------------ layer wrappers -------------------------------

def conv_in_lrelu(x, w, gamma, beta, *, stride, eps=1e-5, slope=0.2,
                  out_dtype=jnp.bfloat16):
    """CNNBlock: Conv2d(k4, stride, pad 0, bias=False) -> InstanceNorm2d(affine)
    -> LeakyReLU(0.2), one fused pallas_call."""
    N = x.shape[0]
    C_out, C_in, kh, kw = w.shape
    a, oh, ow, m_pad = im2col_lanes(x, kh, kw, stride)     # (N, K, M_pad)
    K = C_in * kh * kw
    # tk=128 at toy scale; at production sizes pick tk so the (C_out, tk) and
    # (tk, M_pad) blocks (double-buffered) fit the per-generation VMEM budget
    # (v7x: 64 MiB physical; weights could also use pipeline_mode=Buffered(1)).
    tk = LANE if K % LANE == 0 else K
    w_r = w.reshape(C_out, K).astype(jnp.bfloat16)
    g = gamma.reshape(C_out, 1).astype(jnp.float32)
    b = beta.reshape(C_out, 1).astype(jnp.float32)

    out = pl.pallas_call(
        functools.partial(_conv_in_lrelu_kernel, m_valid=oh * ow, eps=eps,
                          slope=slope),
        out_shape=jax.ShapeDtypeStruct((N, C_out, m_pad), out_dtype),
        grid=(N, K // tk),
        in_specs=[
            pl.BlockSpec((None, tk, m_pad), lambda n, k: (n, k, 0)),
            pl.BlockSpec((C_out, tk), lambda n, k: (0, k)),
            pl.BlockSpec((C_out, 1), lambda n, k: (0, 0)),
            pl.BlockSpec((C_out, 1), lambda n, k: (0, 0)),
        ],
        out_specs=pl.BlockSpec((None, C_out, m_pad), lambda n, k: (n, 0, 0)),
        scratch_shapes=[pltpu.VMEM((C_out, m_pad), jnp.float32)],
        compiler_params=pltpu.CompilerParams(
            dimension_semantics=("parallel", "arbitrary"),
            vmem_limit_bytes=_VMEM_LIMIT),
    )(a, w_r, g, b)
    out = out[:, :, :oh * ow]
    return out.reshape(N, C_out, oh, ow)


def conv_bias(x, w, b, *, stride, padding, apply_lrelu, out_dtype, slope=0.2):
    """Conv2d(k4, reflect pad, bias=True) [+ LeakyReLU(0.2)].  Batch is folded
    into the lane axis -> one lane-dense matmul / reduction for all samples."""
    N = x.shape[0]
    C_out, C_in, kh, kw = w.shape
    a, oh, ow, m_pad = im2col_lanes(reflect_pad(x, padding), kh, kw, stride)
    K = C_in * kh * kw
    m = oh * ow
    a_f = jnp.transpose(a, (1, 0, 2)).reshape(K, N * m_pad)   # (K, N*M_pad)

    if C_out == 1:
        kern = functools.partial(_conv_bias_vpu_kernel, slope=slope,
                                 apply_lrelu=apply_lrelu)
        w_in = w.reshape(1, K).T.astype(jnp.float32)           # (K, 1)
        b_in = b.reshape(1, 1).astype(jnp.float32)
    else:
        kern = functools.partial(_conv_bias_mxu_kernel, slope=slope,
                                 apply_lrelu=apply_lrelu)
        w_in = w.reshape(C_out, K).astype(jnp.bfloat16)
        b_in = b.reshape(C_out, 1).astype(jnp.float32)

    out = pl.pallas_call(
        kern,
        out_shape=jax.ShapeDtypeStruct((C_out, N * m_pad), out_dtype),
        compiler_params=pltpu.CompilerParams(vmem_limit_bytes=_VMEM_LIMIT),
    )(a_f, w_in, b_in)
    out = out.reshape(C_out, N, m_pad).transpose(1, 0, 2)[:, :, :m]
    return out.reshape(N, C_out, oh, ow)


# ------------------------------- Discriminator -------------------------------

def init_discriminator_params(key, in_channels, features):
    """Deterministic synthetic parameters, shapes match the PyTorch __init__."""
    k = [key]

    def nxt():
        k[0], sub = jax.random.split(k[0])
        return sub

    s = 0.05
    params = {
        "initial_w": s * jax.random.normal(nxt(), (features[0], in_channels * 2, 4, 4), jnp.float32),
        "initial_b": s * jax.random.normal(nxt(), (features[0],), jnp.float32),
        "blocks": [],
    }
    cin = features[0]
    for f in features[1:]:
        params["blocks"].append({
            "w": s * jax.random.normal(nxt(), (f, cin, 4, 4), jnp.float32),
            "gamma": jnp.ones((f,), jnp.float32) + 0.01 * jax.random.normal(nxt(), (f,), jnp.float32),
            "beta": 0.01 * jax.random.normal(nxt(), (f,), jnp.float32),
            "stride": 1 if f == features[-1] else 2,
        })
        cin = f
    params["final_w"] = s * jax.random.normal(nxt(), (1, cin, 4, 4), jnp.float32)
    params["final_b"] = s * jax.random.normal(nxt(), (1,), jnp.float32)
    return params


def discriminator_forward(params, x):
    """Returns (output, per-layer activations)."""
    acts = []
    x = x.astype(jnp.bfloat16)                     # bf16 activations between layers
    # initial: Conv(k4, s2, p1, reflect, bias) + LeakyReLU(0.2)
    x = conv_bias(x, params["initial_w"], params["initial_b"], stride=2,
                  padding=1, apply_lrelu=True, out_dtype=jnp.bfloat16)
    acts.append(x)
    # CNNBlocks: Conv(k4, stride, p0, no bias) -> InstanceNorm2d(affine) -> LeakyReLU(0.2)
    for blk in params["blocks"]:
        x = conv_in_lrelu(x, blk["w"], blk["gamma"], blk["beta"],
                          stride=blk["stride"])
        acts.append(x)
    # final: Conv(k4, s1, p1, reflect, bias), C_out == 1 -> VPU path
    out = conv_bias(x, params["final_w"], params["final_b"], stride=1,
                    padding=1, apply_lrelu=False, out_dtype=jnp.float32)
    acts.append(out)
    return out, acts


# --------------------------- pure-JAX f32 reference ---------------------------

def reference_forward(params, x):
    def conv_ref(v, w, b, stride, padding):
        vp = reflect_pad(v, padding)
        y = jax.lax.conv_general_dilated(
            vp, w, window_strides=(stride, stride), padding="VALID",
            dimension_numbers=("NCHW", "OIHW", "NCHW"))
        if b is not None:
            y = y + b.reshape(1, -1, 1, 1)
        return y

    def lrelu(v):
        return jnp.where(v >= 0, v, 0.2 * v)

    def inorm(v, g, b):
        mu = jnp.mean(v, axis=(2, 3), keepdims=True)
        var = jnp.mean(jnp.square(v - mu), axis=(2, 3), keepdims=True)
        return (v - mu) / jnp.sqrt(var + 1e-5) * g.reshape(1, -1, 1, 1) + b.reshape(1, -1, 1, 1)

    acts = []
    y = lrelu(conv_ref(x, params["initial_w"], params["initial_b"], 2, 1))
    acts.append(y)
    for blk in params["blocks"]:
        y = conv_ref(y, blk["w"], None, blk["stride"], 0)
        y = lrelu(inorm(y, blk["gamma"], blk["beta"]))
        acts.append(y)
    out = conv_ref(y, params["final_w"], params["final_b"], 1, 1)
    acts.append(out)
    return out, acts


# ----------------------------------- main -----------------------------------

if __name__ == "__main__":
    # Small config consistent with the module: Discriminator(in_channels=2,
    # features=[8, 16, 32, 32]) -> input has in_channels*2 = 4 channels.
    # Stride rule matches the original (stride 1 only when feature == features[-1]).
    in_channels = 2
    features = [8, 16, 32, 32]
    H = W = 36
    N = 2

    key = jax.random.PRNGKey(0)
    k_param, k_x = jax.random.split(key)
    params = init_discriminator_params(k_param, in_channels, features)
    x = jax.random.normal(k_x, (N, in_channels * 2, H, W), jnp.float32)

    fwd = jax.jit(lambda inp: discriminator_forward(params, inp))
    out, acts = jax.block_until_ready(fwd(x))

    ref_out, ref_acts = reference_forward(params, x)
    assert out.shape == ref_out.shape == (N, 1, 1, 1), (out.shape, ref_out.shape)

    # Per-layer comparison (bf16 kernel chain vs f32 reference chain).
    for li, (a_k, a_r) in enumerate(zip(acts[:-1], ref_acts[:-1])):
        assert a_k.shape == a_r.shape, (li, a_k.shape, a_r.shape)
        err = float(jnp.max(jnp.abs(a_k.astype(jnp.float32) - a_r)))
        assert err < 1.5e-1, f"layer {li} mismatch vs reference: {err}"

    max_err = float(jnp.max(jnp.abs(out - ref_out)))
    assert max_err < 5e-2, f"final mismatch vs reference: {max_err}"

    print("KERNEL_OK")
</pallas_src>

<mosaic_0001>
module attributes {stable_mosaic.version = 11 : i64} {
  func.func @_conv_bias_mxu_kernel(%arg0: memref<64x768xbf16, #tpu.memory_space<vmem>>, %arg1: memref<8x64xbf16, #tpu.memory_space<vmem>>, %arg2: memref<8x1xf32, #tpu.memory_space<vmem>>, %arg3: memref<8x768xbf16, #tpu.memory_space<vmem>>) attributes {dimension_semantics = [], scalar_prefetch = 0 : i64, scratch_operands = 0 : i64, tpu.core_type = #tpu.core_type<tc>} {
    %c0 = arith.constant 0 : index
    %c0_0 = arith.constant 0 : index
    %0 = vector.load %arg1[%c0, %c0_0] : memref<8x64xbf16, #tpu.memory_space<vmem>>, vector<8x64xbf16>
    %c0_1 = arith.constant 0 : index
    %c0_2 = arith.constant 0 : index
    %1 = vector.load %arg0[%c0_1, %c0_2] : memref<64x768xbf16, #tpu.memory_space<vmem>>, vector<64x768xbf16>
    %cst = arith.constant dense<0.000000e+00> : vector<8x768xf32>
    %2 = tpu.matmul %0, %1, %cst {dimension_numbers = #tpu.dot_dimension_numbers<[1], [0], [0], [1], [0, 0, 1, 1], [], []>} : vector<8x64xbf16>, vector<64x768xbf16>, vector<8x768xf32> -> vector<8x768xf32>
    %c0_3 = arith.constant 0 : index
    %c0_4 = arith.constant 0 : index
    %3 = vector.load %arg2[%c0_3, %c0_4] : memref<8x1xf32, #tpu.memory_space<vmem>>, vector<8x1xf32>
    %4 = vector.broadcast %3 : vector<8x1xf32> to vector<8x768xf32>
    %5 = arith.addf %2, %4 : vector<8x768xf32>
    %cst_5 = arith.constant 2.000000e-01 : f32
    %6 = vector.broadcast %cst_5 : f32 to vector<8x768xf32>
    %7 = arith.mulf %6, %5 : vector<8x768xf32>
    %8 = arith.maximumf %5, %7 : vector<8x768xf32>
    %9 = arith.truncf %8 : vector<8x768xf32> to vector<8x768xbf16>
    %c0_6 = arith.constant 0 : index
    %c0_7 = arith.constant 0 : index
    %10 = vector.load %arg3[%c0_6, %c0_7] : memref<8x768xbf16, #tpu.memory_space<vmem>>, vector<8x768xbf16>
    tpu.vector_store %arg3[%c0_6, %c0_7], %9 {strides = array<i32>} : memref<8x768xbf16, #tpu.memory_space<vmem>>, vector<8x768xbf16>,
    return
  }
}

module attributes {stable_mosaic.version = 11 : i64} {
  func.func @_conv_in_lrelu_kernel(%arg0: i32, %arg1: i32, %arg2: memref<1x128x128xbf16, #tpu.memory_space<vmem>>, %arg3: memref<16x128xbf16, #tpu.memory_space<vmem>>, %arg4: memref<16x1xf32, #tpu.memory_space<vmem>>, %arg5: memref<16x1xf32, #tpu.memory_space<vmem>>, %arg6: memref<1x16x128xbf16, #tpu.memory_space<vmem>>, %arg7: memref<16x128xf32, #tpu.memory_space<vmem>>) attributes {dimension_semantics = [#tpu.dimension_semantics<parallel>, #tpu.dimension_semantics<arbitrary>], iteration_bounds = array<i64: 2, 1>, scalar_prefetch = 0 : i64, scratch_operands = 1 : i64, tpu.core_type = #tpu.core_type<tc>, window_params = [{transform_indices = @transform_0, window_bounds = array<i64: 1, 128, 128>}, {transform_indices = @transform_1, window_bounds = array<i64: 16, 128>}, {pipeline_mode = #tpu.pipeline_mode<synchronous>, transform_indices = @transform_2, window_bounds = array<i64: 16, 1>}, {pipeline_mode = #tpu.pipeline_mode<synchronous>, transform_indices = @transform_3, window_bounds = array<i64: 16, 1>}, {transform_indices = @transform_4, window_bounds = array<i64: 1, 16, 128>}]} {
    %c0_i32 = arith.constant 0 : i32
    %0 = arith.cmpi eq, %arg1, %c0_i32 : i32
    %1 = arith.extui %0 : i1 to i32
    %c0_i32_0 = arith.constant 0 : i32
    %2 = arith.cmpi ne, %1, %c0_i32_0 : i32
    scf.if %2 {
      %cst_11 = arith.constant 0.000000e+00 : f32
      %13 = vector.broadcast %cst_11 : f32 to vector<16x128xf32>
      %c0_12 = arith.constant 0 : index
      %c0_13 = arith.constant 0 : index
      %14 = vector.load %arg7[%c0_12, %c0_13] : memref<16x128xf32, #tpu.memory_space<vmem>>, vector<16x128xf32>
      tpu.vector_store %arg7[%c0_12, %c0_13], %13 {strides = array<i32>} : memref<16x128xf32, #tpu.memory_space<vmem>>, vector<16x128xf32>,
    } else {
    }
    %c0 = arith.constant 0 : index
    %c0_1 = arith.constant 0 : index
    %3 = vector.load %arg7[%c0, %c0_1] : memref<16x128xf32, #tpu.memory_space<vmem>>, vector<16x128xf32>
    %c0_2 = arith.constant 0 : index
    %c0_3 = arith.constant 0 : index
    %4 = vector.load %arg3[%c0_2, %c0_3] : memref<16x128xbf16, #tpu.memory_space<vmem>>, vector<16x128xbf16>
    %c0_4 = arith.constant 0 : index
    %c0_5 = arith.constant 0 : index
    %c0_6 = arith.constant 0 : index
    %5 = vector.load %arg2[%c0_4, %c0_5, %c0_6] : memref<1x128x128xbf16, #tpu.memory_space<vmem>>, vector<1x128x128xbf16>
    %6 = vector.shape_cast %5 : vector<1x128x128xbf16> to vector<128x128xbf16>
    %cst = arith.constant dense<0.000000e+00> : vector<16x128xf32>
    %7 = tpu.matmul %4, %6, %cst {dimension_numbers = #tpu.dot_dimension_numbers<[1], [0], [0], [1], [0, 0, 1, 1], [], []>} : vector<16x128xbf16>, vector<128x128xbf16>, vector<16x128xf32> -> vector<16x128xf32>
    %8 = arith.addf %3, %7 : vector<16x128xf32>
    %c0_7 = arith.constant 0 : index
    %c0_8 = arith.constant 0 : index
    %9 = vector.load %arg7[%c0_7, %c0_8] : memref<16x128xf32, #tpu.memory_space<vmem>>, vector<16x128xf32>
    tpu.vector_store %arg7[%c0_7, %c0_8], %8 {strides = array<i32>} : memref<16x128xf32, #tpu.memory_space<vmem>>, vector<16x128xf32>,
    %c0_i32_9 = arith.constant 0 : i32
    %10 = arith.cmpi eq, %arg1, %c0_i32_9 : i32
    %11 = arith.extui %10 : i1 to i32
    %c0_i32_10 = arith.constant 0 : i32
    %12 = arith.cmpi ne, %11, %c0_i32_10 : i32
    scf.if %12 {
      %c0_11 = arith.constant 0 : index
      %c0_12 = arith.constant 0 : index
      %13 = vector.load %arg7[%c0_11, %c0_12] : memref<16x128xf32, #tpu.memory_space<vmem>>, vector<16x128xf32>
      %14 = tpu.iota {dimensions = array<i32: 1>} : vector<16x128xi32>
      %c64_i32 = arith.constant 64 : i32
      %15 = vector.broadcast %c64_i32 : i32 to vector<16x128xi32>
      %16 = arith.cmpi slt, %14, %15 : vector<16x128xi32>
      %cst_13 = arith.constant dense<0.000000e+00> : vector<16xf32>
      %17 = vector.multi_reduction <add>, %13, %cst_13 [1] : vector<16x128xf32> to vector<16xf32>
      %18 = vector.shape_cast %17 : vector<16xf32> to vector<16x1xf32>
      %cst_14 = arith.constant 1.562500e-02 : f32
      %19 = vector.broadcast %cst_14 : f32 to vector<16x1xf32>
      %20 = arith.mulf %18, %19 : vector<16x1xf32>
      %21 = vector.broadcast %20 : vector<16x1xf32> to vector<16x128xf32>
      %22 = arith.subf %13, %21 : vector<16x128xf32>
      %cst_15 = arith.constant 0.000000e+00 : f32
      %23 = vector.broadcast %cst_15 : f32 to vector<16x128xf32>
      %24 = arith.select %16, %22, %23 : vector<16x128xi1>, vector<16x128xf32>
      %25 = arith.mulf %24, %24 : vector<16x128xf32>
      %cst_16 = arith.constant dense<0.000000e+00> : vector<16xf32>
      %26 = vector.multi_reduction <add>, %25, %cst_16 [1] : vector<16x128xf32> to vector<16xf32>
      %27 = vector.shape_cast %26 : vector<16xf32> to vector<16x1xf32>
      %cst_17 = arith.constant 1.562500e-02 : f32
      %28 = vector.broadcast %cst_17 : f32 to vector<16x1xf32>
      %29 = arith.mulf %27, %28 : vector<16x1xf32>
      %cst_18 = arith.constant 9.99999974E-6 : f32
      %30 = vector.broadcast %cst_18 : f32 to vector<16x1xf32>
      %31 = arith.addf %29, %30 : vector<16x1xf32>
      %32 = math.rsqrt %31 : vector<16x1xf32>
      %33 = vector.broadcast %32 : vector<16x1xf32> to vector<16x128xf32>
      %34 = arith.mulf %24, %33 : vector<16x128xf32>
      %c0_19 = arith.constant 0 : index
      %c0_20 = arith.constant 0 : index
      %35 = vector.load %arg4[%c0_19, %c0_20] : memref<16x1xf32, #tpu.memory_space<vmem>>, vector<16x1xf32>
      %36 = vector.broadcast %35 : vector<16x1xf32> to vector<16x128xf32>
      %37 = arith.mulf %34, %36 : vector<16x128xf32>
      %c0_21 = arith.constant 0 : index
      %c0_22 = arith.constant 0 : index
      %38 = vector.load %arg5[%c0_21, %c0_22] : memref<16x1xf32, #tpu.memory_space<vmem>>, vector<16x1xf32>
      %39 = vector.broadcast %38 : vector<16x1xf32> to vector<16x128xf32>
      %40 = arith.addf %37, %39 : vector<16x128xf32>
      %cst_23 = arith.constant 2.000000e-01 : f32
      %41 = vector.broadcast %cst_23 : f32 to vector<16x128xf32>
      %42 = arith.mulf %41, %40 : vector<16x128xf32>
      %43 = arith.maximumf %40, %42 : vector<16x128xf32>
      %cst_24 = arith.constant 0.000000e+00 : f32
      %44 = vector.broadcast %cst_24 : f32 to vector<16x128xf32>
      %45 = arith.select %16, %43, %44 : vector<16x128xi1>, vector<16x128xf32>
      %46 = arith.truncf %45 : vector<16x128xf32> to vector<16x128xbf16>
      %c0_25 = arith.constant 0 : index
      %c0_26 = arith.constant 0 : index
      %c0_27 = arith.constant 0 : index
      %47 = vector.load %arg6[%c0_25, %c0_26, %c0_27] : memref<1x16x128xbf16, #tpu.memory_space<vmem>>, vector<1x16x128xbf16>
      %48 = vector.shape_cast %47 : vector<1x16x128xbf16> to vector<16x128xbf16>
      %49 = vector.shape_cast %46 : vector<16x128xbf16> to vector<1x16x128xbf16>
      tpu.vector_store %arg6[%c0_25, %c0_26, %c0_27], %49 {strides = array<i32>} : memref<1x16x128xbf16, #tpu.memory_space<vmem>>, vector<1x16x128xbf16>,
    } else {
    }
    return
  }
  func.func @transform_0(%arg0: i32, %arg1: i32) -> (i32, i32, i32) {
    %c0_i32 = arith.constant 0 : i32
    %c0_i32_0 = arith.constant 0 : i32
    return %arg0, %arg1, %c0_i32 : i32, i32, i32
  }
  func.func @transform_1(%arg0: i32, %arg1: i32) -> (i32, i32) {
    %c0_i32 = arith.constant 0 : i32
    %c0_i32_0 = arith.constant 0 : i32
    return %c0_i32, %arg1 : i32, i32
  }
  func.func @transform_2(%arg0: i32, %arg1: i32) -> (i32, i32) {
    %c0_i32 = arith.constant 0 : i32
    %c0_i32_0 = arith.constant 0 : i32
    %c0_i32_1 = arith.constant 0 : i32
    return %c0_i32, %c0_i32_0 : i32, i32
  }
  func.func @transform_3(%arg0: i32, %arg1: i32) -> (i32, i32) {
    %c0_i32 = arith.constant 0 : i32
    %c0_i32_0 = arith.constant 0 : i32
    %c0_i32_1 = arith.constant 0 : i32
    return %c0_i32, %c0_i32_0 : i32, i32
  }
  func.func @transform_4(%arg0: i32, %arg1: i32) -> (i32, i32, i32) {
    %c0_i32 = arith.constant 0 : i32
    %c0_i32_0 = arith.constant 0 : i32
    %c0_i32_1 = arith.constant 0 : i32
    return %arg0, %c0_i32, %c0_i32_0 : i32, i32, i32
  }
}

module attributes {stable_mosaic.version = 11 : i64} {
  func.func @_conv_in_lrelu_kernel(%arg0: i32, %arg1: i32, %arg2: memref<1x128x128xbf16, #tpu.memory_space<vmem>>, %arg3: memref<32x128xbf16, #tpu.memory_space<vmem>>, %arg4: memref<32x1xf32, #tpu.memory_space<vmem>>, %arg5: memref<32x1xf32, #tpu.memory_space<vmem>>, %arg6: memref<1x32x128xbf16, #tpu.memory_space<vmem>>, %arg7: memref<32x128xf32, #tpu.memory_space<vmem>>) attributes {dimension_semantics = [#tpu.dimension_semantics<parallel>, #tpu.dimension_semantics<arbitrary>], iteration_bounds = array<i64: 2, 2>, scalar_prefetch = 0 : i64, scratch_operands = 1 : i64, tpu.core_type = #tpu.core_type<tc>, window_params = [{transform_indices = @transform_0, window_bounds = array<i64: 1, 128, 128>}, {transform_indices = @transform_1, window_bounds = array<i64: 32, 128>}, {pipeline_mode = #tpu.pipeline_mode<synchronous>, transform_indices = @transform_2, window_bounds = array<i64: 32, 1>}, {pipeline_mode = #tpu.pipeline_mode<synchronous>, transform_indices = @transform_3, window_bounds = array<i64: 32, 1>}, {transform_indices = @transform_4, window_bounds = array<i64: 1, 32, 128>}]} {
    %c0_i32 = arith.constant 0 : i32
    %0 = arith.cmpi eq, %arg1, %c0_i32 : i32
    %1 = arith.extui %0 : i1 to i32
    %c0_i32_0 = arith.constant 0 : i32
    %2 = arith.cmpi ne, %1, %c0_i32_0 : i32
    scf.if %2 {
      %cst_10 = arith.constant 0.000000e+00 : f32
      %13 = vector.broadcast %cst_10 : f32 to vector<32x128xf32>
      %c0_11 = arith.constant 0 : index
      %c0_12 = arith.constant 0 : index
      %14 = vector.load %arg7[%c0_11, %c0_12] : memref<32x128xf32, #tpu.memory_space<vmem>>, vector<32x128xf32>
      tpu.vector_store %arg7[%c0_11, %c0_12], %13 {strides = array<i32>} : memref<32x128xf32, #tpu.memory_space<vmem>>, vector<32x128xf32>,
    } else {
    }
    %c0 = arith.constant 0 : index
    %c0_1 = arith.constant 0 : index
    %3 = vector.load %arg7[%c0, %c0_1] : memref<32x128xf32, #tpu.memory_space<vmem>>, vector<32x128xf32>
    %c0_2 = arith.constant 0 : index
    %c0_3 = arith.constant 0 : index
    %4 = vector.load %arg3[%c0_2, %c0_3] : memref<32x128xbf16, #tpu.memory_space<vmem>>, vector<32x128xbf16>
    %c0_4 = arith.constant 0 : index
    %c0_5 = arith.constant 0 : index
    %c0_6 = arith.constant 0 : index
    %5 = vector.load %arg2[%c0_4, %c0_5, %c0_6] : memref<1x128x128xbf16, #tpu.memory_space<vmem>>, vector<1x128x128xbf16>
    %6 = vector.shape_cast %5 : vector<1x128x128xbf16> to vector<128x128xbf16>
    %cst = arith.constant dense<0.000000e+00> : vector<32x128xf32>
    %7 = tpu.matmul %4, %6, %cst {dimension_numbers = #tpu.dot_dimension_numbers<[1], [0], [0], [1], [0, 0, 1, 1], [], []>} : vector<32x128xbf16>, vector<128x128xbf16>, vector<32x128xf32> -> vector<32x128xf32>
    %8 = arith.addf %3, %7 : vector<32x128xf32>
    %c0_7 = arith.constant 0 : index
    %c0_8 = arith.constant 0 : index
    %9 = vector.load %arg7[%c0_7, %c0_8] : memref<32x128xf32, #tpu.memory_space<vmem>>, vector<32x128xf32>
    tpu.vector_store %arg7[%c0_7, %c0_8], %8 {strides = array<i32>} : memref<32x128xf32, #tpu.memory_space<vmem>>, vector<32x128xf32>,
    %c1_i32 = arith.constant 1 : i32
    %10 = arith.cmpi eq, %arg1, %c1_i32 : i32
    %11 = arith.extui %10 : i1 to i32
    %c0_i32_9 = arith.constant 0 : i32
    %12 = arith.cmpi ne, %11, %c0_i32_9 : i32
    scf.if %12 {
      %c0_10 = arith.constant 0 : index
      %c0_11 = arith.constant 0 : index
      %13 = vector.load %arg7[%c0_10, %c0_11] : memref<32x128xf32, #tpu.memory_space<vmem>>, vector<32x128xf32>
      %14 = tpu.iota {dimensions = array<i32: 1>} : vector<32x128xi32>
      %c25_i32 = arith.constant 25 : i32
      %15 = vector.broadcast %c25_i32 : i32 to vector<32x128xi32>
      %16 = arith.cmpi slt, %14, %15 : vector<32x128xi32>
      %cst_12 = arith.constant dense<0.000000e+00> : vector<32xf32>
      %17 = vector.multi_reduction <add>, %13, %cst_12 [1] : vector<32x128xf32> to vector<32xf32>
      %18 = vector.shape_cast %17 : vector<32xf32> to vector<32x1xf32>
      %cst_13 = arith.constant 4.000000e-02 : f32
      %19 = vector.broadcast %cst_13 : f32 to vector<32x1xf32>
      %20 = arith.mulf %18, %19 : vector<32x1xf32>
      %21 = vector.broadcast %20 : vector<32x1xf32> to vector<32x128xf32>
      %22 = arith.subf %13, %21 : vector<32x128xf32>
      %cst_14 = arith.constant 0.000000e+00 : f32
      %23 = vector.broadcast %cst_14 : f32 to vector<32x128xf32>
      %24 = arith.select %16, %22, %23 : vector<32x128xi1>, vector<32x128xf32>
      %25 = arith.mulf %24, %24 : vector<32x128xf32>
      %cst_15 = arith.constant dense<0.000000e+00> : vector<32xf32>
      %26 = vector.multi_reduction <add>, %25, %cst_15 [1] : vector<32x128xf32> to vector<32xf32>
      %27 = vector.shape_cast %26 : vector<32xf32> to vector<32x1xf32>
      %cst_16 = arith.constant 4.000000e-02 : f32
      %28 = vector.broadcast %cst_16 : f32 to vector<32x1xf32>
      %29 = arith.mulf %27, %28 : vector<32x1xf32>
      %cst_17 = arith.constant 9.99999974E-6 : f32
      %30 = vector.broadcast %cst_17 : f32 to vector<32x1xf32>
      %31 = arith.addf %29, %30 : vector<32x1xf32>
      %32 = math.rsqrt %31 : vector<32x1xf32>
      %33 = vector.broadcast %32 : vector<32x1xf32> to vector<32x128xf32>
      %34 = arith.mulf %24, %33 : vector<32x128xf32>
      %c0_18 = arith.constant 0 : index
      %c0_19 = arith.constant 0 : index
      %35 = vector.load %arg4[%c0_18, %c0_19] : memref<32x1xf32, #tpu.memory_space<vmem>>, vector<32x1xf32>
      %36 = vector.broadcast %35 : vector<32x1xf32> to vector<32x128xf32>
      %37 = arith.mulf %34, %36 : vector<32x128xf32>
      %c0_20 = arith.constant 0 : index
      %c0_21 = arith.constant 0 : index
      %38 = vector.load %arg5[%c0_20, %c0_21] : memref<32x1xf32, #tpu.memory_space<vmem>>, vector<32x1xf32>
      %39 = vector.broadcast %38 : vector<32x1xf32> to vector<32x128xf32>
      %40 = arith.addf %37, %39 : vector<32x128xf32>
      %cst_22 = arith.constant 2.000000e-01 : f32
      %41 = vector.broadcast %cst_22 : f32 to vector<32x128xf32>
      %42 = arith.mulf %41, %40 : vector<32x128xf32>
      %43 = arith.maximumf %40, %42 : vector<32x128xf32>
      %cst_23 = arith.constant 0.000000e+00 : f32
      %44 = vector.broadcast %cst_23 : f32 to vector<32x128xf32>
      %45 = arith.select %16, %43, %44 : vector<32x128xi1>, vector<32x128xf32>
      %46 = arith.truncf %45 : vector<32x128xf32> to vector<32x128xbf16>
      %c0_24 = arith.constant 0 : index
      %c0_25 = arith.constant 0 : index
      %c0_26 = arith.constant 0 : index
      %47 = vector.load %arg6[%c0_24, %c0_25, %c0_26] : memref<1x32x128xbf16, #tpu.memory_space<vmem>>, vector<1x32x128xbf16>
      %48 = vector.shape_cast %47 : vector<1x32x128xbf16> to vector<32x128xbf16>
      %49 = vector.shape_cast %46 : vector<32x128xbf16> to vector<1x32x128xbf16>
      tpu.vector_store %arg6[%c0_24, %c0_25, %c0_26], %49 {strides = array<i32>} : memref<1x32x128xbf16, #tpu.memory_space<vmem>>, vector<1x32x128xbf16>,
    } else {
    }
    return
  }
  func.func @transform_0(%arg0: i32, %arg1: i32) -> (i32, i32, i32) {
    %c0_i32 = arith.constant 0 : i32
    %c0_i32_0 = arith.constant 0 : i32
    return %arg0, %arg1, %c0_i32 : i32, i32, i32
  }
  func.func @transform_1(%arg0: i32, %arg1: i32) -> (i32, i32) {
    %c0_i32 = arith.constant 0 : i32
    %c0_i32_0 = arith.constant 0 : i32
    return %c0_i32, %arg1 : i32, i32
  }
  func.func @transform_2(%arg0: i32, %arg1: i32) -> (i32, i32) {
    %c0_i32 = arith.constant 0 : i32
    %c0_i32_0 = arith.constant 0 : i32
    %c0_i32_1 = arith.constant 0 : i32
    return %c0_i32, %c0_i32_0 : i32, i32
  }
  func.func @transform_3(%arg0: i32, %arg1: i32) -> (i32, i32) {
    %c0_i32 = arith.constant 0 : i32
    %c0_i32_0 = arith.constant 0 : i32
    %c0_i32_1 = arith.constant 0 : i32
    return %c0_i32, %c0_i32_0 : i32, i32
  }
  func.func @transform_4(%arg0: i32, %arg1: i32) -> (i32, i32, i32) {
    %c0_i32 = arith.constant 0 : i32
    %c0_i32_0 = arith.constant 0 : i32
    %c0_i32_1 = arith.constant 0 : i32
    return %arg0, %c0_i32, %c0_i32_0 : i32, i32, i32
  }
}

module attributes {stable_mosaic.version = 11 : i64} {
  func.func @_conv_in_lrelu_kernel(%arg0: i32, %arg1: i32, %arg2: memref<1x128x128xbf16, #tpu.memory_space<vmem>>, %arg3: memref<32x128xbf16, #tpu.memory_space<vmem>>, %arg4: memref<32x1xf32, #tpu.memory_space<vmem>>, %arg5: memref<32x1xf32, #tpu.memory_space<vmem>>, %arg6: memref<1x32x128xbf16, #tpu.memory_space<vmem>>, %arg7: memref<32x128xf32, #tpu.memory_space<vmem>>) attributes {dimension_semantics = [#tpu.dimension_semantics<parallel>, #tpu.dimension_semantics<arbitrary>], iteration_bounds = array<i64: 2, 4>, scalar_prefetch = 0 : i64, scratch_operands = 1 : i64, tpu.core_type = #tpu.core_type<tc>, window_params = [{transform_indices = @transform_0, window_bounds = array<i64: 1, 128, 128>}, {transform_indices = @transform_1, window_bounds = array<i64: 32, 128>}, {pipeline_mode = #tpu.pipeline_mode<synchronous>, transform_indices = @transform_2, window_bounds = array<i64: 32, 1>}, {pipeline_mode = #tpu.pipeline_mode<synchronous>, transform_indices = @transform_3, window_bounds = array<i64: 32, 1>}, {transform_indices = @transform_4, window_bounds = array<i64: 1, 32, 128>}]} {
    %c0_i32 = arith.constant 0 : i32
    %0 = arith.cmpi eq, %arg1, %c0_i32 : i32
    %1 = arith.extui %0 : i1 to i32
    %c0_i32_0 = arith.constant 0 : i32
    %2 = arith.cmpi ne, %1, %c0_i32_0 : i32
    scf.if %2 {
      %cst_10 = arith.constant 0.000000e+00 : f32
      %13 = vector.broadcast %cst_10 : f32 to vector<32x128xf32>
      %c0_11 = arith.constant 0 : index
      %c0_12 = arith.constant 0 : index
      %14 = vector.load %arg7[%c0_11, %c0_12] : memref<32x128xf32, #tpu.memory_space<vmem>>, vector<32x128xf32>
      tpu.vector_store %arg7[%c0_11, %c0_12], %13 {strides = array<i32>} : memref<32x128xf32, #tpu.memory_space<vmem>>, vector<32x128xf32>,
    } else {
    }
    %c0 = arith.constant 0 : index
    %c0_1 = arith.constant 0 : index
    %3 = vector.load %arg7[%c0, %c0_1] : memref<32x128xf32, #tpu.memory_space<vmem>>, vector<32x128xf32>
    %c0_2 = arith.constant 0 : index
    %c0_3 = arith.constant 0 : index
    %4 = vector.load %arg3[%c0_2, %c0_3] : memref<32x128xbf16, #tpu.memory_space<vmem>>, vector<32x128xbf16>
    %c0_4 = arith.constant 0 : index
    %c0_5 = arith.constant 0 : index
    %c0_6 = arith.constant 0 : index
    %5 = vector.load %arg2[%c0_4, %c0_5, %c0_6] : memref<1x128x128xbf16, #tpu.memory_space<vmem>>, vector<1x128x128xbf16>
    %6 = vector.shape_cast %5 : vector<1x128x128xbf16> to vector<128x128xbf16>
    %cst = arith.constant dense<0.000000e+00> : vector<32x128xf32>
    %7 = tpu.matmul %4, %6, %cst {dimension_numbers = #tpu.dot_dimension_numbers<[1], [0], [0], [1], [0, 0, 1, 1], [], []>} : vector<32x128xbf16>, vector<128x128xbf16>, vector<32x128xf32> -> vector<32x128xf32>
    %8 = arith.addf %3, %7 : vector<32x128xf32>
    %c0_7 = arith.constant 0 : index
    %c0_8 = arith.constant 0 : index
    %9 = vector.load %arg7[%c0_7, %c0_8] : memref<32x128xf32, #tpu.memory_space<vmem>>, vector<32x128xf32>
    tpu.vector_store %arg7[%c0_7, %c0_8], %8 {strides = array<i32>} : memref<32x128xf32, #tpu.memory_space<vmem>>, vector<32x128xf32>,
    %c3_i32 = arith.constant 3 : i32
    %10 = arith.cmpi eq, %arg1, %c3_i32 : i32
    %11 = arith.extui %10 : i1 to i32
    %c0_i32_9 = arith.constant 0 : i32
    %12 = arith.cmpi ne, %11, %c0_i32_9 : i32
    scf.if %12 {
      %c0_10 = arith.constant 0 : index
      %c0_11 = arith.constant 0 : index
      %13 = vector.load %arg7[%c0_10, %c0_11] : memref<32x128xf32, #tpu.memory_space<vmem>>, vector<32x128xf32>
      %14 = tpu.iota {dimensions = array<i32: 1>} : vector<32x128xi32>
      %c4_i32 = arith.constant 4 : i32
      %15 = vector.broadcast %c4_i32 : i32 to vector<32x128xi32>
      %16 = arith.cmpi slt, %14, %15 : vector<32x128xi32>
      %cst_12 = arith.constant dense<0.000000e+00> : vector<32xf32>
      %17 = vector.multi_reduction <add>, %13, %cst_12 [1] : vector<32x128xf32> to vector<32xf32>
      %18 = vector.shape_cast %17 : vector<32xf32> to vector<32x1xf32>
      %cst_13 = arith.constant 2.500000e-01 : f32
      %19 = vector.broadcast %cst_13 : f32 to vector<32x1xf32>
      %20 = arith.mulf %18, %19 : vector<32x1xf32>
      %21 = vector.broadcast %20 : vector<32x1xf32> to vector<32x128xf32>
      %22 = arith.subf %13, %21 : vector<32x128xf32>
      %cst_14 = arith.constant 0.000000e+00 : f32
      %23 = vector.broadcast %cst_14 : f32 to vector<32x128xf32>
      %24 = arith.select %16, %22, %23 : vector<32x128xi1>, vector<32x128xf32>
      %25 = arith.mulf %24, %24 : vector<32x128xf32>
      %cst_15 = arith.constant dense<0.000000e+00> : vector<32xf32>
      %26 = vector.multi_reduction <add>, %25, %cst_15 [1] : vector<32x128xf32> to vector<32xf32>
      %27 = vector.shape_cast %26 : vector<32xf32> to vector<32x1xf32>
      %cst_16 = arith.constant 2.500000e-01 : f32
      %28 = vector.broadcast %cst_16 : f32 to vector<32x1xf32>
      %29 = arith.mulf %27, %28 : vector<32x1xf32>
      %cst_17 = arith.constant 9.99999974E-6 : f32
      %30 = vector.broadcast %cst_17 : f32 to vector<32x1xf32>
      %31 = arith.addf %29, %30 : vector<32x1xf32>
      %32 = math.rsqrt %31 : vector<32x1xf32>
      %33 = vector.broadcast %32 : vector<32x1xf32> to vector<32x128xf32>
      %34 = arith.mulf %24, %33 : vector<32x128xf32>
      %c0_18 = arith.constant 0 : index
      %c0_19 = arith.constant 0 : index
      %35 = vector.load %arg4[%c0_18, %c0_19] : memref<32x1xf32, #tpu.memory_space<vmem>>, vector<32x1xf32>
      %36 = vector.broadcast %35 : vector<32x1xf32> to vector<32x128xf32>
      %37 = arith.mulf %34, %36 : vector<32x128xf32>
      %c0_20 = arith.constant 0 : index
      %c0_21 = arith.constant 0 : index
      %38 = vector.load %arg5[%c0_20, %c0_21] : memref<32x1xf32, #tpu.memory_space<vmem>>, vector<32x1xf32>
      %39 = vector.broadcast %38 : vector<32x1xf32> to vector<32x128xf32>
      %40 = arith.addf %37, %39 : vector<32x128xf32>
      %cst_22 = arith.constant 2.000000e-01 : f32
      %41 = vector.broadcast %cst_22 : f32 to vector<32x128xf32>
      %42 = arith.mulf %41, %40 : vector<32x128xf32>
      %43 = arith.maximumf %40, %42 : vector<32x128xf32>
      %cst_23 = arith.constant 0.000000e+00 : f32
      %44 = vector.broadcast %cst_23 : f32 to vector<32x128xf32>
      %45 = arith.select %16, %43, %44 : vector<32x128xi1>, vector<32x128xf32>
      %46 = arith.truncf %45 : vector<32x128xf32> to vector<32x128xbf16>
      %c0_24 = arith.constant 0 : index
      %c0_25 = arith.constant 0 : index
      %c0_26 = arith.constant 0 : index
      %47 = vector.load %arg6[%c0_24, %c0_25, %c0_26] : memref<1x32x128xbf16, #tpu.memory_space<vmem>>, vector<1x32x128xbf16>
      %48 = vector.shape_cast %47 : vector<1x32x128xbf16> to vector<32x128xbf16>
      %49 = vector.shape_cast %46 : vector<32x128xbf16> to vector<1x32x128xbf16>
      tpu.vector_store %arg6[%c0_24, %c0_25, %c0_26], %49 {strides = array<i32>} : memref<1x32x128xbf16, #tpu.memory_space<vmem>>, vector<1x32x128xbf16>,
    } else {
    }
    return
  }
  func.func @transform_0(%arg0: i32, %arg1: i32) -> (i32, i32, i32) {
    %c0_i32 = arith.constant 0 : i32
    %c0_i32_0 = arith.constant 0 : i32
    return %arg0, %arg1, %c0_i32 : i32, i32, i32
  }
  func.func @transform_1(%arg0: i32, %arg1: i32) -> (i32, i32) {
    %c0_i32 = arith.constant 0 : i32
    %c0_i32_0 = arith.constant 0 : i32
    return %c0_i32, %arg1 : i32, i32
  }
  func.func @transform_2(%arg0: i32, %arg1: i32) -> (i32, i32) {
    %c0_i32 = arith.constant 0 : i32
    %c0_i32_0 = arith.constant 0 : i32
    %c0_i32_1 = arith.constant 0 : i32
    return %c0_i32, %c0_i32_0 : i32, i32
  }
  func.func @transform_3(%arg0: i32, %arg1: i32) -> (i32, i32) {
    %c0_i32 = arith.constant 0 : i32
    %c0_i32_0 = arith.constant 0 : i32
    %c0_i32_1 = arith.constant 0 : i32
    return %c0_i32, %c0_i32_0 : i32, i32
  }
  func.func @transform_4(%arg0: i32, %arg1: i32) -> (i32, i32, i32) {
    %c0_i32 = arith.constant 0 : i32
    %c0_i32_0 = arith.constant 0 : i32
    %c0_i32_1 = arith.constant 0 : i32
    return %arg0, %c0_i32, %c0_i32_0 : i32, i32, i32
  }
}

module attributes {stable_mosaic.version = 11 : i64} {
  func.func @_conv_bias_vpu_kernel(%arg0: memref<512x256xbf16, #tpu.memory_space<vmem>>, %arg1: memref<512x1xf32, #tpu.memory_space<vmem>>, %arg2: memref<1x1xf32, #tpu.memory_space<vmem>>, %arg3: memref<1x256xf32, #tpu.memory_space<vmem>>) attributes {dimension_semantics = [], scalar_prefetch = 0 : i64, scratch_operands = 0 : i64, tpu.core_type = #tpu.core_type<tc>} {
    %c0 = arith.constant 0 : index
    %c0_0 = arith.constant 0 : index
    %0 = vector.load %arg1[%c0, %c0_0] : memref<512x1xf32, #tpu.memory_space<vmem>>, vector<512x1xf32>
    %c0_1 = arith.constant 0 : index
    %c0_2 = arith.constant 0 : index
    %1 = vector.load %arg0[%c0_1, %c0_2] : memref<512x256xbf16, #tpu.memory_space<vmem>>, vector<512x256xbf16>
    %2 = arith.extf %1 : vector<512x256xbf16> to vector<512x256xf32>
    %3 = vector.broadcast %0 : vector<512x1xf32> to vector<512x256xf32>
    %4 = arith.mulf %3, %2 : vector<512x256xf32>
    %cst = arith.constant dense<0.000000e+00> : vector<256xf32>
    %5 = vector.multi_reduction <add>, %4, %cst [0] : vector<512x256xf32> to vector<256xf32>
    %6 = vector.shape_cast %5 : vector<256xf32> to vector<1x256xf32>
    %c0_3 = arith.constant 0 : index
    %c0_4 = arith.constant 0 : index
    %7 = vector.load %arg2[%c0_3, %c0_4] : memref<1x1xf32, #tpu.memory_space<vmem>>, vector<1x1xf32>
    %8 = vector.broadcast %7 : vector<1x1xf32> to vector<1x256xf32>
    %9 = arith.addf %6, %8 : vector<1x256xf32>
    %c0_5 = arith.constant 0 : index
    %c0_6 = arith.constant 0 : index
    %10 = vector.load %arg3[%c0_5, %c0_6] : memref<1x256xf32, #tpu.memory_space<vmem>>, vector<1x256xf32>
    tpu.vector_store %arg3[%c0_5, %c0_6], %9 {strides = array<i32>} : memref<1x256xf32, #tpu.memory_space<vmem>>, vector<1x256xf32>,
    return
  }
}

</mosaic_0001>

<llo_original>
// kernel: _lambda_.5
$region0: #{_lambda_.5}
  #allocation0 [shape = 'u32[]', space=smem, size = 0x4, offset = 0x4, fixed_abs, tag = 'smem constant byte address 0x4 - core index']
  #allocation1 [shape = 'u32[144,128]{1,0:T(1,128)}', space=vmem, size = 0x12000, scoped, tag = 'internal scratch']
  %s0 = inlined_call_operand.vmem [shape: bf16[64,768], index: 0, kind: input, shape index: {}]
  %s1 = inlined_call_operand.vmem [shape: bf16[8,64], index: 1, kind: input, shape index: {}]
  %s2 = inlined_call_operand.vmem [shape: f32[8,1], index: 2, kind: input, shape index: {}]
  %s3 = inlined_call_operand.vmem [shape: bf16[8,768], index: 3, kind: output, shape index: {}]
  %s4 = sld [smem:[#allocation0]]
  $region22: #{_lambda_.5} parent=0
    _
  %s6 = ssub.s32 1, %s4
  %s7 = scalar_select 0, %s6, %s4
  // Predicated region
  $region2: #{_lambda_.5} parent=0 // pred_check
    _
  $region3: #{_lambda_.5} parent=0 // pred_check_branch
    %9 = sbr.rel (0) target = $region5
  $region4: #{_lambda_.5} parent=0 // pred_region
    _
  $region5: #{_lambda_.5} parent=0 // pred_fallthru
    _
  // Predicated region
  $region6: #{_lambda_.5} parent=0 // pred_check
    _
  $region7: #{_lambda_.5} parent=0 // pred_check_branch
    %11 = sbr.rel (0) target = $region9
  $region8: #{_lambda_.5} parent=0 // pred_region
    _
  $region9: #{_lambda_.5} parent=0 // pred_fallthru
    _
  // Predicated region
  $region10: #{_lambda_.5} parent=0 // pred_check
    _
  $region11: #{_lambda_.5} parent=0 // pred_check_branch
    %13 = sbr.rel (0) target = $region13
  $region12: #{_lambda_.5} parent=0 // pred_region
    _
  $region13: #{_lambda_.5} parent=0 // pred_fallthru
    _
  %v15 = vld [vmem:[%s1] sm:$0xf]
  %v16 = vld [vmem:[%s0] sm:$0xff]
  %v17 = vld [vmem:[%s0 + $0x8] sm:$0xff]
  %v18 = vld [vmem:[%s0 + $0x10] sm:$0xff]
  %v19 = vld [vmem:[%s0 + $0x18] sm:$0xff]
  %v20 = vld [vmem:[%s0 + $0x20] sm:$0xff]
  %v21 = vld [vmem:[%s0 + $0x28] sm:$0xff]
  %v22 = vld [vmem:[%s0 + $0x30] sm:$0xff]
  %v23 = vld [vmem:[%s0 + $0x38] sm:$0xff]
  %v24 = vld [vmem:[%s0 + $0x40] sm:$0xff]
  %v25 = vld [vmem:[%s0 + $0x48] sm:$0xff]
  %v26 = vld [vmem:[%s0 + $0x50] sm:$0xff]
  %v27 = vld [vmem:[%s0 + $0x58] sm:$0xff]
  %v28 = vld [vmem:[%s0 + $0x60] sm:$0xff]
  %v29 = vld [vmem:[%s0 + $0x68] sm:$0xff]
  %v30 = vld [vmem:[%s0 + $0x70] sm:$0xff]
  %v31 = vld [vmem:[%s0 + $0x78] sm:$0xff]
  %v32 = vld [vmem:[%s0 + $0x80] sm:$0xff]
  %v33 = vld [vmem:[%s0 + $0x88] sm:$0xff]
  %v34 = vld [vmem:[%s0 + $0x90] sm:$0xff]
  %v35 = vld [vmem:[%s0 + $0x98] sm:$0xff]
  %v36 = vld [vmem:[%s0 + $0xa0] sm:$0xff]
  %v37 = vld [vmem:[%s0 + $0xa8] sm:$0xff]
  %v38 = vld [vmem:[%s0 + $0xb0] sm:$0xff]
  %v39 = vld [vmem:[%s0 + $0xb8] sm:$0xff]
  %v40 = vld [vmem:[%s2] sm:$0xff]
  %42 = vset.pattern.permute.xlu0 0
  %43 = vperm.xlu0 %42, %v40
  %v44 = vpop.permute.xlu0 %43
  %v70 = vunpack.c.l.b16 %v16
  %v71 = vunpack.c.h.b16 %v16
  %v72 = vunpack.c.l.b16 %v17
  %v73 = vunpack.c.h.b16 %v17
  %v74 = vunpack.c.l.b16 %v18
  %v75 = vunpack.c.h.b16 %v18
  %v76 = vunpack.c.l.b16 %v19
  %v77 = vunpack.c.h.b16 %v19
  %v78 = vunpack.c.l.b16 %v20
  %v79 = vunpack.c.h.b16 %v20
  %v80 = vunpack.c.l.b16 %v21
  %v81 = vunpack.c.h.b16 %v21
  %v82 = vunpack.c.l.b16 %v22
  %v83 = vunpack.c.h.b16 %v22
  %v84 = vunpack.c.l.b16 %v23
  %v85 = vunpack.c.h.b16 %v23
  %v86 = vunpack.c.l.b16 %v24
  %v87 = vunpack.c.h.b16 %v24
  %v88 = vunpack.c.l.b16 %v25
  %v89 = vunpack.c.h.b16 %v25
  %v90 = vunpack.c.l.b16 %v26
  %v91 = vunpack.c.h.b16 %v26
  %v92 = vunpack.c.l.b16 %v27
  %v93 = vunpack.c.h.b16 %v27
  %v94 = vunpack.c.l.b16 %v28
  %v95 = vunpack.c.h.b16 %v28
  %v96 = vunpack.c.l.b16 %v29
  %v97 = vunpack.c.h.b16 %v29
  %v98 = vunpack.c.l.b16 %v30
  %v99 = vunpack.c.h.b16 %v30
  %v100 = vunpack.c.l.b16 %v31
  %v101 = vunpack.c.h.b16 %v31
  %v102 = vunpack.c.l.b16 %v32
  %v103 = vunpack.c.h.b16 %v32
  %v104 = vunpack.c.l.b16 %v33
  %v105 = vunpack.c.h.b16 %v33
  %v106 = vunpack.c.l.b16 %v34
  %v107 = vunpack.c.h.b16 %v34
  %v108 = vunpack.c.l.b16 %v35
  %v109 = vunpack.c.h.b16 %v35
  %v110 = vunpack.c.l.b16 %v36
  %v111 = vunpack.c.h.b16 %v36
  %v112 = vunpack.c.l.b16 %v37
  %v113 = vunpack.c.h.b16 %v37
  %v114 = vunpack.c.l.b16 %v38
  %v115 = vunpack.c.h.b16 %v38
  %v116 = vunpack.c.l.b16 %v39
  %v117 = vunpack.c.h.b16 %v39
  %v118 = vpack.c.b16 %v76, %v70
  %v119 = vpack.c.b16 %v77, %v71
  %v120 = vpack.c.b16 %v78, %v72
  %v121 = vpack.c.b16 %v79, %v73
  %v122 = vpack.c.b16 %v80, %v74
  %v123 = vpack.c.b16 %v81, %v75
  %v124 = vpack.c.b16 %v88, %v82
  %v125 = vpack.c.b16 %v89, %v83
  %v126 = vpack.c.b16 %v90, %v84
  %v127 = vpack.c.b16 %v91, %v85
  %v128 = vpack.c.b16 %v92, %v86
  %v129 = vpack.c.b16 %v93, %v87
  %v130 = vpack.c.b16 %v100, %v94
  %v131 = vpack.c.b16 %v101, %v95
  %v132 = vpack.c.b16 %v102, %v96
  %v133 = vpack.c.b16 %v103, %v97
  %v134 = vpack.c.b16 %v104, %v98
  %v135 = vpack.c.b16 %v105, %v99
  %v136 = vpack.c.b16 %v112, %v106
  %v137 = vpack.c.b16 %v113, %v107
  %v138 = vpack.c.b16 %v114, %v108
  %v139 = vpack.c.b16 %v115, %v109
  %v140 = vpack.c.b16 %v116, %v110
  %v141 = vpack.c.b16 %v117, %v111
  %vm166 = vcmask 523264
  %v168 = vsel %vm166, %v15, 0
  %170 = vmatprep.subr.bf16.mxu0 0
  %171 = vmatpush1.bf16.msra.mxu0 0
  %172 = vmatprep.subr.bf16.mxu0 0
  %173 = vmatpush1.bf16.msra.mxu0 0
  %174 = vmatprep.subr.bf16.mxu0 0
  %175 = vmatpush1.bf16.msra.mxu0 0
  %176 = vmatprep.subr.bf16.mxu0 0
  %177 = vmatpush1.bf16.msra.mxu0 0
  %178 = vmatprep.subr.bf16.mxu0 %v137
  %179 = vmatpush1.bf16.msra.mxu0 %v136
  %180 = vmatprep.subr.bf16.mxu0 %v131
  %181 = vmatpush1.bf16.msra.mxu0 %v130
  %182 = vmatprep.subr.bf16.mxu0 %v125
  %183 = vmatpush1.bf16.msra.mxu0 %v124
  %184 = vmatprep.subr.bf16.mxu0 %v119
  %185 = vmatpush1.bf16.msra.mxu0 %v118
  %186 = vmatprep.subr.bf16.mxu0 0
  %187 = vmatpush2.bf16.msra.mxu0 0
  %188 = vmatprep.subr.bf16.mxu0 0
  %189 = vmatpush2.bf16.msra.mxu0 0
  %190 = vmatprep.subr.bf16.mxu0 0
  %191 = vmatpush2.bf16.msra.mxu0 0
  %192 = vmatprep.subr.bf16.mxu0 0
  %193 = vmatpush2.bf16.msra.mxu0 0
  %194 = vmatprep.subr.bf16.mxu0 0
  %195 = vmatpush2.bf16.msra.mxu0 0
  %196 = vmatprep.subr.bf16.mxu0 0
  %197 = vmatpush2.bf16.msra.mxu0 0
  %198 = vmatprep.subr.bf16.mxu0 0
  %199 = vmatpush2.bf16.msra.mxu0 0
  %200 = vmatprep.subr.bf16.mxu0 0
  %201 = vmatpush2.bf16.msra.mxu0 0
  %202 = vmatprep.mubr.bf16.mxu0 0
  %203 = vmatmul.mubr.bf16.gmra.mxu0 %v168
  %v204 = vpop.f32.mrf.mxu0
  %v205 = vadd.f32 %v44, %v204
  %v206 = vpop.f32.mrf.mxu0
  %v207 = vadd.f32 %v44, %v206
  %v208 = vpop.f32.mrf.mxu0
  %v209 = vpop.f32.mrf.mxu0
  %210 = vdwg.mxu0
  %211 = vmatprep.subr.bf16.mxu0 0
  %212 = vmatpush1.bf16.msra.mxu0 0
  %213 = vmatprep.subr.bf16.mxu0 0
  %214 = vmatpush1.bf16.msra.mxu0 0
  %215 = vmatprep.subr.bf16.mxu0 0
  %216 = vmatpush1.bf16.msra.mxu0 0
  %217 = vmatprep.subr.bf16.mxu0 0
  %218 = vmatpush1.bf16.msra.mxu0 0
  %219 = vmatprep.subr.bf16.mxu0 %v139
  %220 = vmatpush1.bf16.msra.mxu0 %v138
  %221 = vmatprep.subr.bf16.mxu0 %v133
  %222 = vmatpush1.bf16.msra.mxu0 %v132
  %223 = vmatprep.subr.bf16.mxu0 %v127
  %224 = vmatpush1.bf16.msra.mxu0 %v126
  %225 = vmatprep.subr.bf16.mxu0 %v121
  %226 = vmatpush1.bf16.msra.mxu0 %v120
  %227 = vmatprep.subr.bf16.mxu0 0
  %228 = vmatpush2.bf16.msra.mxu0 0
  %229 = vmatprep.subr.bf16.mxu0 0
  %230 = vmatpush2.bf16.msra.mxu0 0
  %231 = vmatprep.subr.bf16.mxu0 0
  %232 = vmatpush2.bf16.msra.mxu0 0
  %233 = vmatprep.subr.bf16.mxu0 0
  %234 = vmatpush2.bf16.msra.mxu0 0
  %235 = vmatprep.subr.bf16.mxu0 0
  %236 = vmatpush2.bf16.msra.mxu0 0
  %237 = vmatprep.subr.bf16.mxu0 0
  %238 = vmatpush2.bf16.msra.mxu0 0
  %239 = vmatprep.subr.bf16.mxu0 0
  %240 = vmatpush2.bf16.msra.mxu0 0
  %241 = vmatprep.subr.bf16.mxu0 0
  %242 = vmatpush2.bf16.msra.mxu0 0
  %243 = vmatprep.mubr.bf16.mxu0 0
  %244 = vmatmul.mubr.bf16.gmra.mxu0 %v168
  %v245 = vpop.f32.mrf.mxu0
  %v246 = vadd.f32 %v44, %v245
  %v247 = vpop.f32.mrf.mxu0
  %v248 = vadd.f32 %v44, %v247
  %v249 = vpop.f32.mrf.mxu0
  %v250 = vpop.f32.mrf.mxu0
  %251 = vdwg.mxu0
  %252 = vmatprep.subr.bf16.mxu0 0
  %253 = vmatpush1.bf16.msra.mxu0 0
  %254 = vmatprep.subr.bf16.mxu0 0
  %255 = vmatpush1.bf16.msra.mxu0 0
  %256 = vmatprep.subr.bf16.mxu0 0
  %257 = vmatpush1.bf16.msra.mxu0 0
  %258 = vmatprep.subr.bf16.mxu0 0
  %259 = vmatpush1.bf16.msra.mxu0 0
  %260 = vmatprep.subr.bf16.mxu0 %v141
  %261 = vmatpush1.bf16.msra.mxu0 %v140
  %262 = vmatprep.subr.bf16.mxu0 %v135
  %263 = vmatpush1.bf16.msra.mxu0 %v134
  %264 = vmatprep.subr.bf16.mxu0 %v129
  %265 = vmatpush1.bf16.msra.mxu0 %v128
  %266 = vmatprep.subr.bf16.mxu0 %v123
  %267 = vmatpush1.bf16.msra.mxu0 %v122
  %268 = vmatprep.subr.bf16.mxu0 0
  %269 = vmatpush2.bf16.msra.mxu0 0
  %270 = vmatprep.subr.bf16.mxu0 0
  %271 = vmatpush2.bf16.msra.mxu0 0
  %272 = vmatprep.subr.bf16.mxu0 0
  %273 = vmatpush2.bf16.msra.mxu0 0
  %274 = vmatprep.subr.bf16.mxu0 0
  %275 = vmatpush2.bf16.msra.mxu0 0
  %276 = vmatprep.subr.bf16.mxu0 0
  %277 = vmatpush2.bf16.msra.mxu0 0
  %278 = vmatprep.subr.bf16.mxu0 0
  %279 = vmatpush2.bf16.msra.mxu0 0
  %280 = vmatprep.subr.bf16.mxu0 0
  %281 = vmatpush2.bf16.msra.mxu0 0
  %282 = vmatprep.subr.bf16.mxu0 0
  %283 = vmatpush2.bf16.msra.mxu0 0
  %284 = vmatprep.mubr.bf16.mxu0 0
  %285 = vmatmul.mubr.bf16.gmra.mxu0 %v168
  %v286 = vpop.f32.mrf.mxu0
  %v287 = vadd.f32 %v44, %v286
  %v288 = vpop.f32.mrf.mxu0
  %v289 = vadd.f32 %v44, %v288
  %v290 = vpop.f32.mrf.mxu0
  %v291 = vpop.f32.mrf.mxu0
  %292 = vdwg.mxu0
  %v293 = vmul.f32 %v205, 0.2
  %v294 = vmul.f32 %v207, 0.2
  %v295 = vmul.f32 %v246, 0.2
  %v296 = vmul.f32 %v248, 0.2
  %v297 = vmul.f32 %v287, 0.2
  %v298 = vmul.f32 %v289, 0.2
  %v299 = vmax.f32 %v205, %v293
  %v300 = vmax.f32 %v207, %v294
  %v301 = vmax.f32 %v246, %v295
  %v302 = vmax.f32 %v248, %v296
  %v303 = vmax.f32 %v287, %v297
  %v304 = vmax.f32 %v289, %v298
  %v305 = vpack.c.bf16 %v299, %v299
  %v306 = vpack.c.bf16 %v300, %v300
  %v307 = vpack.c.bf16 %v301, %v301
  %v308 = vpack.c.bf16 %v302, %v302
  %v309 = vpack.c.bf16 %v303, %v303
  %v310 = vpack.c.bf16 %v304, %v304
  %v317 = vunpack.c.l.b16 %v305
  %v318 = vunpack.c.l.b16 %v306
  %v319 = vunpack.c.l.b16 %v307
  %v320 = vunpack.c.l.b16 %v308
  %v321 = vunpack.c.l.b16 %v309
  %v322 = vunpack.c.l.b16 %v310
  %v323 = vpack.c.b16 %v318, %v317
  %v324 = vpack.c.b16 %v320, %v319
  %v325 = vpack.c.b16 %v322, %v321
  %329 = vst [vmem:[%s3] sm:$0xff] %v323
  %330 = vst [vmem:[%s3 + $0x8] sm:$0xff] %v324
  %331 = vst [vmem:[%s3 + $0x10] sm:$0xff] %v325
  // Predicated region
  $region14: #{_lambda_.5} parent=0 // pred_check
    _
  $region15: #{_lambda_.5} parent=0 // pred_check_branch
    %333 = sbr.rel (0) target = $region17
  $region16: #{_lambda_.5} parent=0 // pred_region
    _
  $region17: #{_lambda_.5} parent=0 // pred_fallthru
    _
  // Predicated region
  $region18: #{_lambda_.5} parent=0 // pred_check
    _
  $region19: #{_lambda_.5} parent=0 // pred_check_branch
    %335 = sbr.rel (0) target = $region21
  $region20: #{_lambda_.5} parent=0 // pred_region
    _
  $region21: #{_lambda_.5} parent=0 // pred_fallthru
    _

// kernel: _lambda_.6
$region0: #{_lambda_.6}
  #allocation0 [shape = 'u32[]', space=smem, size = 0x4, offset = 0x4, fixed_abs, tag = 'smem constant byte address 0x4 - core index']
  #allocation1 [shape = 'u32[144,128]{1,0:T(1,128)}', space=vmem, size = 0x12000, scoped, tag = 'internal scratch']
  #allocation2 [shape = 'f32[16,128]{1,0:T(8,128)}', space=vmem, size = 0x2000, scoped, tag = 'scratch operand']
  %s0 = inlined_call_operand.vmem [shape: bf16[2,128,128], index: 0, kind: input, shape index: {}]
  %s1 = inlined_call_operand.vmem [shape: bf16[16,128], index: 1, kind: input, shape index: {}]
  %s2 = inlined_call_operand.vmem [shape: f32[16,1], index: 2, kind: input, shape index: {}]
  %s3 = inlined_call_operand.vmem [shape: f32[16,1], index: 3, kind: input, shape index: {}]
  %s4 = inlined_call_operand.vmem [shape: bf16[2,16,128], index: 4, kind: output, shape index: {}]
  %s5 = sld [smem:[#allocation0]]
  $region57: #{_lambda_.6} parent=0
    _
  %s7 = ssub.s32 1, %s5
  %s8 = scalar_select 0, %s7, %s5
  loop: start=0, step=1, limit=4
  $region2: #{_lambda_.6} parent=0 // loop_pre_header
    _
  $region3: #{_lambda_.6} parent=0 // loop_header
    %s10 = sphi 0, %s14
    %p11 = scmp.ge.s32.totalorder %s10, 4
    %s17 = sphi 0, %s29
    %s18 = sphi 0, %s25
    %s19 = sphi 0, %s17
    %s20 = sphi 0, %s18
    %s21 = sphi 0, %s19
    %s22 = sphi 0, %s20
    %s34 = sphi 0, %s36
    %s37 = sphi 0, %s34
    %s38 = sphi 0, %s37
    %s54 = sphi 0, %s38
    %s60 = sphi 0, %s62
    %s63 = sphi 0, %s60
    %s64 = sphi 0, %s63
    %s80 = sphi 0, %s64
    %s84 = sphi 0, %s84
    %s86 = sphi 0, %s84
    %s87 = sphi 0, %s86
    %s101 = sphi 0, %s87
    %s105 = sphi 0, %s105
    %s107 = sphi 0, %s105
    %s108 = sphi 0, %s107
    %s122 = sphi 0, %s108
    %s128 = sphi 0, %s130
    %s131 = sphi 0, %s128
    %s132 = sphi 0, %s131
    %s148 = sphi 0, %s132
  $region4: #{_lambda_.6} parent=0 // loop_header_branch
    %13 = sbr.rel (%p11) target = $region8
  $region5: #{_lambda_.6} parent=0 // loop_body
    %s15 = ssub.s32 %s10, 1
    %s16 = ssub.s32 %s10, 2
    %s23 = sadd.s32 1, %s18
    %p24 = scmp.ge.s32.totalorder %s23, 1
    %s25 = scalar_select %p24, 0, %s23
    %s26 = sadd.s32 1, %s17
    %s27 = scalar_select %p24, %s26, %s17
    %p28 = scmp.ge.s32.totalorder %s27, 2
    %s29 = scalar_select %p28, 0, %s27
    %s30 = ssub.s32 %s17, %s29
    %s31 = ssub.s32 %s18, %s25
    %s32 = sor.u32 %s30, %s31
    %p33 = scmp.eq.s32.totalorder %s32, 0
    %s35 = sadd.s32 %s34, 1
    %s36 = scalar_select %p33, %s34, %s35
    %p39 = pneg %p33
    %p40 = scmp.eq.s32.totalorder %s10, 1
    %p41 = por %p39, %p40
    %p42 = scmp.ne.s32.totalorder %s34, %s37
    %p43 = scmp.eq.s32.totalorder %s10, 0
    %p44 = por %p42, %p43
    %p45 = scmp.ne.s32.totalorder %s34, %s37
    %p46 = scmp.eq.s32.totalorder %s15, 1
    %p47 = por %p45, %p46
    %p48 = scmp.ne.s32.totalorder %s37, %s38
    %p49 = scmp.eq.s32.totalorder %s15, 0
    %p50 = por %p48, %p49
    %p51 = scmp.ne.s32.totalorder %s37, %s38
    %p52 = scmp.eq.s32.totalorder %s16, 1
    %p53 = por %p51, %p52
    %p55 = scmp.ne.s32.totalorder %s38, %s54
    %p56 = scmp.eq.s32.totalorder %s16, 0
    %p57 = por %p55, %p56
    %s58 = ssub.s32 %s18, %s25
    %p59 = scmp.eq.s32.totalorder %s58, 0
    %s61 = sadd.s32 %s60, 1
    %s62 = scalar_select %p59, %s60, %s61
    %p65 = pneg %p59
    %p66 = scmp.eq.s32.totalorder %s10, 1
    %p67 = por %p65, %p66
    %p68 = scmp.ne.s32.totalorder %s60, %s63
    %p69 = scmp.eq.s32.totalorder %s10, 0
    %p70 = por %p68, %p69
    %p71 = scmp.ne.s32.totalorder %s60, %s63
    %p72 = scmp.eq.s32.totalorder %s15, 1
    %p73 = por %p71, %p72
    %p74 = scmp.ne.s32.totalorder %s63, %s64
    %p75 = scmp.eq.s32.totalorder %s15, 0
    %p76 = por %p74, %p75
    %p77 = scmp.ne.s32.totalorder %s63, %s64
    %p78 = scmp.eq.s32.totalorder %s16, 1
    %p79 = por %p77, %p78
    %p81 = scmp.ne.s32.totalorder %s64, %s80
    %p82 = scmp.eq.s32.totalorder %s16, 0
    %p83 = por %p81, %p82
    %s85 = sadd.s32 %s84, 1
    %p88 = scmp.eq.s32.totalorder %s10, 1
    %p89 = scmp.ne.s32.totalorder %s84, %s86
    %p90 = scmp.eq.s32.totalorder %s10, 0
    %p91 = por %p89, %p90
    %p92 = scmp.ne.s32.totalorder %s84, %s86
    %p93 = scmp.eq.s32.totalorder %s15, 1
    %p94 = por %p92, %p93
    %p95 = scmp.ne.s32.totalorder %s86, %s87
    %p96 = scmp.eq.s32.totalorder %s15, 0
    %p97 = por %p95, %p96
    %p98 = scmp.ne.s32.totalorder %s86, %s87
    %p99 = scmp.eq.s32.totalorder %s16, 1
    %p100 = por %p98, %p99
    %p102 = scmp.ne.s32.totalorder %s87, %s101
    %p103 = scmp.eq.s32.totalorder %s16, 0
    %p104 = por %p102, %p103
    %s106 = sadd.s32 %s105, 1
    %p109 = scmp.eq.s32.totalorder %s10, 1
    %p110 = scmp.ne.s32.totalorder %s105, %s107
    %p111 = scmp.eq.s32.totalorder %s10, 0
    %p112 = por %p110, %p111
    %p113 = scmp.ne.s32.totalorder %s105, %s107
    %p114 = scmp.eq.s32.totalorder %s15, 1
    %p115 = por %p113, %p114
    %p116 = scmp.ne.s32.totalorder %s107, %s108
    %p117 = scmp.eq.s32.totalorder %s15, 0
    %p118 = por %p116, %p117
    %p119 = scmp.ne.s32.totalorder %s107, %s108
    %p120 = scmp.eq.s32.totalorder %s16, 1
    %p121 = por %p119, %p120
    %p123 = scmp.ne.s32.totalorder %s108, %s122
    %p124 = scmp.eq.s32.totalorder %s16, 0
    %p125 = por %p123, %p124
    %s126 = ssub.s32 %s17, %s29
    %p127 = scmp.eq.s32.totalorder %s126, 0
    %s129 = sadd.s32 %s128, 1
    %s130 = scalar_select %p127, %s128, %s129
    %p133 = pneg %p127
    %p134 = scmp.eq.s32.totalorder %s10, 1
    %p135 = por %p133, %p134
    %p136 = scmp.ne.s32.totalorder %s128, %s131
    %p137 = scmp.eq.s32.totalorder %s10, 0
    %p138 = por %p136, %p137
    %p139 = scmp.ne.s32.totalorder %s128, %s131
    %p140 = scmp.eq.s32.totalorder %s15, 1
    %p141 = por %p139, %p140
    %p142 = scmp.ne.s32.totalorder %s131, %s132
    %p143 = scmp.eq.s32.totalorder %s15, 0
    %p144 = por %p142, %p143
    %p145 = scmp.ne.s32.totalorder %s131, %s132
    %p146 = scmp.eq.s32.totalorder %s16, 1
    %p147 = por %p145, %p146
    %p149 = scmp.ne.s32.totalorder %s132, %s148
    %p150 = scmp.eq.s32.totalorder %s16, 0
    %p151 = por %p149, %p150
    %p152 = scmp.le.s32.totalorder 1, %s10
    %p153 = scmp.lt.s32.totalorder %s10, 3
    %p154 = pnand %p152, %p153
    %p155 = pneg %p154
    // Predicated region
    $region9: #{_lambda_.6} parent=5 // pred_check
      _
    $region10: #{_lambda_.6} parent=5 // pred_check_branch
      %157 = sbr.rel (%p154) target = $region12
    $region11: #{_lambda_.6} parent=5 // pred_region
      %s158 = ssub.s32 %s10, 1
      // Predicated region
      $region13: #{_lambda_.6} parent=11 // pred_check
        %p159 = pneg %p76
      $region14: #{_lambda_.6} parent=11 // pred_check_branch
        %161 = sbr.rel (%p159) target = $region16
      $region15: #{_lambda_.6} parent=11 // pred_region
        %p162 = scmp.lt.s32.totalorder %s20, 0
        %s163 = scalar_select %p162, %s20, 0
        %s164 = smul.addr %s163, 4
        %s165 = scalar_lea.vmem %s1, %s164
      $region16: #{_lambda_.6} parent=11 // pred_fallthru
        _
      // Predicated region
      $region17: #{_lambda_.6} parent=11 // pred_check
        %p166 = pneg %p97
      $region18: #{_lambda_.6} parent=11 // pred_check_branch
        %168 = sbr.rel (%p166) target = $region20
      $region19: #{_lambda_.6} parent=11 // pred_region
        _
      $region20: #{_lambda_.6} parent=11 // pred_fallthru
        _
      // Predicated region
      $region21: #{_lambda_.6} parent=11 // pred_check
        %p169 = pneg %p118
      $region22: #{_lambda_.6} parent=11 // pred_check_branch
        %171 = sbr.rel (%p169) target = $region24
      $region23: #{_lambda_.6} parent=11 // pred_region
        _
      $region24: #{_lambda_.6} parent=11 // pred_fallthru
        _
    $region12: #{_lambda_.6} parent=5 // pred_fallthru
      _
    %p172 = scmp.lt.s32.totalorder %s10, 2
    // Predicated region
    $region25: #{_lambda_.6} parent=5 // pred_check
      %p173 = pneg %p172
    $region26: #{_lambda_.6} parent=5 // pred_check_branch
      %175 = sbr.rel (%p173) target = $region28
    $region27: #{_lambda_.6} parent=5 // pred_region
      // Predicated region
      $region29: #{_lambda_.6} parent=27 // pred_check
        %p176 = pneg %p44
      $region30: #{_lambda_.6} parent=27 // pred_check_branch
        %178 = sbr.rel (%p176) target = $region32
      $region31: #{_lambda_.6} parent=27 // pred_region
        %s179 = smul.u32 16, %s18
        %p180 = scmp.lt.s32.totalorder %s17, 1
        %s181 = scalar_select %p180, %s17, 1
        %p182 = scmp.lt.s32.totalorder %s179, 15
        %s183 = scalar_select %p182, %s179, 15
        %s184 = smul.addr %s181, 16
        %s185 = sadd.s32 %s183, %s184
        %s186 = smul.addr %s185, 4
        %s187 = scalar_lea.vmem %s0, %s186
        %s188 = smul.u32 16, %s18
      $region32: #{_lambda_.6} parent=27 // pred_fallthru
        _
    $region28: #{_lambda_.6} parent=5 // pred_fallthru
      _
    %p189 = scmp.le.s32.totalorder 1, %s10
    %p190 = scmp.lt.s32.totalorder %s10, 3
    %p191 = pnand %p189, %p190
    %p192 = pneg %p191
    // Predicated region
    $region33: #{_lambda_.6} parent=5 // pred_check
      _
    $region34: #{_lambda_.6} parent=5 // pred_check_branch
      %194 = sbr.rel (%p191) target = $region36
    $region35: #{_lambda_.6} parent=5 // pred_region
      %s195 = ssub.s32 %s10, 1
      %s196 = smul.u32 16, %s20
      %p197 = scmp.lt.s32.totalorder %s19, 1
      %s198 = scalar_select %p197, %s19, 1
      %p199 = scmp.lt.s32.totalorder %s196, 15
      %s200 = scalar_select %p199, %s196, 15
      %s201 = smul.addr %s198, 16
      %s202 = sadd.s32 %s200, %s201
      %s203 = smul.addr %s202, 4
      %s204 = scalar_lea.vmem %s0, %s203
      %p205 = pneg %p50
      %p206 = pneg %p47
      %p207 = scmp.lt.s32.totalorder %s20, 0
      %s208 = scalar_select %p207, %s20, 0
      %s209 = smul.addr %s208, 4
      %s210 = scalar_lea.vmem %s1, %s209
      %p211 = pneg %p76
      %p212 = pneg %p73
      %p213 = pneg %p97
      %p214 = pneg %p94
      %p215 = pneg %p118
      %p216 = pneg %p115
      %p217 = pneg %p144
      %p218 = pneg %p141
      %p219 = scmp.lt.s32.totalorder %s19, 1
      %s220 = scalar_select %p219, %s19, 1
      %s221 = smul.addr %s220, 2
      %s222 = smul.addr %s221, 4
      %s223 = scalar_lea.vmem %s4, %s222
      %s224 = smul.u32 16, %s20
      %p225 = scmp.lt.s32.totalorder %s19, 1
      %s226 = scalar_select %p225, %s19, 1
      %p227 = scmp.lt.s32.totalorder %s224, 15
      %s228 = scalar_select %p227, %s224, 15
      %s229 = smul.addr %s226, 16
      %s230 = sadd.s32 %s228, %s229
      %s231 = smul.addr %s230, 4
      %s232 = scalar_lea.vmem %s0, %s231
      %s233 = smul.u32 16, %s20
      %p234 = scmp.lt.s32.totalorder %s20, 0
      %s235 = scalar_select %p234, %s20, 0
      %s236 = smul.addr %s235, 4
      %s237 = scalar_lea.vmem %s1, %s236
      %p238 = scmp.lt.s32.totalorder %s19, 1
      %s239 = scalar_select %p238, %s19, 1
      %s240 = smul.addr %s239, 2
      %s241 = smul.addr %s240, 4
      %s242 = scalar_lea.vmem %s4, %s241
      %p244 = scmp.eq.s32.totalorder %s20, 0
      // Predicated region
      $region37: #{_lambda_.6} parent=35 // pred_check
        %p245 = pneg %p244
      $region38: #{_lambda_.6} parent=35 // pred_check_branch
        %247 = sbr.rel (%p245) target = $region40
      $region39: #{_lambda_.6} parent=35 // pred_region
        %248 = vst [vmem:[#allocation2] sm:$0xff] 0.0
        %249 = vst [vmem:[#allocation2 + $0x8] sm:$0xff] 0.0
      $region40: #{_lambda_.6} parent=35 // pred_fallthru
        _
      %v250 = vld [vmem:[#allocation2] sm:$0xff]
      %v251 = vld [vmem:[#allocation2 + $0x8] sm:$0xff]
      %v252 = vld [vmem:[%s237] sm:$0xf]
      %v253 = vld [vmem:[%s237 + $0x4] sm:$0xf]
      %v254 = vld [vmem:[%s232] sm:$0xf]
      %v255 = vld [vmem:[%s232 + $0x4] sm:$0xf]
      %v256 = vld [vmem:[%s232 + $0x8] sm:$0xf]
      %v257 = vld [vmem:[%s232 + $0xc] sm:$0xf]
      %v258 = vld [vmem:[%s232 + $0x10] sm:$0xf]
      %v259 = vld [vmem:[%s232 + $0x14] sm:$0xf]
      %v260 = vld [vmem:[%s232 + $0x18] sm:$0xf]
      %v261 = vld [vmem:[%s232 + $0x1c] sm:$0xf]
      %v262 = vld [vmem:[%s232 + $0x20] sm:$0xf]
      %v263 = vld [vmem:[%s232 + $0x24] sm:$0xf]
      %v264 = vld [vmem:[%s232 + $0x28] sm:$0xf]
      %v265 = vld [vmem:[%s232 + $0x2c] sm:$0xf]
      %v266 = vld [vmem:[%s232 + $0x30] sm:$0xf]
      %v267 = vld [vmem:[%s232 + $0x34] sm:$0xf]
      %v268 = vld [vmem:[%s232 + $0x38] sm:$0xf]
      %v269 = vld [vmem:[%s232 + $0x3c] sm:$0xf]
      %v272 = vunpack.c.l.b16 %v252
      %v273 = vunpack.c.l.b16 %v253
      %v274 = vpack.c.b16 %v273, %v272
      %v292 = vunpack.c.l.b16 %v254
      %v293 = vunpack.c.l.b16 %v255
      %v294 = vunpack.c.l.b16 %v256
      %v295 = vunpack.c.l.b16 %v257
      %v296 = vunpack.c.l.b16 %v258
      %v297 = vunpack.c.l.b16 %v259
      %v298 = vunpack.c.l.b16 %v260
      %v299 = vunpack.c.l.b16 %v261
      %v300 = vunpack.c.l.b16 %v262
      %v301 = vunpack.c.l.b16 %v263
      %v302 = vunpack.c.l.b16 %v264
      %v303 = vunpack.c.l.b16 %v265
      %v304 = vunpack.c.l.b16 %v266
      %v305 = vunpack.c.l.b16 %v267
      %v306 = vunpack.c.l.b16 %v268
      %v307 = vunpack.c.l.b16 %v269
      %v308 = vpack.c.b16 %v293, %v292
      %v309 = vpack.c.b16 %v295, %v294
      %v310 = vpack.c.b16 %v297, %v296
      %v311 = vpack.c.b16 %v299, %v298
      %v312 = vpack.c.b16 %v301, %v300
      %v313 = vpack.c.b16 %v303, %v302
      %v314 = vpack.c.b16 %v305, %v304
      %v315 = vpack.c.b16 %v307, %v306
      %324 = vmatprep.subr.bf16.mxu0 0
      %325 = vmatpush1.bf16.msra.mxu0 %v315
      %326 = vmatprep.subr.bf16.mxu0 0
      %327 = vmatpush1.bf16.msra.mxu0 %v314
      %328 = vmatprep.subr.bf16.mxu0 0
      %329 = vmatpush1.bf16.msra.mxu0 %v313
      %330 = vmatprep.subr.bf16.mxu0 0
      %331 = vmatpush1.bf16.msra.mxu0 %v312
      %332 = vmatprep.subr.bf16.mxu0 0
      %333 = vmatpush1.bf16.msra.mxu0 %v311
      %334 = vmatprep.subr.bf16.mxu0 0
      %335 = vmatpush1.bf16.msra.mxu0 %v310
      %336 = vmatprep.subr.bf16.mxu0 0
      %337 = vmatpush1.bf16.msra.mxu0 %v309
      %338 = vmatprep.subr.bf16.mxu0 0
      %339 = vmatpush1.bf16.msra.mxu0 %v308
      %340 = vmatprep.subr.bf16.mxu0 0
      %341 = vmatpush2.bf16.msra.mxu0 0
      %342 = vmatprep.subr.bf16.mxu0 0
      %343 = vmatpush2.bf16.msra.mxu0 0
      %344 = vmatprep.subr.bf16.mxu0 0
      %345 = vmatpush2.bf16.msra.mxu0 0
      %346 = vmatprep.subr.bf16.mxu0 0
      %347 = vmatpush2.bf16.msra.mxu0 0
      %348 = vmatprep.subr.bf16.mxu0 0
      %349 = vmatpush2.bf16.msra.mxu0 0
      %350 = vmatprep.subr.bf16.mxu0 0
      %351 = vmatpush2.bf16.msra.mxu0 0
      %352 = vmatprep.subr.bf16.mxu0 0
      %353 = vmatpush2.bf16.msra.mxu0 0
      %354 = vmatprep.subr.bf16.mxu0 0
      %355 = vmatpush2.bf16.msra.mxu0 0
      %356 = vmatprep.mubr.bf16.mxu0 0
      %357 = vmatmul.mubr.bf16.gmra.mxu0 %v274
      %v358 = vpop.f32.mrf.mxu0
      %v359 = vadd.f32 0.0, %v358
      %v360 = vpop.f32.mrf.mxu0
      %v361 = vpop.f32.mrf.mxu0
      %v362 = vadd.f32 0.0, %v361
      %v363 = vpop.f32.mrf.mxu0
      %364 = vdwg.mxu0
      %v365 = vadd.f32 %v250, %v359
      %v366 = vadd.f32 %v251, %v362
      %367 = vst [vmem:[#allocation2] sm:$0xff] %v365
      %368 = vst [vmem:[#allocation2 + $0x8] sm:$0xff] %v366
      // Predicated region
      $region41: #{_lambda_.6} parent=35 // pred_check
        %p369 = pneg %p244
      $region42: #{_lambda_.6} parent=35 // pred_check_branch
        %371 = sbr.rel (%p369) target = $region44
      $region43: #{_lambda_.6} parent=35 // pred_region
        %v372 = vld [vmem:[#allocation2] sm:$0xff]
        %v373 = vld [vmem:[#allocation2 + $0x8] sm:$0xff]
        %v374 = vlaneseq
        %v375 = vand.u32 %v374, 127
        %vm376 = vcmp.lt.s32.totalorder %v375, 64
        %377 = vadd.xlane.f32.xlu0 %v372
        %v378 = vpop.xlane.xlu0 %377
        %379 = vadd.xlane.f32.xlu0 %v373
        %v380 = vpop.xlane.xlu0 %379
        %v381 = vmul.f32 %v378, 0.015625
        %v382 = vmul.f32 %v380, 0.015625
        %v383 = vsub.f32 %v372, %v381
        %v384 = vsub.f32 %v373, %v382
        %v385 = vsel %vm376, %v383, 0.0
        %v386 = vsel %vm376, %v384, 0.0
        %v387 = vmul.f32 %v385, %v385
        %v388 = vmul.f32 %v386, %v386
        %389 = vadd.xlane.f32.xlu0 %v387
        %v390 = vpop.xlane.xlu0 %389
        %391 = vadd.xlane.f32.xlu0 %v388
        %v392 = vpop.xlane.xlu0 %391
        %v393 = vmul.f32 %v390, 0.015625
        %v394 = vmul.f32 %v392, 0.015625
        %v395 = vadd.f32 %v393, 1e-05
        %v396 = vadd.f32 %v394, 1e-05
        %v397 = vrsqrt.pop %v395
        %v398 = vrsqrt.pop %v396
        %v399 = vmul.f32 %v385, %v397
        %v400 = vmul.f32 %v386, %v398
        %v401 = vld [vmem:[%s2] sm:$0xff]
        %v402 = vld [vmem:[%s2 + $0x8] sm:$0xff]
        %404 = vset.pattern.permute.xlu0 0
        %405 = vperm.xlu0 %404, %v401
        %v406 = vpop.permute.xlu0 %405
        %409 = vset.pattern.permute.xlu0 0
        %410 = vperm.xlu0 %409, %v402
        %v411 = vpop.permute.xlu0 %410
        %v413 = vmul.f32 %v399, %v406
        %v414 = vmul.f32 %v400, %v411
        %v415 = vld [vmem:[%s3] sm:$0xff]
        %v416 = vld [vmem:[%s3 + $0x8] sm:$0xff]
        %418 = vset.pattern.permute.xlu0 0
        %419 = vperm.xlu0 %418, %v415
        %v420 = vpop.permute.xlu0 %419
        %423 = vset.pattern.permute.xlu0 0
        %424 = vperm.xlu0 %423, %v416
        %v425 = vpop.permute.xlu0 %424
        %v427 = vadd.f32 %v413, %v420
        %v428 = vadd.f32 %v414, %v425
        %v429 = vmul.f32 %v427, 0.2
        %v430 = vmul.f32 %v428, 0.2
        %v431 = vmax.f32 %v427, %v429
        %v432 = vmax.f32 %v428, %v430
        %v433 = vsel %vm376, %v431, 0.0
        %v434 = vsel %vm376, %v432, 0.0
        %v435 = vpack.c.bf16 %v434, %v433
        %v437 = vunpack.c.l.b16 %v435
        %v438 = vunpack.c.h.b16 %v435
        %v439 = vpack.c.b16 %v437, %v437
        %v440 = vpack.c.b16 %v438, %v438
        %443 = vst [vmem:[%s242] sm:$0xf] %v439
        %444 = vst [vmem:[%s242 + $0x4] sm:$0xf] %v440
      $region44: #{_lambda_.6} parent=35 // pred_fallthru
        _
      %p445 = scmp.lt.s32.totalorder %s19, 1
      %s446 = scalar_select %p445, %s19, 1
      %s447 = smul.addr %s446, 2
      %s448 = smul.addr %s447, 4
      %s449 = scalar_lea.vmem %s4, %s448
      // Predicated region
      $region45: #{_lambda_.6} parent=35 // pred_check
        %p450 = pneg %p141
      $region46: #{_lambda_.6} parent=35 // pred_check_branch
        %452 = sbr.rel (%p450) target = $region48
      $region47: #{_lambda_.6} parent=35 // pred_region
        _
      $region48: #{_lambda_.6} parent=35 // pred_fallthru
        _
    $region36: #{_lambda_.6} parent=5 // pred_fallthru
      _
    %p453 = scmp.le.s32.totalorder 2, %s10
    // Predicated region
    $region49: #{_lambda_.6} parent=5 // pred_check
      %p454 = pneg %p453
    $region50: #{_lambda_.6} parent=5 // pred_check_branch
      %456 = sbr.rel (%p454) target = $region52
    $region51: #{_lambda_.6} parent=5 // pred_region
      %s457 = ssub.s32 %s10, 2
      // Predicated region
      $region53: #{_lambda_.6} parent=51 // pred_check
        %p458 = pneg %p147
      $region54: #{_lambda_.6} parent=51 // pred_check_branch
        %460 = sbr.rel (%p458) target = $region56
      $region55: #{_lambda_.6} parent=51 // pred_region
        %p461 = scmp.lt.s32.totalorder %s21, 1
        %s462 = scalar_select %p461, %s21, 1
        %s463 = smul.addr %s462, 2
        %s464 = smul.addr %s463, 4
        %s465 = scalar_lea.vmem %s4, %s464
      $region56: #{_lambda_.6} parent=51 // pred_fallthru
        _
    $region52: #{_lambda_.6} parent=5 // pred_fallthru
      _
  $region6: #{_lambda_.6} parent=0 // loop_footer
    %s14 = sadd.s32 1, %s10
  $region7: #{_lambda_.6} parent=0 // loop_footer_branch
    %9 = sbr.rel target = $region3
  $region8: #{_lambda_.6} parent=0 // loop_exit
    _

// kernel: _lambda_.7
$region0: #{_lambda_.7}
  #allocation0 [shape = 'u32[]', space=smem, size = 0x4, offset = 0x4, fixed_abs, tag = 'smem constant byte address 0x4 - core index']
  #allocation1 [shape = 'u32[144,128]{1,0:T(1,128)}', space=vmem, size = 0x12000, scoped, tag = 'internal scratch']
  #allocation2 [shape = 'f32[32,128]{1,0:T(8,128)}', space=vmem, size = 0x4000, scoped, tag = 'scratch operand']
  %s0 = inlined_call_operand.vmem [shape: bf16[2,256,128], index: 0, kind: input, shape index: {}]
  %s1 = inlined_call_operand.vmem [shape: bf16[32,256], index: 1, kind: input, shape index: {}]
  %s2 = inlined_call_operand.vmem [shape: f32[32,1], index: 2, kind: input, shape index: {}]
  %s3 = inlined_call_operand.vmem [shape: f32[32,1], index: 3, kind: input, shape index: {}]
  %s4 = inlined_call_operand.vmem [shape: bf16[2,32,128], index: 4, kind: output, shape index: {}]
  %s5 = sld [smem:[#allocation0]]
  $region98: #{_lambda_.7} parent=0
    _
  %s7 = ssub.s32 1, %s5
  %s8 = scalar_select 0, %s7, %s5
  $region1: #{_lambda_.7} parent=0
    #allocation3 [shape = 'u8[16384]{0}', space=vmem, size = 0x4000, scoped, tag = 'input window, operand 1']
    loop: start=0, step=1, limit=6
    $region2: #{_lambda_.7} parent=1 // loop_pre_header
      _
    $region3: #{_lambda_.7} parent=1 // loop_header
      %s10 = sphi 0, %s14
      %p11 = scmp.ge.s32.totalorder %s10, 6
      %s17 = sphi 0, %s29
      %s18 = sphi 0, %s25
      %s19 = sphi 0, %s17
      %s20 = sphi 0, %s18
      %s21 = sphi 0, %s19
      %s22 = sphi 0, %s20
      %s34 = sphi 0, %s36
      %s37 = sphi 0, %s34
      %s38 = sphi 0, %s37
      %s54 = sphi 0, %s38
      %s60 = sphi 0, %s62
      %s63 = sphi 0, %s60
      %s64 = sphi 0, %s63
      %s80 = sphi 0, %s64
      %s84 = sphi 0, %s84
      %s86 = sphi 0, %s84
      %s87 = sphi 0, %s86
      %s101 = sphi 0, %s87
      %s105 = sphi 0, %s105
      %s107 = sphi 0, %s105
      %s108 = sphi 0, %s107
      %s122 = sphi 0, %s108
      %s128 = sphi 0, %s130
      %s131 = sphi 0, %s128
      %s132 = sphi 0, %s131
      %s148 = sphi 0, %s132
    $region4: #{_lambda_.7} parent=1 // loop_header_branch
      %13 = sbr.rel (%p11) target = $region8
    $region5: #{_lambda_.7} parent=1 // loop_body
      %s15 = ssub.s32 %s10, 1
      %s16 = ssub.s32 %s10, 2
      %s23 = sadd.s32 1, %s18
      %p24 = scmp.ge.s32.totalorder %s23, 2
      %s25 = scalar_select %p24, 0, %s23
      %s26 = sadd.s32 1, %s17
      %s27 = scalar_select %p24, %s26, %s17
      %p28 = scmp.ge.s32.totalorder %s27, 2
      %s29 = scalar_select %p28, 0, %s27
      %s30 = ssub.s32 %s17, %s29
      %s31 = ssub.s32 %s18, %s25
      %s32 = sor.u32 %s30, %s31
      %p33 = scmp.eq.s32.totalorder %s32, 0
      %s35 = sadd.s32 %s34, 1
      %s36 = scalar_select %p33, %s34, %s35
      %p39 = pneg %p33
      %p40 = scmp.eq.s32.totalorder %s10, 3
      %p41 = por %p39, %p40
      %p42 = scmp.ne.s32.totalorder %s34, %s37
      %p43 = scmp.eq.s32.totalorder %s10, 0
      %p44 = por %p42, %p43
      %p45 = scmp.ne.s32.totalorder %s34, %s37
      %p46 = scmp.eq.s32.totalorder %s15, 3
      %p47 = por %p45, %p46
      %p48 = scmp.ne.s32.totalorder %s37, %s38
      %p49 = scmp.eq.s32.totalorder %s15, 0
      %p50 = por %p48, %p49
      %p51 = scmp.ne.s32.totalorder %s37, %s38
      %p52 = scmp.eq.s32.totalorder %s16, 3
      %p53 = por %p51, %p52
      %p55 = scmp.ne.s32.totalorder %s38, %s54
      %p56 = scmp.eq.s32.totalorder %s16, 0
      %p57 = por %p55, %p56
      %s58 = ssub.s32 %s18, %s25
      %p59 = scmp.eq.s32.totalorder %s58, 0
      %s61 = sadd.s32 %s60, 1
      %s62 = scalar_select %p59, %s60, %s61
      %p65 = pneg %p59
      %p66 = scmp.eq.s32.totalorder %s10, 3
      %p67 = por %p65, %p66
      %p68 = scmp.ne.s32.totalorder %s60, %s63
      %p69 = scmp.eq.s32.totalorder %s10, 0
      %p70 = por %p68, %p69
      %p71 = scmp.ne.s32.totalorder %s60, %s63
      %p72 = scmp.eq.s32.totalorder %s15, 3
      %p73 = por %p71, %p72
      %p74 = scmp.ne.s32.totalorder %s63, %s64
      %p75 = scmp.eq.s32.totalorder %s15, 0
      %p76 = por %p74, %p75
      %p77 = scmp.ne.s32.totalorder %s63, %s64
      %p78 = scmp.eq.s32.totalorder %s16, 3
      %p79 = por %p77, %p78
      %p81 = scmp.ne.s32.totalorder %s64, %s80
      %p82 = scmp.eq.s32.totalorder %s16, 0
      %p83 = por %p81, %p82
      %s85 = sadd.s32 %s84, 1
      %p88 = scmp.eq.s32.totalorder %s10, 3
      %p89 = scmp.ne.s32.totalorder %s84, %s86
      %p90 = scmp.eq.s32.totalorder %s10, 0
      %p91 = por %p89, %p90
      %p92 = scmp.ne.s32.totalorder %s84, %s86
      %p93 = scmp.eq.s32.totalorder %s15, 3
      %p94 = por %p92, %p93
      %p95 = scmp.ne.s32.totalorder %s86, %s87
      %p96 = scmp.eq.s32.totalorder %s15, 0
      %p97 = por %p95, %p96
      %p98 = scmp.ne.s32.totalorder %s86, %s87
      %p99 = scmp.eq.s32.totalorder %s16, 3
      %p100 = por %p98, %p99
      %p102 = scmp.ne.s32.totalorder %s87, %s101
      %p103 = scmp.eq.s32.totalorder %s16, 0
      %p104 = por %p102, %p103
      %s106 = sadd.s32 %s105, 1
      %p109 = scmp.eq.s32.totalorder %s10, 3
      %p110 = scmp.ne.s32.totalorder %s105, %s107
      %p111 = scmp.eq.s32.totalorder %s10, 0
      %p112 = por %p110, %p111
      %p113 = scmp.ne.s32.totalorder %s105, %s107
      %p114 = scmp.eq.s32.totalorder %s15, 3
      %p115 = por %p113, %p114
      %p116 = scmp.ne.s32.totalorder %s107, %s108
      %p117 = scmp.eq.s32.totalorder %s15, 0
      %p118 = por %p116, %p117
      %p119 = scmp.ne.s32.totalorder %s107, %s108
      %p120 = scmp.eq.s32.totalorder %s16, 3
      %p121 = por %p119, %p120
      %p123 = scmp.ne.s32.totalorder %s108, %s122
      %p124 = scmp.eq.s32.totalorder %s16, 0
      %p125 = por %p123, %p124
      %s126 = ssub.s32 %s17, %s29
      %p127 = scmp.eq.s32.totalorder %s126, 0
      %s129 = sadd.s32 %s128, 1
      %s130 = scalar_select %p127, %s128, %s129
      %p133 = pneg %p127
      %p134 = scmp.eq.s32.totalorder %s10, 3
      %p135 = por %p133, %p134
      %p136 = scmp.ne.s32.totalorder %s128, %s131
      %p137 = scmp.eq.s32.totalorder %s10, 0
      %p138 = por %p136, %p137
      %p139 = scmp.ne.s32.totalorder %s128, %s131
      %p140 = scmp.eq.s32.totalorder %s15, 3
      %p141 = por %p139, %p140
      %p142 = scmp.ne.s32.totalorder %s131, %s132
      %p143 = scmp.eq.s32.totalorder %s15, 0
      %p144 = por %p142, %p143
      %p145 = scmp.ne.s32.totalorder %s131, %s132
      %p146 = scmp.eq.s32.totalorder %s16, 3
      %p147 = por %p145, %p146
      %p149 = scmp.ne.s32.totalorder %s132, %s148
      %p150 = scmp.eq.s32.totalorder %s16, 0
      %p151 = por %p149, %p150
      %p152 = scmp.le.s32.totalorder 1, %s10
      %p153 = scmp.lt.s32.totalorder %s10, 5
      %p154 = pnand %p152, %p153
      %p155 = pneg %p154
      // Predicated region
      $region9: #{_lambda_.7} parent=5 // pred_check
        _
      $region10: #{_lambda_.7} parent=5 // pred_check_branch
        %157 = sbr.rel (%p154) target = $region12
      $region11: #{_lambda_.7} parent=5 // pred_region
        %s158 = ssub.s32 %s10, 1
        // Predicated region
        $region13: #{_lambda_.7} parent=11 // pred_check
          %p159 = pneg %p97
        $region14: #{_lambda_.7} parent=11 // pred_check_branch
          %161 = sbr.rel (%p159) target = $region16
        $region15: #{_lambda_.7} parent=11 // pred_region
          _
        $region16: #{_lambda_.7} parent=11 // pred_fallthru
          _
        // Predicated region
        $region17: #{_lambda_.7} parent=11 // pred_check
          %p162 = pneg %p118
        $region18: #{_lambda_.7} parent=11 // pred_check_branch
          %164 = sbr.rel (%p162) target = $region20
        $region19: #{_lambda_.7} parent=11 // pred_region
          _
        $region20: #{_lambda_.7} parent=11 // pred_fallthru
          _
      $region12: #{_lambda_.7} parent=5 // pred_fallthru
        _
      %p165 = scmp.lt.s32.totalorder %s10, 4
      // Predicated region
      $region21: #{_lambda_.7} parent=5 // pred_check
        %p166 = pneg %p165
      $region22: #{_lambda_.7} parent=5 // pred_check_branch
        %168 = sbr.rel (%p166) target = $region24
      $region23: #{_lambda_.7} parent=5 // pred_region
        // Predicated region
        $region25: #{_lambda_.7} parent=23 // pred_check
          %p169 = pneg %p44
        $region26: #{_lambda_.7} parent=23 // pred_check_branch
          %171 = sbr.rel (%p169) target = $region28
        $region27: #{_lambda_.7} parent=23 // pred_region
          %s172 = smul.u32 16, %s18
          %p173 = scmp.lt.s32.totalorder %s17, 1
          %s174 = scalar_select %p173, %s17, 1
          %p175 = scmp.lt.s32.totalorder %s172, 31
          %s176 = scalar_select %p175, %s172, 31
          %s177 = smul.addr %s174, 32
          %s178 = sadd.s32 %s176, %s177
          %s179 = smul.addr %s178, 4
          %s180 = scalar_lea.vmem %s0, %s179
          %s181 = smul.u32 16, %s18
        $region28: #{_lambda_.7} parent=23 // pred_fallthru
          _
        // Predicated region
        $region29: #{_lambda_.7} parent=23 // pred_check
          %p182 = pneg %p70
        $region30: #{_lambda_.7} parent=23 // pred_check_branch
          %184 = sbr.rel (%p182) target = $region32
        $region31: #{_lambda_.7} parent=23 // pred_region
          %s185 = sand.u32 %s60, 1
          %s186 = sand.u32 %s60, 1
          %s187 = smul.addr %s186, 16
          %s188 = scalar_lea.vmem [#allocation3], %s187
          %s189 = smul.addr %s18, 4
          %s190 = scalar_lea.vmem %s1, %s189
          // Predicated region
          $region33: #{_lambda_.7} parent=31 // pred_check
            _
          $region34: #{_lambda_.7} parent=31 // pred_check_branch
            %192 = sbr.rel (0) target = $region36
          $region35: #{_lambda_.7} parent=31 // pred_region
            // Predicated region
            $region37: #{_lambda_.7} parent=35 // pred_check
              _
            $region38: #{_lambda_.7} parent=35 // pred_check_branch
              %194 = sbr.rel target = $region40
            $region39: #{_lambda_.7} parent=35 // pred_region
              // Predicated region
              $region52: #{_lambda_.7} parent=39 // pred_check
                _
              $region53: #{_lambda_.7} parent=39 // pred_check_branch
                %216 = sbr.rel (0) target = $region55
              $region54: #{_lambda_.7} parent=39 // pred_region
                loop: start=0, step=1, limit=1
                $region56: #{_lambda_.7} parent=54 // loop_pre_header
                  _
                $region57: #{_lambda_.7} parent=54 // loop_header
                  %s218 = sphi 0, %s222
                  %p219 = scmp.ge.s32.totalorder %s218, 1
                  %s223 = sphi %s190, %s190
                  %s224 = sphi %s188, %s188
                $region58: #{_lambda_.7} parent=54 // loop_header_branch
                  %221 = sbr.rel (%p219) target = $region62
                $region59: #{_lambda_.7} parent=54 // loop_body
                  _
                $region60: #{_lambda_.7} parent=54 // loop_footer
                  %s222 = sadd.s32 1, %s218
                $region61: #{_lambda_.7} parent=54 // loop_footer_branch
                  %217 = sbr.rel target = $region57
                $region62: #{_lambda_.7} parent=54 // loop_exit
                  _
                %s226 = ssub.s32 16, 1
                loop: start=0, step=1, limit=1
                $region63: #{_lambda_.7} parent=54 // loop_pre_header
                  _
                $region64: #{_lambda_.7} parent=54 // loop_header
                  %s228 = sphi 0, %s232
                  %p229 = scmp.ge.s32.totalorder %s228, 1
                  %s233 = sphi %s190, %s190
                  %s234 = sphi %s188, %s188
                $region65: #{_lambda_.7} parent=54 // loop_header_branch
                  %231 = sbr.rel (%p229) target = $region69
                $region66: #{_lambda_.7} parent=54 // loop_body
                  %v235 = vld [vmem:[%s233] sm:%s226]
                  %236 = vst [vmem:[%s234] sm:%s226] %v235
                  %v237 = vld [vmem:[%s233 + $0x8] sm:%s226]
                  %238 = vst [vmem:[%s234 + $0x4] sm:%s226] %v237
                  %v239 = vld [vmem:[%s233 + $0x10] sm:%s226]
                  %240 = vst [vmem:[%s234 + $0x8] sm:%s226] %v239
                  %v241 = vld [vmem:[%s233 + $0x18] sm:%s226]
                  %242 = vst [vmem:[%s234 + $0xc] sm:%s226] %v241
                $region67: #{_lambda_.7} parent=54 // loop_footer
                  %s232 = sadd.s32 1, %s228
                $region68: #{_lambda_.7} parent=54 // loop_footer_branch
                  %227 = sbr.rel target = $region64
                $region69: #{_lambda_.7} parent=54 // loop_exit
                  _
              $region55: #{_lambda_.7} parent=39 // pred_fallthru
                _
            $region40: #{_lambda_.7} parent=35 // pred_fallthru
              _
            // Predicated region
            $region41: #{_lambda_.7} parent=35 // pred_check
              _
            $region42: #{_lambda_.7} parent=35 // pred_check_branch
              %196 = sbr.rel (0) target = $region44
            $region43: #{_lambda_.7} parent=35 // pred_region
              %s198 = ssub.s32 16, 1
              loop: start=0, step=1, limit=1
              $region45: #{_lambda_.7} parent=43 // loop_pre_header
                _
              $region46: #{_lambda_.7} parent=43 // loop_header
                %s200 = sphi 0, %s204
                %p201 = scmp.ge.s32.totalorder %s200, 1
                %s205 = sphi %s190, %s190
                %s206 = sphi %s188, %s188
              $region47: #{_lambda_.7} parent=43 // loop_header_branch
                %203 = sbr.rel (%p201) target = $region51
              $region48: #{_lambda_.7} parent=43 // loop_body
                %v207 = vld [vmem:[%s205] sm:%s198]
                %208 = vst [vmem:[%s206] sm:%s198] %v207
                %v209 = vld [vmem:[%s205 + $0x8] sm:%s198]
                %210 = vst [vmem:[%s206 + $0x4] sm:%s198] %v209
                %v211 = vld [vmem:[%s205 + $0x10] sm:%s198]
                %212 = vst [vmem:[%s206 + $0x8] sm:%s198] %v211
                %v213 = vld [vmem:[%s205 + $0x18] sm:%s198]
                %214 = vst [vmem:[%s206 + $0xc] sm:%s198] %v213
              $region49: #{_lambda_.7} parent=43 // loop_footer
                %s204 = sadd.s32 1, %s200
              $region50: #{_lambda_.7} parent=43 // loop_footer_branch
                %199 = sbr.rel target = $region46
              $region51: #{_lambda_.7} parent=43 // loop_exit
                _
            $region44: #{_lambda_.7} parent=35 // pred_fallthru
              _
          $region36: #{_lambda_.7} parent=31 // pred_fallthru
            _
          %243 = vnop
        $region32: #{_lambda_.7} parent=23 // pred_fallthru
          _
      $region24: #{_lambda_.7} parent=5 // pred_fallthru
        _
      %p244 = scmp.le.s32.totalorder 1, %s10
      %p245 = scmp.lt.s32.totalorder %s10, 5
      %p246 = pnand %p244, %p245
      %p247 = pneg %p246
      // Predicated region
      $region70: #{_lambda_.7} parent=5 // pred_check
        _
      $region71: #{_lambda_.7} parent=5 // pred_check_branch
        %249 = sbr.rel (%p246) target = $region73
      $region72: #{_lambda_.7} parent=5 // pred_region
        %s250 = ssub.s32 %s10, 1
        %s251 = sand.u32 %s63, 1
        %s252 = sand.u32 %s63, 1
        %s253 = smul.addr %s252, 16
        %s254 = scalar_lea.vmem [#allocation3], %s253
        // Predicated region
        $region74: #{_lambda_.7} parent=72 // pred_check
          %p255 = pneg %p76
        $region75: #{_lambda_.7} parent=72 // pred_check_branch
          %257 = sbr.rel (%p255) target = $region77
        $region76: #{_lambda_.7} parent=72 // pred_region
          _
        $region77: #{_lambda_.7} parent=72 // pred_fallthru
          _
        %s258 = smul.u32 16, %s20
        %p259 = scmp.lt.s32.totalorder %s19, 1
        %s260 = scalar_select %p259, %s19, 1
        %p261 = scmp.lt.s32.totalorder %s258, 31
        %s262 = scalar_select %p261, %s258, 31
        %s263 = smul.addr %s260, 32
        %s264 = sadd.s32 %s262, %s263
        %s265 = smul.addr %s264, 4
        %s266 = scalar_lea.vmem %s0, %s265
        %p267 = pneg %p50
        %p268 = pneg %p47
        %s269 = sand.u32 %s63, 1
        %s270 = sand.u32 %s63, 1
        %s271 = smul.addr %s270, 16
        %s272 = scalar_lea.vmem [#allocation3], %s271
        %p273 = pneg %p76
        %p274 = pneg %p73
        %p275 = pneg %p97
        %p276 = pneg %p94
        %p277 = pneg %p118
        %p278 = pneg %p115
        %p279 = pneg %p144
        %p280 = pneg %p141
        %p281 = scmp.lt.s32.totalorder %s19, 1
        %s282 = scalar_select %p281, %s19, 1
        %s283 = smul.addr %s282, 4
        %s284 = smul.addr %s283, 4
        %s285 = scalar_lea.vmem %s4, %s284
        %s286 = smul.u32 16, %s20
        %p287 = scmp.lt.s32.totalorder %s19, 1
        %s288 = scalar_select %p287, %s19, 1
        %p289 = scmp.lt.s32.totalorder %s286, 31
        %s290 = scalar_select %p289, %s286, 31
        %s291 = smul.addr %s288, 32
        %s292 = sadd.s32 %s290, %s291
        %s293 = smul.addr %s292, 4
        %s294 = scalar_lea.vmem %s0, %s293
        %s295 = smul.u32 16, %s20
        %p296 = scmp.lt.s32.totalorder %s19, 1
        %s297 = scalar_select %p296, %s19, 1
        %s298 = smul.addr %s297, 4
        %s299 = smul.addr %s298, 4
        %s300 = scalar_lea.vmem %s4, %s299
        %p302 = scmp.eq.s32.totalorder %s20, 0
        // Predicated region
        $region78: #{_lambda_.7} parent=72 // pred_check
          %p303 = pneg %p302
        $region79: #{_lambda_.7} parent=72 // pred_check_branch
          %305 = sbr.rel (%p303) target = $region81
        $region80: #{_lambda_.7} parent=72 // pred_region
          %306 = vst [vmem:[#allocation2] sm:$0xff] 0.0
          %307 = vst [vmem:[#allocation2 + $0x8] sm:$0xff] 0.0
          %308 = vst [vmem:[#allocation2 + $0x10] sm:$0xff] 0.0
          %309 = vst [vmem:[#allocation2 + $0x18] sm:$0xff] 0.0
        $region81: #{_lambda_.7} parent=72 // pred_fallthru
          _
        %v310 = vld [vmem:[#allocation2] sm:$0xff]
        %v311 = vld [vmem:[#allocation2 + $0x8] sm:$0xff]
        %v312 = vld [vmem:[#allocation2 + $0x10] sm:$0xff]
        %v313 = vld [vmem:[#allocation2 + $0x18] sm:$0xff]
        %v314 = vld [vmem:[%s254] sm:$0xf]
        %v315 = vld [vmem:[%s254 + $0x4] sm:$0xf]
        %v316 = vld [vmem:[%s254 + $0x8] sm:$0xf]
        %v317 = vld [vmem:[%s254 + $0xc] sm:$0xf]
        %v318 = vld [vmem:[%s294] sm:$0xf]
        %v319 = vld [vmem:[%s294 + $0x4] sm:$0xf]
        %v320 = vld [vmem:[%s294 + $0x8] sm:$0xf]
        %v321 = vld [vmem:[%s294 + $0xc] sm:$0xf]
        %v322 = vld [vmem:[%s294 + $0x10] sm:$0xf]
        %v323 = vld [vmem:[%s294 + $0x14] sm:$0xf]
        %v324 = vld [vmem:[%s294 + $0x18] sm:$0xf]
        %v325 = vld [vmem:[%s294 + $0x1c] sm:$0xf]
        %v326 = vld [vmem:[%s294 + $0x20] sm:$0xf]
        %v327 = vld [vmem:[%s294 + $0x24] sm:$0xf]
        %v328 = vld [vmem:[%s294 + $0x28] sm:$0xf]
        %v329 = vld [vmem:[%s294 + $0x2c] sm:$0xf]
        %v330 = vld [vmem:[%s294 + $0x30] sm:$0xf]
        %v331 = vld [vmem:[%s294 + $0x34] sm:$0xf]
        %v332 = vld [vmem:[%s294 + $0x38] sm:$0xf]
        %v333 = vld [vmem:[%s294 + $0x3c] sm:$0xf]
        %v338 = vunpack.c.l.b16 %v314
        %v339 = vunpack.c.l.b16 %v315
        %v340 = vunpack.c.l.b16 %v316
        %v341 = vunpack.c.l.b16 %v317
        %v342 = vpack.c.b16 %v339, %v338
        %v343 = vpack.c.b16 %v341, %v340
        %v362 = vunpack.c.l.b16 %v318
        %v363 = vunpack.c.l.b16 %v319
        %v364 = vunpack.c.l.b16 %v320
        %v365 = vunpack.c.l.b16 %v321
        %v366 = vunpack.c.l.b16 %v322
        %v367 = vunpack.c.l.b16 %v323
        %v368 = vunpack.c.l.b16 %v324
        %v369 = vunpack.c.l.b16 %v325
        %v370 = vunpack.c.l.b16 %v326
        %v371 = vunpack.c.l.b16 %v327
        %v372 = vunpack.c.l.b16 %v328
        %v373 = vunpack.c.l.b16 %v329
        %v374 = vunpack.c.l.b16 %v330
        %v375 = vunpack.c.l.b16 %v331
        %v376 = vunpack.c.l.b16 %v332
        %v377 = vunpack.c.l.b16 %v333
        %v378 = vpack.c.b16 %v363, %v362
        %v379 = vpack.c.b16 %v365, %v364
        %v380 = vpack.c.b16 %v367, %v366
        %v381 = vpack.c.b16 %v369, %v368
        %v382 = vpack.c.b16 %v371, %v370
        %v383 = vpack.c.b16 %v373, %v372
        %v384 = vpack.c.b16 %v375, %v374
        %v385 = vpack.c.b16 %v377, %v376
        %394 = vmatprep.subr.bf16.mxu0 0
        %395 = vmatpush1.bf16.msra.mxu0 %v385
        %396 = vmatprep.subr.bf16.mxu0 0
        %397 = vmatpush1.bf16.msra.mxu0 %v384
        %398 = vmatprep.subr.bf16.mxu0 0
        %399 = vmatpush1.bf16.msra.mxu0 %v383
        %400 = vmatprep.subr.bf16.mxu0 0
        %401 = vmatpush1.bf16.msra.mxu0 %v382
        %402 = vmatprep.subr.bf16.mxu0 0
        %403 = vmatpush1.bf16.msra.mxu0 %v381
        %404 = vmatprep.subr.bf16.mxu0 0
        %405 = vmatpush1.bf16.msra.mxu0 %v380
        %406 = vmatprep.subr.bf16.mxu0 0
        %407 = vmatpush1.bf16.msra.mxu0 %v379
        %408 = vmatprep.subr.bf16.mxu0 0
        %409 = vmatpush1.bf16.msra.mxu0 %v378
        %410 = vmatprep.subr.bf16.mxu0 0
        %411 = vmatpush2.bf16.msra.mxu0 0
        %412 = vmatprep.subr.bf16.mxu0 0
        %413 = vmatpush2.bf16.msra.mxu0 0
        %414 = vmatprep.subr.bf16.mxu0 0
        %415 = vmatpush2.bf16.msra.mxu0 0
        %416 = vmatprep.subr.bf16.mxu0 0
        %417 = vmatpush2.bf16.msra.mxu0 0
        %418 = vmatprep.subr.bf16.mxu0 0
        %419 = vmatpush2.bf16.msra.mxu0 0
        %420 = vmatprep.subr.bf16.mxu0 0
        %421 = vmatpush2.bf16.msra.mxu0 0
        %422 = vmatprep.subr.bf16.mxu0 0
        %423 = vmatpush2.bf16.msra.mxu0 0
        %424 = vmatprep.subr.bf16.mxu0 0
        %425 = vmatpush2.bf16.msra.mxu0 0
        %426 = vmatprep.mubr.bf16.mxu0 0
        %427 = vmatmul.mubr.bf16.gmra.mxu0 %v342
        %v428 = vpop.f32.mrf.mxu0
        %v429 = vadd.f32 0.0, %v428
        %v430 = vpop.f32.mrf.mxu0
        %v431 = vpop.f32.mrf.mxu0
        %v432 = vadd.f32 0.0, %v431
        %v433 = vpop.f32.mrf.mxu0
        %434 = vmatprep.mubr.bf16.mxu0 0
        %435 = vmatmul.mubr.bf16.gmra.mxu0 %v343
        %v436 = vpop.f32.mrf.mxu0
        %v437 = vadd.f32 0.0, %v436
        %v438 = vpop.f32.mrf.mxu0
        %v439 = vpop.f32.mrf.mxu0
        %v440 = vadd.f32 0.0, %v439
        %v441 = vpop.f32.mrf.mxu0
        %442 = vdwg.mxu0
        %v443 = vadd.f32 %v310, %v429
        %v444 = vadd.f32 %v311, %v432
        %v445 = vadd.f32 %v312, %v437
        %v446 = vadd.f32 %v313, %v440
        %447 = vst [vmem:[#allocation2] sm:$0xff] %v443
        %448 = vst [vmem:[#allocation2 + $0x8] sm:$0xff] %v444
        %449 = vst [vmem:[#allocation2 + $0x10] sm:$0xff] %v445
        %450 = vst [vmem:[#allocation2 + $0x18] sm:$0xff] %v446
        %p451 = scmp.eq.s32.totalorder %s20, 1
        // Predicated region
        $region82: #{_lambda_.7} parent=72 // pred_check
          %p452 = pneg %p451
        $region83: #{_lambda_.7} parent=72 // pred_check_branch
          %454 = sbr.rel (%p452) target = $region85
        $region84: #{_lambda_.7} parent=72 // pred_region
          %v455 = vld [vmem:[#allocation2] sm:$0xff]
          %v456 = vld [vmem:[#allocation2 + $0x8] sm:$0xff]
          %v457 = vld [vmem:[#allocation2 + $0x10] sm:$0xff]
          %v458 = vld [vmem:[#allocation2 + $0x18] sm:$0xff]
          %v459 = vlaneseq
          %v460 = vand.u32 %v459, 127
          %vm461 = vcmp.lt.s32.totalorder %v460, 25
          %462 = vadd.xlane.f32.xlu0 %v455
          %v463 = vpop.xlane.xlu0 %462
          %464 = vadd.xlane.f32.xlu0 %v456
          %v465 = vpop.xlane.xlu0 %464
          %466 = vadd.xlane.f32.xlu0 %v457
          %v467 = vpop.xlane.xlu0 %466
          %468 = vadd.xlane.f32.xlu0 %v458
          %v469 = vpop.xlane.xlu0 %468
          %v470 = vmul.f32 %v463, 0.04
          %v471 = vmul.f32 %v465, 0.04
          %v472 = vmul.f32 %v467, 0.04
          %v473 = vmul.f32 %v469, 0.04
          %v474 = vsub.f32 %v455, %v470
          %v475 = vsub.f32 %v456, %v471
          %v476 = vsub.f32 %v457, %v472
          %v477 = vsub.f32 %v458, %v473
          %v478 = vsel %vm461, %v474, 0.0
          %v479 = vsel %vm461, %v475, 0.0
          %v480 = vsel %vm461, %v476, 0.0
          %v481 = vsel %vm461, %v477, 0.0
          %v482 = vmul.f32 %v478, %v478
          %v483 = vmul.f32 %v479, %v479
          %v484 = vmul.f32 %v480, %v480
          %v485 = vmul.f32 %v481, %v481
          %486 = vadd.xlane.f32.xlu0 %v482
          %v487 = vpop.xlane.xlu0 %486
          %488 = vadd.xlane.f32.xlu0 %v483
          %v489 = vpop.xlane.xlu0 %488
          %490 = vadd.xlane.f32.xlu0 %v484
          %v491 = vpop.xlane.xlu0 %490
          %492 = vadd.xlane.f32.xlu0 %v485
          %v493 = vpop.xlane.xlu0 %492
          %v494 = vmul.f32 %v487, 0.04
          %v495 = vmul.f32 %v489, 0.04
          %v496 = vmul.f32 %v491, 0.04
          %v497 = vmul.f32 %v493, 0.04
          %v498 = vadd.f32 %v494, 1e-05
          %v499 = vadd.f32 %v495, 1e-05
          %v500 = vadd.f32 %v496, 1e-05
          %v501 = vadd.f32 %v497, 1e-05
          %v502 = vrsqrt.pop %v498
          %v503 = vrsqrt.pop %v499
          %v504 = vrsqrt.pop %v500
          %v505 = vrsqrt.pop %v501
          %v506 = vmul.f32 %v478, %v502
          %v507 = vmul.f32 %v479, %v503
          %v508 = vmul.f32 %v480, %v504
          %v509 = vmul.f32 %v481, %v505
          %v510 = vld [vmem:[%s2] sm:$0xff]
          %v511 = vld [vmem:[%s2 + $0x8] sm:$0xff]
          %v512 = vld [vmem:[%s2 + $0x10] sm:$0xff]
          %v513 = vld [vmem:[%s2 + $0x18] sm:$0xff]
          %515 = vset.pattern.permute.xlu0 0
          %516 = vperm.xlu0 %515, %v510
          %v517 = vpop.permute.xlu0 %516
          %520 = vset.pattern.permute.xlu0 0
          %521 = vperm.xlu0 %520, %v511
          %v522 = vpop.permute.xlu0 %521
          %525 = vset.pattern.permute.xlu0 0
          %526 = vperm.xlu0 %525, %v512
          %v527 = vpop.permute.xlu0 %526
          %530 = vset.pattern.permute.xlu0 0
          %531 = vperm.xlu0 %530, %v513
          %v532 = vpop.permute.xlu0 %531
          %v534 = vmul.f32 %v506, %v517
          %v535 = vmul.f32 %v507, %v522
          %v536 = vmul.f32 %v508, %v527
          %v537 = vmul.f32 %v509, %v532
          %v538 = vld [vmem:[%s3] sm:$0xff]
          %v539 = vld [vmem:[%s3 + $0x8] sm:$0xff]
          %v540 = vld [vmem:[%s3 + $0x10] sm:$0xff]
          %v541 = vld [vmem:[%s3 + $0x18] sm:$0xff]
          %543 = vset.pattern.permute.xlu0 0
          %544 = vperm.xlu0 %543, %v538
          %v545 = vpop.permute.xlu0 %544
          %548 = vset.pattern.permute.xlu0 0
          %549 = vperm.xlu0 %548, %v539
          %v550 = vpop.permute.xlu0 %549
          %553 = vset.pattern.permute.xlu0 0
          %554 = vperm.xlu0 %553, %v540
          %v555 = vpop.permute.xlu0 %554
          %558 = vset.pattern.permute.xlu0 0
          %559 = vperm.xlu0 %558, %v541
          %v560 = vpop.permute.xlu0 %559
          %v562 = vadd.f32 %v534, %v545
          %v563 = vadd.f32 %v535, %v550
          %v564 = vadd.f32 %v536, %v555
          %v565 = vadd.f32 %v537, %v560
          %v566 = vmul.f32 %v562, 0.2
          %v567 = vmul.f32 %v563, 0.2
          %v568 = vmul.f32 %v564, 0.2
          %v569 = vmul.f32 %v565, 0.2
          %v570 = vmax.f32 %v562, %v566
          %v571 = vmax.f32 %v563, %v567
          %v572 = vmax.f32 %v564, %v568
          %v573 = vmax.f32 %v565, %v569
          %v574 = vsel %vm461, %v570, 0.0
          %v575 = vsel %vm461, %v571, 0.0
          %v576 = vsel %vm461, %v572, 0.0
          %v577 = vsel %vm461, %v573, 0.0
          %v578 = vpack.c.bf16 %v575, %v574
          %v579 = vpack.c.bf16 %v577, %v576
          %v582 = vunpack.c.l.b16 %v578
          %v583 = vunpack.c.h.b16 %v578
          %v584 = vunpack.c.l.b16 %v579
          %v585 = vunpack.c.h.b16 %v579
          %v586 = vpack.c.b16 %v582, %v582
          %v587 = vpack.c.b16 %v583, %v583
          %v588 = vpack.c.b16 %v584, %v584
          %v589 = vpack.c.b16 %v585, %v585
          %594 = vst [vmem:[%s300] sm:$0xf] %v586
          %595 = vst [vmem:[%s300 + $0x4] sm:$0xf] %v587
          %596 = vst [vmem:[%s300 + $0x8] sm:$0xf] %v588
          %597 = vst [vmem:[%s300 + $0xc] sm:$0xf] %v589
        $region85: #{_lambda_.7} parent=72 // pred_fallthru
          _
        %p598 = scmp.lt.s32.totalorder %s19, 1
        %s599 = scalar_select %p598, %s19, 1
        %s600 = smul.addr %s599, 4
        %s601 = smul.addr %s600, 4
        %s602 = scalar_lea.vmem %s4, %s601
        // Predicated region
        $region86: #{_lambda_.7} parent=72 // pred_check
          %p603 = pneg %p141
        $region87: #{_lambda_.7} parent=72 // pred_check_branch
          %605 = sbr.rel (%p603) target = $region89
        $region88: #{_lambda_.7} parent=72 // pred_region
          _
        $region89: #{_lambda_.7} parent=72 // pred_fallthru
          _
      $region73: #{_lambda_.7} parent=5 // pred_fallthru
        _
      %p606 = scmp.le.s32.totalorder 2, %s10
      // Predicated region
      $region90: #{_lambda_.7} parent=5 // pred_check
        %p607 = pneg %p606
      $region91: #{_lambda_.7} parent=5 // pred_check_branch
        %609 = sbr.rel (%p607) target = $region93
      $region92: #{_lambda_.7} parent=5 // pred_region
        %s610 = ssub.s32 %s10, 2
        // Predicated region
        $region94: #{_lambda_.7} parent=92 // pred_check
          %p611 = pneg %p147
        $region95: #{_lambda_.7} parent=92 // pred_check_branch
          %613 = sbr.rel (%p611) target = $region97
        $region96: #{_lambda_.7} parent=92 // pred_region
          %p614 = scmp.lt.s32.totalorder %s21, 1
          %s615 = scalar_select %p614, %s21, 1
          %s616 = smul.addr %s615, 4
          %s617 = smul.addr %s616, 4
          %s618 = scalar_lea.vmem %s4, %s617
        $region97: #{_lambda_.7} parent=92 // pred_fallthru
          _
      $region93: #{_lambda_.7} parent=5 // pred_fallthru
        _
    $region6: #{_lambda_.7} parent=1 // loop_footer
      %s14 = sadd.s32 1, %s10
    $region7: #{_lambda_.7} parent=1 // loop_footer_branch
      %9 = sbr.rel target = $region3
    $region8: #{_lambda_.7} parent=1 // loop_exit
      _

// kernel: _lambda_.8
$region0: #{_lambda_.8}
  #allocation0 [shape = 'u32[]', space=smem, size = 0x4, offset = 0x4, fixed_abs, tag = 'smem constant byte address 0x4 - core index']
  #allocation1 [shape = 'u32[144,128]{1,0:T(1,128)}', space=vmem, size = 0x12000, scoped, tag = 'internal scratch']
  #allocation2 [shape = 'f32[32,128]{1,0:T(8,128)}', space=vmem, size = 0x4000, scoped, tag = 'scratch operand']
  %s0 = inlined_call_operand.vmem [shape: bf16[2,512,128], index: 0, kind: input, shape index: {}]
  %s1 = inlined_call_operand.vmem [shape: bf16[32,512], index: 1, kind: input, shape index: {}]
  %s2 = inlined_call_operand.vmem [shape: f32[32,1], index: 2, kind: input, shape index: {}]
  %s3 = inlined_call_operand.vmem [shape: f32[32,1], index: 3, kind: input, shape index: {}]
  %s4 = inlined_call_operand.vmem [shape: bf16[2,32,128], index: 4, kind: output, shape index: {}]
  %s5 = sld [smem:[#allocation0]]
  $region98: #{_lambda_.8} parent=0
    _
  %s7 = ssub.s32 1, %s5
  %s8 = scalar_select 0, %s7, %s5
  $region1: #{_lambda_.8} parent=0
    #allocation3 [shape = 'u8[16384]{0}', space=vmem, size = 0x4000, scoped, tag = 'input window, operand 1']
    loop: start=0, step=1, limit=10
    $region2: #{_lambda_.8} parent=1 // loop_pre_header
      _
    $region3: #{_lambda_.8} parent=1 // loop_header
      %s10 = sphi 0, %s14
      %p11 = scmp.ge.s32.totalorder %s10, 10
      %s17 = sphi 0, %s29
      %s18 = sphi 0, %s25
      %s19 = sphi 0, %s17
      %s20 = sphi 0, %s18
      %s21 = sphi 0, %s19
      %s22 = sphi 0, %s20
      %s34 = sphi 0, %s36
      %s37 = sphi 0, %s34
      %s38 = sphi 0, %s37
      %s54 = sphi 0, %s38
      %s60 = sphi 0, %s62
      %s63 = sphi 0, %s60
      %s64 = sphi 0, %s63
      %s80 = sphi 0, %s64
      %s84 = sphi 0, %s84
      %s86 = sphi 0, %s84
      %s87 = sphi 0, %s86
      %s101 = sphi 0, %s87
      %s105 = sphi 0, %s105
      %s107 = sphi 0, %s105
      %s108 = sphi 0, %s107
      %s122 = sphi 0, %s108
      %s128 = sphi 0, %s130
      %s131 = sphi 0, %s128
      %s132 = sphi 0, %s131
      %s148 = sphi 0, %s132
    $region4: #{_lambda_.8} parent=1 // loop_header_branch
      %13 = sbr.rel (%p11) target = $region8
    $region5: #{_lambda_.8} parent=1 // loop_body
      %s15 = ssub.s32 %s10, 1
      %s16 = ssub.s32 %s10, 2
      %s23 = sadd.s32 1, %s18
      %p24 = scmp.ge.s32.totalorder %s23, 4
      %s25 = scalar_select %p24, 0, %s23
      %s26 = sadd.s32 1, %s17
      %s27 = scalar_select %p24, %s26, %s17
      %p28 = scmp.ge.s32.totalorder %s27, 2
      %s29 = scalar_select %p28, 0, %s27
      %s30 = ssub.s32 %s17, %s29
      %s31 = ssub.s32 %s18, %s25
      %s32 = sor.u32 %s30, %s31
      %p33 = scmp.eq.s32.totalorder %s32, 0
      %s35 = sadd.s32 %s34, 1
      %s36 = scalar_select %p33, %s34, %s35
      %p39 = pneg %p33
      %p40 = scmp.eq.s32.totalorder %s10, 7
      %p41 = por %p39, %p40
      %p42 = scmp.ne.s32.totalorder %s34, %s37
      %p43 = scmp.eq.s32.totalorder %s10, 0
      %p44 = por %p42, %p43
      %p45 = scmp.ne.s32.totalorder %s34, %s37
      %p46 = scmp.eq.s32.totalorder %s15, 7
      %p47 = por %p45, %p46
      %p48 = scmp.ne.s32.totalorder %s37, %s38
      %p49 = scmp.eq.s32.totalorder %s15, 0
      %p50 = por %p48, %p49
      %p51 = scmp.ne.s32.totalorder %s37, %s38
      %p52 = scmp.eq.s32.totalorder %s16, 7
      %p53 = por %p51, %p52
      %p55 = scmp.ne.s32.totalorder %s38, %s54
      %p56 = scmp.eq.s32.totalorder %s16, 0
      %p57 = por %p55, %p56
      %s58 = ssub.s32 %s18, %s25
      %p59 = scmp.eq.s32.totalorder %s58, 0
      %s61 = sadd.s32 %s60, 1
      %s62 = scalar_select %p59, %s60, %s61
      %p65 = pneg %p59
      %p66 = scmp.eq.s32.totalorder %s10, 7
      %p67 = por %p65, %p66
      %p68 = scmp.ne.s32.totalorder %s60, %s63
      %p69 = scmp.eq.s32.totalorder %s10, 0
      %p70 = por %p68, %p69
      %p71 = scmp.ne.s32.totalorder %s60, %s63
      %p72 = scmp.eq.s32.totalorder %s15, 7
      %p73 = por %p71, %p72
      %p74 = scmp.ne.s32.totalorder %s63, %s64
      %p75 = scmp.eq.s32.totalorder %s15, 0
      %p76 = por %p74, %p75
      %p77 = scmp.ne.s32.totalorder %s63, %s64
      %p78 = scmp.eq.s32.totalorder %s16, 7
      %p79 = por %p77, %p78
      %p81 = scmp.ne.s32.totalorder %s64, %s80
      %p82 = scmp.eq.s32.totalorder %s16, 0
      %p83 = por %p81, %p82
      %s85 = sadd.s32 %s84, 1
      %p88 = scmp.eq.s32.totalorder %s10, 7
      %p89 = scmp.ne.s32.totalorder %s84, %s86
      %p90 = scmp.eq.s32.totalorder %s10, 0
      %p91 = por %p89, %p90
      %p92 = scmp.ne.s32.totalorder %s84, %s86
      %p93 = scmp.eq.s32.totalorder %s15, 7
      %p94 = por %p92, %p93
      %p95 = scmp.ne.s32.totalorder %s86, %s87
      %p96 = scmp.eq.s32.totalorder %s15, 0
      %p97 = por %p95, %p96
      %p98 = scmp.ne.s32.totalorder %s86, %s87
      %p99 = scmp.eq.s32.totalorder %s16, 7
      %p100 = por %p98, %p99
      %p102 = scmp.ne.s32.totalorder %s87, %s101
      %p103 = scmp.eq.s32.totalorder %s16, 0
      %p104 = por %p102, %p103
      %s106 = sadd.s32 %s105, 1
      %p109 = scmp.eq.s32.totalorder %s10, 7
      %p110 = scmp.ne.s32.totalorder %s105, %s107
      %p111 = scmp.eq.s32.totalorder %s10, 0
      %p112 = por %p110, %p111
      %p113 = scmp.ne.s32.totalorder %s105, %s107
      %p114 = scmp.eq.s32.totalorder %s15, 7
      %p115 = por %p113, %p114
      %p116 = scmp.ne.s32.totalorder %s107, %s108
      %p117 = scmp.eq.s32.totalorder %s15, 0
      %p118 = por %p116, %p117
      %p119 = scmp.ne.s32.totalorder %s107, %s108
      %p120 = scmp.eq.s32.totalorder %s16, 7
      %p121 = por %p119, %p120
      %p123 = scmp.ne.s32.totalorder %s108, %s122
      %p124 = scmp.eq.s32.totalorder %s16, 0
      %p125 = por %p123, %p124
      %s126 = ssub.s32 %s17, %s29
      %p127 = scmp.eq.s32.totalorder %s126, 0
      %s129 = sadd.s32 %s128, 1
      %s130 = scalar_select %p127, %s128, %s129
      %p133 = pneg %p127
      %p134 = scmp.eq.s32.totalorder %s10, 7
      %p135 = por %p133, %p134
      %p136 = scmp.ne.s32.totalorder %s128, %s131
      %p137 = scmp.eq.s32.totalorder %s10, 0
      %p138 = por %p136, %p137
      %p139 = scmp.ne.s32.totalorder %s128, %s131
      %p140 = scmp.eq.s32.totalorder %s15, 7
      %p141 = por %p139, %p140
      %p142 = scmp.ne.s32.totalorder %s131, %s132
      %p143 = scmp.eq.s32.totalorder %s15, 0
      %p144 = por %p142, %p143
      %p145 = scmp.ne.s32.totalorder %s131, %s132
      %p146 = scmp.eq.s32.totalorder %s16, 7
      %p147 = por %p145, %p146
      %p149 = scmp.ne.s32.totalorder %s132, %s148
      %p150 = scmp.eq.s32.totalorder %s16, 0
      %p151 = por %p149, %p150
      %p152 = scmp.le.s32.totalorder 1, %s10
      %p153 = scmp.lt.s32.totalorder %s10, 9
      %p154 = pnand %p152, %p153
      %p155 = pneg %p154
      // Predicated region
      $region9: #{_lambda_.8} parent=5 // pred_check
        _
      $region10: #{_lambda_.8} parent=5 // pred_check_branch
        %157 = sbr.rel (%p154) target = $region12
      $region11: #{_lambda_.8} parent=5 // pred_region
        %s158 = ssub.s32 %s10, 1
        // Predicated region
        $region13: #{_lambda_.8} parent=11 // pred_check
          %p159 = pneg %p97
        $region14: #{_lambda_.8} parent=11 // pred_check_branch
          %161 = sbr.rel (%p159) target = $region16
        $region15: #{_lambda_.8} parent=11 // pred_region
          _
        $region16: #{_lambda_.8} parent=11 // pred_fallthru
          _
        // Predicated region
        $region17: #{_lambda_.8} parent=11 // pred_check
          %p162 = pneg %p118
        $region18: #{_lambda_.8} parent=11 // pred_check_branch
          %164 = sbr.rel (%p162) target = $region20
        $region19: #{_lambda_.8} parent=11 // pred_region
          _
        $region20: #{_lambda_.8} parent=11 // pred_fallthru
          _
      $region12: #{_lambda_.8} parent=5 // pred_fallthru
        _
      %p165 = scmp.lt.s32.totalorder %s10, 8
      // Predicated region
      $region21: #{_lambda_.8} parent=5 // pred_check
        %p166 = pneg %p165
      $region22: #{_lambda_.8} parent=5 // pred_check_branch
        %168 = sbr.rel (%p166) target = $region24
      $region23: #{_lambda_.8} parent=5 // pred_region
        // Predicated region
        $region25: #{_lambda_.8} parent=23 // pred_check
          %p169 = pneg %p44
        $region26: #{_lambda_.8} parent=23 // pred_check_branch
          %171 = sbr.rel (%p169) target = $region28
        $region27: #{_lambda_.8} parent=23 // pred_region
          %s172 = smul.u32 16, %s18
          %p173 = scmp.lt.s32.totalorder %s17, 1
          %s174 = scalar_select %p173, %s17, 1
          %p175 = scmp.lt.s32.totalorder %s172, 63
          %s176 = scalar_select %p175, %s172, 63
          %s177 = smul.addr %s174, 64
          %s178 = sadd.s32 %s176, %s177
          %s179 = smul.addr %s178, 4
          %s180 = scalar_lea.vmem %s0, %s179
          %s181 = smul.u32 16, %s18
        $region28: #{_lambda_.8} parent=23 // pred_fallthru
          _
        // Predicated region
        $region29: #{_lambda_.8} parent=23 // pred_check
          %p182 = pneg %p70
        $region30: #{_lambda_.8} parent=23 // pred_check_branch
          %184 = sbr.rel (%p182) target = $region32
        $region31: #{_lambda_.8} parent=23 // pred_region
          %s185 = sand.u32 %s60, 1
          %s186 = sand.u32 %s60, 1
          %s187 = smul.addr %s186, 16
          %s188 = scalar_lea.vmem [#allocation3], %s187
          %s189 = smul.addr %s18, 4
          %s190 = scalar_lea.vmem %s1, %s189
          // Predicated region
          $region33: #{_lambda_.8} parent=31 // pred_check
            _
          $region34: #{_lambda_.8} parent=31 // pred_check_branch
            %192 = sbr.rel (0) target = $region36
          $region35: #{_lambda_.8} parent=31 // pred_region
            // Predicated region
            $region37: #{_lambda_.8} parent=35 // pred_check
              _
            $region38: #{_lambda_.8} parent=35 // pred_check_branch
              %194 = sbr.rel target = $region40
            $region39: #{_lambda_.8} parent=35 // pred_region
              // Predicated region
              $region52: #{_lambda_.8} parent=39 // pred_check
                _
              $region53: #{_lambda_.8} parent=39 // pred_check_branch
                %216 = sbr.rel (0) target = $region55
              $region54: #{_lambda_.8} parent=39 // pred_region
                loop: start=0, step=1, limit=1
                $region56: #{_lambda_.8} parent=54 // loop_pre_header
                  _
                $region57: #{_lambda_.8} parent=54 // loop_header
                  %s218 = sphi 0, %s222
                  %p219 = scmp.ge.s32.totalorder %s218, 1
                  %s223 = sphi %s190, %s190
                  %s224 = sphi %s188, %s188
                $region58: #{_lambda_.8} parent=54 // loop_header_branch
                  %221 = sbr.rel (%p219) target = $region62
                $region59: #{_lambda_.8} parent=54 // loop_body
                  _
                $region60: #{_lambda_.8} parent=54 // loop_footer
                  %s222 = sadd.s32 1, %s218
                $region61: #{_lambda_.8} parent=54 // loop_footer_branch
                  %217 = sbr.rel target = $region57
                $region62: #{_lambda_.8} parent=54 // loop_exit
                  _
                %s226 = ssub.s32 16, 1
                loop: start=0, step=1, limit=1
                $region63: #{_lambda_.8} parent=54 // loop_pre_header
                  _
                $region64: #{_lambda_.8} parent=54 // loop_header
                  %s228 = sphi 0, %s232
                  %p229 = scmp.ge.s32.totalorder %s228, 1
                  %s233 = sphi %s190, %s190
                  %s234 = sphi %s188, %s188
                $region65: #{_lambda_.8} parent=54 // loop_header_branch
                  %231 = sbr.rel (%p229) target = $region69
                $region66: #{_lambda_.8} parent=54 // loop_body
                  %v235 = vld [vmem:[%s233] sm:%s226]
                  %236 = vst [vmem:[%s234] sm:%s226] %v235
                  %v237 = vld [vmem:[%s233 + $0x10] sm:%s226]
                  %238 = vst [vmem:[%s234 + $0x4] sm:%s226] %v237
                  %v239 = vld [vmem:[%s233 + $0x20] sm:%s226]
                  %240 = vst [vmem:[%s234 + $0x8] sm:%s226] %v239
                  %v241 = vld [vmem:[%s233 + $0x30] sm:%s226]
                  %242 = vst [vmem:[%s234 + $0xc] sm:%s226] %v241
                $region67: #{_lambda_.8} parent=54 // loop_footer
                  %s232 = sadd.s32 1, %s228
                $region68: #{_lambda_.8} parent=54 // loop_footer_branch
                  %227 = sbr.rel target = $region64
                $region69: #{_lambda_.8} parent=54 // loop_exit
                  _
              $region55: #{_lambda_.8} parent=39 // pred_fallthru
                _
            $region40: #{_lambda_.8} parent=35 // pred_fallthru
              _
            // Predicated region
            $region41: #{_lambda_.8} parent=35 // pred_check
              _
            $region42: #{_lambda_.8} parent=35 // pred_check_branch
              %196 = sbr.rel (0) target = $region44
            $region43: #{_lambda_.8} parent=35 // pred_region
              %s198 = ssub.s32 16, 1
              loop: start=0, step=1, limit=1
              $region45: #{_lambda_.8} parent=43 // loop_pre_header
                _
              $region46: #{_lambda_.8} parent=43 // loop_header
                %s200 = sphi 0, %s204
                %p201 = scmp.ge.s32.totalorder %s200, 1
                %s205 = sphi %s190, %s190
                %s206 = sphi %s188, %s188
              $region47: #{_lambda_.8} parent=43 // loop_header_branch
                %203 = sbr.rel (%p201) target = $region51
              $region48: #{_lambda_.8} parent=43 // loop_body
                %v207 = vld [vmem:[%s205] sm:%s198]
                %208 = vst [vmem:[%s206] sm:%s198] %v207
                %v209 = vld [vmem:[%s205 + $0x10] sm:%s198]
                %210 = vst [vmem:[%s206 + $0x4] sm:%s198] %v209
                %v211 = vld [vmem:[%s205 + $0x20] sm:%s198]
                %212 = vst [vmem:[%s206 + $0x8] sm:%s198] %v211
                %v213 = vld [vmem:[%s205 + $0x30] sm:%s198]
                %214 = vst [vmem:[%s206 + $0xc] sm:%s198] %v213
              $region49: #{_lambda_.8} parent=43 // loop_footer
                %s204 = sadd.s32 1, %s200
              $region50: #{_lambda_.8} parent=43 // loop_footer_branch
                %199 = sbr.rel target = $region46
              $region51: #{_lambda_.8} parent=43 // loop_exit
                _
            $region44: #{_lambda_.8} parent=35 // pred_fallthru
              _
          $region36: #{_lambda_.8} parent=31 // pred_fallthru
            _
          %243 = vnop
        $region32: #{_lambda_.8} parent=23 // pred_fallthru
          _
      $region24: #{_lambda_.8} parent=5 // pred_fallthru
        _
      %p244 = scmp.le.s32.totalorder 1, %s10
      %p245 = scmp.lt.s32.totalorder %s10, 9
      %p246 = pnand %p244, %p245
      %p247 = pneg %p246
      // Predicated region
      $region70: #{_lambda_.8} parent=5 // pred_check
        _
      $region71: #{_lambda_.8} parent=5 // pred_check_branch
        %249 = sbr.rel (%p246) target = $region73
      $region72: #{_lambda_.8} parent=5 // pred_region
        %s250 = ssub.s32 %s10, 1
        %s251 = sand.u32 %s63, 1
        %s252 = sand.u32 %s63, 1
        %s253 = smul.addr %s252, 16
        %s254 = scalar_lea.vmem [#allocation3], %s253
        // Predicated region
        $region74: #{_lambda_.8} parent=72 // pred_check
          %p255 = pneg %p76
        $region75: #{_lambda_.8} parent=72 // pred_check_branch
          %257 = sbr.rel (%p255) target = $region77
        $region76: #{_lambda_.8} parent=72 // pred_region
          _
        $region77: #{_lambda_.8} parent=72 // pred_fallthru
          _
        %s258 = smul.u32 16, %s20
        %p259 = scmp.lt.s32.totalorder %s19, 1
        %s260 = scalar_select %p259, %s19, 1
        %p261 = scmp.lt.s32.totalorder %s258, 63
        %s262 = scalar_select %p261, %s258, 63
        %s263 = smul.addr %s260, 64
        %s264 = sadd.s32 %s262, %s263
        %s265 = smul.addr %s264, 4
        %s266 = scalar_lea.vmem %s0, %s265
        %p267 = pneg %p50
        %p268 = pneg %p47
        %s269 = sand.u32 %s63, 1
        %s270 = sand.u32 %s63, 1
        %s271 = smul.addr %s270, 16
        %s272 = scalar_lea.vmem [#allocation3], %s271
        %p273 = pneg %p76
        %p274 = pneg %p73
        %p275 = pneg %p97
        %p276 = pneg %p94
        %p277 = pneg %p118
        %p278 = pneg %p115
        %p279 = pneg %p144
        %p280 = pneg %p141
        %p281 = scmp.lt.s32.totalorder %s19, 1
        %s282 = scalar_select %p281, %s19, 1
        %s283 = smul.addr %s282, 4
        %s284 = smul.addr %s283, 4
        %s285 = scalar_lea.vmem %s4, %s284
        %s286 = smul.u32 16, %s20
        %p287 = scmp.lt.s32.totalorder %s19, 1
        %s288 = scalar_select %p287, %s19, 1
        %p289 = scmp.lt.s32.totalorder %s286, 63
        %s290 = scalar_select %p289, %s286, 63
        %s291 = smul.addr %s288, 64
        %s292 = sadd.s32 %s290, %s291
        %s293 = smul.addr %s292, 4
        %s294 = scalar_lea.vmem %s0, %s293
        %s295 = smul.u32 16, %s20
        %p296 = scmp.lt.s32.totalorder %s19, 1
        %s297 = scalar_select %p296, %s19, 1
        %s298 = smul.addr %s297, 4
        %s299 = smul.addr %s298, 4
        %s300 = scalar_lea.vmem %s4, %s299
        %p302 = scmp.eq.s32.totalorder %s20, 0
        // Predicated region
        $region78: #{_lambda_.8} parent=72 // pred_check
          %p303 = pneg %p302
        $region79: #{_lambda_.8} parent=72 // pred_check_branch
          %305 = sbr.rel (%p303) target = $region81
        $region80: #{_lambda_.8} parent=72 // pred_region
          %306 = vst [vmem:[#allocation2] sm:$0xff] 0.0
          %307 = vst [vmem:[#allocation2 + $0x8] sm:$0xff] 0.0
          %308 = vst [vmem:[#allocation2 + $0x10] sm:$0xff] 0.0
          %309 = vst [vmem:[#allocation2 + $0x18] sm:$0xff] 0.0
        $region81: #{_lambda_.8} parent=72 // pred_fallthru
          _
        %v310 = vld [vmem:[#allocation2] sm:$0xff]
        %v311 = vld [vmem:[#allocation2 + $0x8] sm:$0xff]
        %v312 = vld [vmem:[#allocation2 + $0x10] sm:$0xff]
        %v313 = vld [vmem:[#allocation2 + $0x18] sm:$0xff]
        %v314 = vld [vmem:[%s254] sm:$0xf]
        %v315 = vld [vmem:[%s254 + $0x4] sm:$0xf]
        %v316 = vld [vmem:[%s254 + $0x8] sm:$0xf]
        %v317 = vld [vmem:[%s254 + $0xc] sm:$0xf]
        %v318 = vld [vmem:[%s294] sm:$0xf]
        %v319 = vld [vmem:[%s294 + $0x4] sm:$0xf]
        %v320 = vld [vmem:[%s294 + $0x8] sm:$0xf]
        %v321 = vld [vmem:[%s294 + $0xc] sm:$0xf]
        %v322 = vld [vmem:[%s294 + $0x10] sm:$0xf]
        %v323 = vld [vmem:[%s294 + $0x14] sm:$0xf]
        %v324 = vld [vmem:[%s294 + $0x18] sm:$0xf]
        %v325 = vld [vmem:[%s294 + $0x1c] sm:$0xf]
        %v326 = vld [vmem:[%s294 + $0x20] sm:$0xf]
        %v327 = vld [vmem:[%s294 + $0x24] sm:$0xf]
        %v328 = vld [vmem:[%s294 + $0x28] sm:$0xf]
        %v329 = vld [vmem:[%s294 + $0x2c] sm:$0xf]
        %v330 = vld [vmem:[%s294 + $0x30] sm:$0xf]
        %v331 = vld [vmem:[%s294 + $0x34] sm:$0xf]
        %v332 = vld [vmem:[%s294 + $0x38] sm:$0xf]
        %v333 = vld [vmem:[%s294 + $0x3c] sm:$0xf]
        %v338 = vunpack.c.l.b16 %v314
        %v339 = vunpack.c.l.b16 %v315
        %v340 = vunpack.c.l.b16 %v316
        %v341 = vunpack.c.l.b16 %v317
        %v342 = vpack.c.b16 %v339, %v338
        %v343 = vpack.c.b16 %v341, %v340
        %v362 = vunpack.c.l.b16 %v318
        %v363 = vunpack.c.l.b16 %v319
        %v364 = vunpack.c.l.b16 %v320
        %v365 = vunpack.c.l.b16 %v321
        %v366 = vunpack.c.l.b16 %v322
        %v367 = vunpack.c.l.b16 %v323
        %v368 = vunpack.c.l.b16 %v324
        %v369 = vunpack.c.l.b16 %v325
        %v370 = vunpack.c.l.b16 %v326
        %v371 = vunpack.c.l.b16 %v327
        %v372 = vunpack.c.l.b16 %v328
        %v373 = vunpack.c.l.b16 %v329
        %v374 = vunpack.c.l.b16 %v330
        %v375 = vunpack.c.l.b16 %v331
        %v376 = vunpack.c.l.b16 %v332
        %v377 = vunpack.c.l.b16 %v333
        %v378 = vpack.c.b16 %v363, %v362
        %v379 = vpack.c.b16 %v365, %v364
        %v380 = vpack.c.b16 %v367, %v366
        %v381 = vpack.c.b16 %v369, %v368
        %v382 = vpack.c.b16 %v371, %v370
        %v383 = vpack.c.b16 %v373, %v372
        %v384 = vpack.c.b16 %v375, %v374
        %v385 = vpack.c.b16 %v377, %v376
        %394 = vmatprep.subr.bf16.mxu0 0
        %395 = vmatpush1.bf16.msra.mxu0 %v385
        %396 = vmatprep.subr.bf16.mxu0 0
        %397 = vmatpush1.bf16.msra.mxu0 %v384
        %398 = vmatprep.subr.bf16.mxu0 0
        %399 = vmatpush1.bf16.msra.mxu0 %v383
        %400 = vmatprep.subr.bf16.mxu0 0
        %401 = vmatpush1.bf16.msra.mxu0 %v382
        %402 = vmatprep.subr.bf16.mxu0 0
        %403 = vmatpush1.bf16.msra.mxu0 %v381
        %404 = vmatprep.subr.bf16.mxu0 0
        %405 = vmatpush1.bf16.msra.mxu0 %v380
        %406 = vmatprep.subr.bf16.mxu0 0
        %407 = vmatpush1.bf16.msra.mxu0 %v379
        %408 = vmatprep.subr.bf16.mxu0 0
        %409 = vmatpush1.bf16.msra.mxu0 %v378
        %410 = vmatprep.subr.bf16.mxu0 0
        %411 = vmatpush2.bf16.msra.mxu0 0
        %412 = vmatprep.subr.bf16.mxu0 0
        %413 = vmatpush2.bf16.msra.mxu0 0
        %414 = vmatprep.subr.bf16.mxu0 0
        %415 = vmatpush2.bf16.msra.mxu0 0
        %416 = vmatprep.subr.bf16.mxu0 0
        %417 = vmatpush2.bf16.msra.mxu0 0
        %418 = vmatprep.subr.bf16.mxu0 0
        %419 = vmatpush2.bf16.msra.mxu0 0
        %420 = vmatprep.subr.bf16.mxu0 0
        %421 = vmatpush2.bf16.msra.mxu0 0
        %422 = vmatprep.subr.bf16.mxu0 0
        %423 = vmatpush2.bf16.msra.mxu0 0
        %424 = vmatprep.subr.bf16.mxu0 0
        %425 = vmatpush2.bf16.msra.mxu0 0
        %426 = vmatprep.mubr.bf16.mxu0 0
        %427 = vmatmul.mubr.bf16.gmra.mxu0 %v342
        %v428 = vpop.f32.mrf.mxu0
        %v429 = vadd.f32 0.0, %v428
        %v430 = vpop.f32.mrf.mxu0
        %v431 = vpop.f32.mrf.mxu0
        %v432 = vadd.f32 0.0, %v431
        %v433 = vpop.f32.mrf.mxu0
        %434 = vmatprep.mubr.bf16.mxu0 0
        %435 = vmatmul.mubr.bf16.gmra.mxu0 %v343
        %v436 = vpop.f32.mrf.mxu0
        %v437 = vadd.f32 0.0, %v436
        %v438 = vpop.f32.mrf.mxu0
        %v439 = vpop.f32.mrf.mxu0
        %v440 = vadd.f32 0.0, %v439
        %v441 = vpop.f32.mrf.mxu0
        %442 = vdwg.mxu0
        %v443 = vadd.f32 %v310, %v429
        %v444 = vadd.f32 %v311, %v432
        %v445 = vadd.f32 %v312, %v437
        %v446 = vadd.f32 %v313, %v440
        %447 = vst [vmem:[#allocation2] sm:$0xff] %v443
        %448 = vst [vmem:[#allocation2 + $0x8] sm:$0xff] %v444
        %449 = vst [vmem:[#allocation2 + $0x10] sm:$0xff] %v445
        %450 = vst [vmem:[#allocation2 + $0x18] sm:$0xff] %v446
        %p451 = scmp.eq.s32.totalorder %s20, 3
        // Predicated region
        $region82: #{_lambda_.8} parent=72 // pred_check
          %p452 = pneg %p451
        $region83: #{_lambda_.8} parent=72 // pred_check_branch
          %454 = sbr.rel (%p452) target = $region85
        $region84: #{_lambda_.8} parent=72 // pred_region
          %v455 = vld [vmem:[#allocation2] sm:$0xff]
          %v456 = vld [vmem:[#allocation2 + $0x8] sm:$0xff]
          %v457 = vld [vmem:[#allocation2 + $0x10] sm:$0xff]
          %v458 = vld [vmem:[#allocation2 + $0x18] sm:$0xff]
          %v459 = vlaneseq
          %v460 = vand.u32 %v459, 127
          %vm461 = vcmp.lt.s32.totalorder %v460, 4
          %462 = vadd.xlane.f32.xlu0 %v455
          %v463 = vpop.xlane.xlu0 %462
          %464 = vadd.xlane.f32.xlu0 %v456
          %v465 = vpop.xlane.xlu0 %464
          %466 = vadd.xlane.f32.xlu0 %v457
          %v467 = vpop.xlane.xlu0 %466
          %468 = vadd.xlane.f32.xlu0 %v458
          %v469 = vpop.xlane.xlu0 %468
          %v470 = vmul.f32 %v463, 0.25
          %v471 = vmul.f32 %v465, 0.25
          %v472 = vmul.f32 %v467, 0.25
          %v473 = vmul.f32 %v469, 0.25
          %v474 = vsub.f32 %v455, %v470
          %v475 = vsub.f32 %v456, %v471
          %v476 = vsub.f32 %v457, %v472
          %v477 = vsub.f32 %v458, %v473
          %v478 = vsel %vm461, %v474, 0.0
          %v479 = vsel %vm461, %v475, 0.0
          %v480 = vsel %vm461, %v476, 0.0
          %v481 = vsel %vm461, %v477, 0.0
          %v482 = vmul.f32 %v478, %v478
          %v483 = vmul.f32 %v479, %v479
          %v484 = vmul.f32 %v480, %v480
          %v485 = vmul.f32 %v481, %v481
          %486 = vadd.xlane.f32.xlu0 %v482
          %v487 = vpop.xlane.xlu0 %486
          %488 = vadd.xlane.f32.xlu0 %v483
          %v489 = vpop.xlane.xlu0 %488
          %490 = vadd.xlane.f32.xlu0 %v484
          %v491 = vpop.xlane.xlu0 %490
          %492 = vadd.xlane.f32.xlu0 %v485
          %v493 = vpop.xlane.xlu0 %492
          %v494 = vmul.f32 %v487, 0.25
          %v495 = vmul.f32 %v489, 0.25
          %v496 = vmul.f32 %v491, 0.25
          %v497 = vmul.f32 %v493, 0.25
          %v498 = vadd.f32 %v494, 1e-05
          %v499 = vadd.f32 %v495, 1e-05
          %v500 = vadd.f32 %v496, 1e-05
          %v501 = vadd.f32 %v497, 1e-05
          %v502 = vrsqrt.pop %v498
          %v503 = vrsqrt.pop %v499
          %v504 = vrsqrt.pop %v500
          %v505 = vrsqrt.pop %v501
          %v506 = vmul.f32 %v478, %v502
          %v507 = vmul.f32 %v479, %v503
          %v508 = vmul.f32 %v480, %v504
          %v509 = vmul.f32 %v481, %v505
          %v510 = vld [vmem:[%s2] sm:$0xff]
          %v511 = vld [vmem:[%s2 + $0x8] sm:$0xff]
          %v512 = vld [vmem:[%s2 + $0x10] sm:$0xff]
          %v513 = vld [vmem:[%s2 + $0x18] sm:$0xff]
          %515 = vset.pattern.permute.xlu0 0
          %516 = vperm.xlu0 %515, %v510
          %v517 = vpop.permute.xlu0 %516
          %520 = vset.pattern.permute.xlu0 0
          %521 = vperm.xlu0 %520, %v511
          %v522 = vpop.permute.xlu0 %521
          %525 = vset.pattern.permute.xlu0 0
          %526 = vperm.xlu0 %525, %v512
          %v527 = vpop.permute.xlu0 %526
          %530 = vset.pattern.permute.xlu0 0
          %531 = vperm.xlu0 %530, %v513
          %v532 = vpop.permute.xlu0 %531
          %v534 = vmul.f32 %v506, %v517
          %v535 = vmul.f32 %v507, %v522
          %v536 = vmul.f32 %v508, %v527
          %v537 = vmul.f32 %v509, %v532
          %v538 = vld [vmem:[%s3] sm:$0xff]
          %v539 = vld [vmem:[%s3 + $0x8] sm:$0xff]
          %v540 = vld [vmem:[%s3 + $0x10] sm:$0xff]
          %v541 = vld [vmem:[%s3 + $0x18] sm:$0xff]
          %543 = vset.pattern.permute.xlu0 0
          %544 = vperm.xlu0 %543, %v538
          %v545 = vpop.permute.xlu0 %544
          %548 = vset.pattern.permute.xlu0 0
          %549 = vperm.xlu0 %548, %v539
          %v550 = vpop.permute.xlu0 %549
          %553 = vset.pattern.permute.xlu0 0
          %554 = vperm.xlu0 %553, %v540
          %v555 = vpop.permute.xlu0 %554
          %558 = vset.pattern.permute.xlu0 0
          %559 = vperm.xlu0 %558, %v541
          %v560 = vpop.permute.xlu0 %559
          %v562 = vadd.f32 %v534, %v545
          %v563 = vadd.f32 %v535, %v550
          %v564 = vadd.f32 %v536, %v555
          %v565 = vadd.f32 %v537, %v560
          %v566 = vmul.f32 %v562, 0.2
          %v567 = vmul.f32 %v563, 0.2
          %v568 = vmul.f32 %v564, 0.2
          %v569 = vmul.f32 %v565, 0.2
          %v570 = vmax.f32 %v562, %v566
          %v571 = vmax.f32 %v563, %v567
          %v572 = vmax.f32 %v564, %v568
          %v573 = vmax.f32 %v565, %v569
          %v574 = vsel %vm461, %v570, 0.0
          %v575 = vsel %vm461, %v571, 0.0
          %v576 = vsel %vm461, %v572, 0.0
          %v577 = vsel %vm461, %v573, 0.0
          %v578 = vpack.c.bf16 %v575, %v574
          %v579 = vpack.c.bf16 %v577, %v576
          %v582 = vunpack.c.l.b16 %v578
          %v583 = vunpack.c.h.b16 %v578
          %v584 = vunpack.c.l.b16 %v579
          %v585 = vunpack.c.h.b16 %v579
          %v586 = vpack.c.b16 %v582, %v582
          %v587 = vpack.c.b16 %v583, %v583
          %v588 = vpack.c.b16 %v584, %v584
          %v589 = vpack.c.b16 %v585, %v585
          %594 = vst [vmem:[%s300] sm:$0xf] %v586
          %595 = vst [vmem:[%s300 + $0x4] sm:$0xf] %v587
          %596 = vst [vmem:[%s300 + $0x8] sm:$0xf] %v588
          %597 = vst [vmem:[%s300 + $0xc] sm:$0xf] %v589
        $region85: #{_lambda_.8} parent=72 // pred_fallthru
          _
        %p598 = scmp.lt.s32.totalorder %s19, 1
        %s599 = scalar_select %p598, %s19, 1
        %s600 = smul.addr %s599, 4
        %s601 = smul.addr %s600, 4
        %s602 = scalar_lea.vmem %s4, %s601
        // Predicated region
        $region86: #{_lambda_.8} parent=72 // pred_check
          %p603 = pneg %p141
        $region87: #{_lambda_.8} parent=72 // pred_check_branch
          %605 = sbr.rel (%p603) target = $region89
        $region88: #{_lambda_.8} parent=72 // pred_region
          _
        $region89: #{_lambda_.8} parent=72 // pred_fallthru
          _
      $region73: #{_lambda_.8} parent=5 // pred_fallthru
        _
      %p606 = scmp.le.s32.totalorder 2, %s10
      // Predicated region
      $region90: #{_lambda_.8} parent=5 // pred_check
        %p607 = pneg %p606
      $region91: #{_lambda_.8} parent=5 // pred_check_branch
        %609 = sbr.rel (%p607) target = $region93
      $region92: #{_lambda_.8} parent=5 // pred_region
        %s610 = ssub.s32 %s10, 2
        // Predicated region
        $region94: #{_lambda_.8} parent=92 // pred_check
          %p611 = pneg %p147
        $region95: #{_lambda_.8} parent=92 // pred_check_branch
          %613 = sbr.rel (%p611) target = $region97
        $region96: #{_lambda_.8} parent=92 // pred_region
          %p614 = scmp.lt.s32.totalorder %s21, 1
          %s615 = scalar_select %p614, %s21, 1
          %s616 = smul.addr %s615, 4
          %s617 = smul.addr %s616, 4
          %s618 = scalar_lea.vmem %s4, %s617
        $region97: #{_lambda_.8} parent=92 // pred_fallthru
          _
      $region93: #{_lambda_.8} parent=5 // pred_fallthru
        _
    $region6: #{_lambda_.8} parent=1 // loop_footer
      %s14 = sadd.s32 1, %s10
    $region7: #{_lambda_.8} parent=1 // loop_footer_branch
      %9 = sbr.rel target = $region3
    $region8: #{_lambda_.8} parent=1 // loop_exit
      _

// kernel: _lambda_.9
$region0: #{_lambda_.9}
  #allocation0 [shape = 'u32[]', space=smem, size = 0x4, offset = 0x4, fixed_abs, tag = 'smem constant byte address 0x4 - core index']
  #allocation1 [shape = 'u32[144,128]{1,0:T(1,128)}', space=vmem, size = 0x12000, scoped, tag = 'internal scratch']
  #allocation2 [shape = 'f32[1,1]{1,0:T(1,128)S(1)}', space=vmem, size = 0x200, scoped, tag = 'scoped memory for _lambda_.9']
  %s0 = inlined_call_operand.vmem [shape: bf16[512,256], index: 0, kind: input, shape index: {}]
  %s1 = inlined_call_operand.vmem [shape: f32[512,1], index: 1, kind: input, shape index: {}]
  %s2 = inlined_call_operand.<no memory space> [shape: f32[1,1], index: 2, kind: input, shape index: {}]
  %s3 = inlined_call_operand.vmem [shape: f32[1,256], index: 3, kind: output, shape index: {}]
  %s4 = sld [smem:[#allocation0]]
  $region22: #{_lambda_.9} parent=0
    _
  %s6 = ssub.s32 1, %s4
  %s7 = scalar_select 0, %s6, %s4
  %v8 = vstv %s2
  %9 = vst [vmem:[#allocation2] sm:$0x1] %v8
  // Predicated region
  $region2: #{_lambda_.9} parent=0 // pred_check
    _
  $region3: #{_lambda_.9} parent=0 // pred_check_branch
    %11 = sbr.rel (0) target = $region5
  $region4: #{_lambda_.9} parent=0 // pred_region
    _
  $region5: #{_lambda_.9} parent=0 // pred_fallthru
    _
  // Predicated region
  $region6: #{_lambda_.9} parent=0 // pred_check
    _
  $region7: #{_lambda_.9} parent=0 // pred_check_branch
    %13 = sbr.rel (0) target = $region9
  $region8: #{_lambda_.9} parent=0 // pred_region
    _
  $region9: #{_lambda_.9} parent=0 // pred_fallthru
    _
  // Predicated region
  $region10: #{_lambda_.9} parent=0 // pred_check
    _
  $region11: #{_lambda_.9} parent=0 // pred_check_branch
    %15 = sbr.rel (0) target = $region13
  $region12: #{_lambda_.9} parent=0 // pred_region
    _
  $region13: #{_lambda_.9} parent=0 // pred_fallthru
    _
  %v16 = vld [vmem:[%s1] sm:$0xff]
  %v17 = vld [vmem:[%s1 + $0x8] sm:$0xff]
  %v18 = vld [vmem:[%s1 + $0x10] sm:$0xff]
  %v19 = vld [vmem:[%s1 + $0x18] sm:$0xff]
  %v20 = vld [vmem:[%s1 + $0x20] sm:$0xff]
  %v21 = vld [vmem:[%s1 + $0x28] sm:$0xff]
  %v22 = vld [vmem:[%s1 + $0x30] sm:$0xff]
  %v23 = vld [vmem:[%s1 + $0x38] sm:$0xff]
  %v24 = vld [vmem:[%s1 + $0x40] sm:$0xff]
  %v25 = vld [vmem:[%s1 + $0x48] sm:$0xff]
  %v26 = vld [vmem:[%s1 + $0x50] sm:$0xff]
  %v27 = vld [vmem:[%s1 + $0x58] sm:$0xff]
  %v28 = vld [vmem:[%s1 + $0x60] sm:$0xff]
  %v29 = vld [vmem:[%s1 + $0x68] sm:$0xff]
  %v30 = vld [vmem:[%s1 + $0x70] sm:$0xff]
  %v31 = vld [vmem:[%s1 + $0x78] sm:$0xff]
  %v32 = vld [vmem:[%s1 + $0x80] sm:$0xff]
  %v33 = vld [vmem:[%s1 + $0x88] sm:$0xff]
  %v34 = vld [vmem:[%s1 + $0x90] sm:$0xff]
  %v35 = vld [vmem:[%s1 + $0x98] sm:$0xff]
  %v36 = vld [vmem:[%s1 + $0xa0] sm:$0xff]
  %v37 = vld [vmem:[%s1 + $0xa8] sm:$0xff]
  %v38 = vld [vmem:[%s1 + $0xb0] sm:$0xff]
  %v39 = vld [vmem:[%s1 + $0xb8] sm:$0xff]
  %v40 = vld [vmem:[%s1 + $0xc0] sm:$0xff]
  %v41 = vld [vmem:[%s1 + $0xc8] sm:$0xff]
  %v42 = vld [vmem:[%s1 + $0xd0] sm:$0xff]
  %v43 = vld [vmem:[%s1 + $0xd8] sm:$0xff]
  %v44 = vld [vmem:[%s1 + $0xe0] sm:$0xff]
  %v45 = vld [vmem:[%s1 + $0xe8] sm:$0xff]
  %v46 = vld [vmem:[%s1 + $0xf0] sm:$0xff]
  %v47 = vld [vmem:[%s1 + $0xf8] sm:$0xff]
  %v48 = vld [vmem:[%s1 + $0x100] sm:$0xff]
  %v49 = vld [vmem:[%s1 + $0x108] sm:$0xff]
  %v50 = vld [vmem:[%s1 + $0x110] sm:$0xff]
  %v51 = vld [vmem:[%s1 + $0x118] sm:$0xff]
  %v52 = vld [vmem:[%s1 + $0x120] sm:$0xff]
  %v53 = vld [vmem:[%s1 + $0x128] sm:$0xff]
  %v54 = vld [vmem:[%s1 + $0x130] sm:$0xff]
  %v55 = vld [vmem:[%s1 + $0x138] sm:$0xff]
  %v56 = vld [vmem:[%s1 + $0x140] sm:$0xff]
  %v57 = vld [vmem:[%s1 + $0x148] sm:$0xff]
  %v58 = vld [vmem:[%s1 + $0x150] sm:$0xff]
  %v59 = vld [vmem:[%s1 + $0x158] sm:$0xff]
  %v60 = vld [vmem:[%s1 + $0x160] sm:$0xff]
  %v61 = vld [vmem:[%s1 + $0x168] sm:$0xff]
  %v62 = vld [vmem:[%s1 + $0x170] sm:$0xff]
  %v63 = vld [vmem:[%s1 + $0x178] sm:$0xff]
  %v64 = vld [vmem:[%s1 + $0x180] sm:$0xff]
  %v65 = vld [vmem:[%s1 + $0x188] sm:$0xff]
  %v66 = vld [vmem:[%s1 + $0x190] sm:$0xff]
  %v67 = vld [vmem:[%s1 + $0x198] sm:$0xff]
  %v68 = vld [vmem:[%s1 + $0x1a0] sm:$0xff]
  %v69 = vld [vmem:[%s1 + $0x1a8] sm:$0xff]
  %v70 = vld [vmem:[%s1 + $0x1b0] sm:$0xff]
  %v71 = vld [vmem:[%s1 + $0x1b8] sm:$0xff]
  %v72 = vld [vmem:[%s1 + $0x1c0] sm:$0xff]
  %v73 = vld [vmem:[%s1 + $0x1c8] sm:$0xff]
  %v74 = vld [vmem:[%s1 + $0x1d0] sm:$0xff]
  %v75 = vld [vmem:[%s1 + $0x1d8] sm:$0xff]
  %v76 = vld [vmem:[%s1 + $0x1e0] sm:$0xff]
  %v77 = vld [vmem:[%s1 + $0x1e8] sm:$0xff]
  %v78 = vld [vmem:[%s1 + $0x1f0] sm:$0xff]
  %v79 = vld [vmem:[%s1 + $0x1f8] sm:$0xff]
  %v80 = vld [vmem:[%s0] sm:$0xff]
  %v81 = vld [vmem:[%s0 + $0x8] sm:$0xff]
  %v82 = vld [vmem:[%s0 + $0x10] sm:$0xff]
  %v83 = vld [vmem:[%s0 + $0x18] sm:$0xff]
  %v84 = vld [vmem:[%s0 + $0x20] sm:$0xff]
  %v85 = vld [vmem:[%s0 + $0x28] sm:$0xff]
  %v86 = vld [vmem:[%s0 + $0x30] sm:$0xff]
  %v87 = vld [vmem:[%s0 + $0x38] sm:$0xff]
  %v88 = vld [vmem:[%s0 + $0x40] sm:$0xff]
  %v89 = vld [vmem:[%s0 + $0x48] sm:$0xff]
  %v90 = vld [vmem:[%s0 + $0x50] sm:$0xff]
  %v91 = vld [vmem:[%s0 + $0x58] sm:$0xff]
  %v92 = vld [vmem:[%s0 + $0x60] sm:$0xff]
  %v93 = vld [vmem:[%s0 + $0x68] sm:$0xff]
  %v94 = vld [vmem:[%s0 + $0x70] sm:$0xff]
  %v95 = vld [vmem:[%s0 + $0x78] sm:$0xff]
  %v96 = vld [vmem:[%s0 + $0x80] sm:$0xff]
  %v97 = vld [vmem:[%s0 + $0x88] sm:$0xff]
  %v98 = vld [vmem:[%s0 + $0x90] sm:$0xff]
  %v99 = vld [vmem:[%s0 + $0x98] sm:$0xff]
  %v100 = vld [vmem:[%s0 + $0xa0] sm:$0xff]
  %v101 = vld [vmem:[%s0 + $0xa8] sm:$0xff]
  %v102 = vld [vmem:[%s0 + $0xb0] sm:$0xff]
  %v103 = vld [vmem:[%s0 + $0xb8] sm:$0xff]
  %v104 = vld [vmem:[%s0 + $0xc0] sm:$0xff]
  %v105 = vld [vmem:[%s0 + $0xc8] sm:$0xff]
  %v106 = vld [vmem:[%s0 + $0xd0] sm:$0xff]
  %v107 = vld [vmem:[%s0 + $0xd8] sm:$0xff]
  %v108 = vld [vmem:[%s0 + $0xe0] sm:$0xff]
  %v109 = vld [vmem:[%s0 + $0xe8] sm:$0xff]
  %v110 = vld [vmem:[%s0 + $0xf0] sm:$0xff]
  %v111 = vld [vmem:[%s0 + $0xf8] sm:$0xff]
  %v112 = vld [vmem:[%s0 + $0x100] sm:$0xff]
  %v113 = vld [vmem:[%s0 + $0x108] sm:$0xff]
  %v114 = vld [vmem:[%s0 + $0x110] sm:$0xff]
  %v115 = vld [vmem:[%s0 + $0x118] sm:$0xff]
  %v116 = vld [vmem:[%s0 + $0x120] sm:$0xff]
  %v117 = vld [vmem:[%s0 + $0x128] sm:$0xff]
  %v118 = vld [vmem:[%s0 + $0x130] sm:$0xff]
  %v119 = vld [vmem:[%s0 + $0x138] sm:$0xff]
  %v120 = vld [vmem:[%s0 + $0x140] sm:$0xff]
  %v121 = vld [vmem:[%s0 + $0x148] sm:$0xff]
  %v122 = vld [vmem:[%s0 + $0x150] sm:$0xff]
  %v123 = vld [vmem:[%s0 + $0x158] sm:$0xff]
  %v124 = vld [vmem:[%s0 + $0x160] sm:$0xff]
  %v125 = vld [vmem:[%s0 + $0x168] sm:$0xff]
  %v126 = vld [vmem:[%s0 + $0x170] sm:$0xff]
  %v127 = vld [vmem:[%s0 + $0x178] sm:$0xff]
  %v128 = vld [vmem:[%s0 + $0x180] sm:$0xff]
  %v129 = vld [vmem:[%s0 + $0x188] sm:$0xff]
  %v130 = vld [vmem:[%s0 + $0x190] sm:$0xff]
  %v131 = vld [vmem:[%s0 + $0x198] sm:$0xff]
  %v132 = vld [vmem:[%s0 + $0x1a0] sm:$0xff]
  %v133 = vld [vmem:[%s0 + $0x1a8] sm:$0xff]
  %v134 = vld [vmem:[%s0 + $0x1b0] sm:$0xff]
  %v135 = vld [vmem:[%s0 + $0x1b8] sm:$0xff]
  %v136 = vld [vmem:[%s0 + $0x1c0] sm:$0xff]
  %v137 = vld [vmem:[%s0 + $0x1c8] sm:$0xff]
  %v138 = vld [vmem:[%s0 + $0x1d0] sm:$0xff]
  %v139 = vld [vmem:[%s0 + $0x1d8] sm:$0xff]
  %v140 = vld [vmem:[%s0 + $0x1e0] sm:$0xff]
  %v141 = vld [vmem:[%s0 + $0x1e8] sm:$0xff]
  %v142 = vld [vmem:[%s0 + $0x1f0] sm:$0xff]
  %v143 = vld [vmem:[%s0 + $0x1f8] sm:$0xff]
  %v144 = vunpack.c.l.bf16 %v80
  %v145 = vunpack.c.h.bf16 %v80
  %v146 = vunpack.c.l.bf16 %v81
  %v147 = vunpack.c.h.bf16 %v81
  %v148 = vunpack.c.l.bf16 %v82
  %v149 = vunpack.c.h.bf16 %v82
  %v150 = vunpack.c.l.bf16 %v83
  %v151 = vunpack.c.h.bf16 %v83
  %v152 = vunpack.c.l.bf16 %v84
  %v153 = vunpack.c.h.bf16 %v84
  %v154 = vunpack.c.l.bf16 %v85
  %v155 = vunpack.c.h.bf16 %v85
  %v156 = vunpack.c.l.bf16 %v86
  %v157 = vunpack.c.h.bf16 %v86
  %v158 = vunpack.c.l.bf16 %v87
  %v159 = vunpack.c.h.bf16 %v87
  %v160 = vunpack.c.l.bf16 %v88
  %v161 = vunpack.c.h.bf16 %v88
  %v162 = vunpack.c.l.bf16 %v89
  %v163 = vunpack.c.h.bf16 %v89
  %v164 = vunpack.c.l.bf16 %v90
  %v165 = vunpack.c.h.bf16 %v90
  %v166 = vunpack.c.l.bf16 %v91
  %v167 = vunpack.c.h.bf16 %v91
  %v168 = vunpack.c.l.bf16 %v92
  %v169 = vunpack.c.h.bf16 %v92
  %v170 = vunpack.c.l.bf16 %v93
  %v171 = vunpack.c.h.bf16 %v93
  %v172 = vunpack.c.l.bf16 %v94
  %v173 = vunpack.c.h.bf16 %v94
  %v174 = vunpack.c.l.bf16 %v95
  %v175 = vunpack.c.h.bf16 %v95
  %v176 = vunpack.c.l.bf16 %v96
  %v177 = vunpack.c.h.bf16 %v96
  %v178 = vunpack.c.l.bf16 %v97
  %v179 = vunpack.c.h.bf16 %v97
  %v180 = vunpack.c.l.bf16 %v98
  %v181 = vunpack.c.h.bf16 %v98
  %v182 = vunpack.c.l.bf16 %v99
  %v183 = vunpack.c.h.bf16 %v99
  %v184 = vunpack.c.l.bf16 %v100
  %v185 = vunpack.c.h.bf16 %v100
  %v186 = vunpack.c.l.bf16 %v101
  %v187 = vunpack.c.h.bf16 %v101
  %v188 = vunpack.c.l.bf16 %v102
  %v189 = vunpack.c.h.bf16 %v102
  %v190 = vunpack.c.l.bf16 %v103
  %v191 = vunpack.c.h.bf16 %v103
  %v192 = vunpack.c.l.bf16 %v104
  %v193 = vunpack.c.h.bf16 %v104
  %v194 = vunpack.c.l.bf16 %v105
  %v195 = vunpack.c.h.bf16 %v105
  %v196 = vunpack.c.l.bf16 %v106
  %v197 = vunpack.c.h.bf16 %v106
  %v198 = vunpack.c.l.bf16 %v107
  %v199 = vunpack.c.h.bf16 %v107
  %v200 = vunpack.c.l.bf16 %v108
  %v201 = vunpack.c.h.bf16 %v108
  %v202 = vunpack.c.l.bf16 %v109
  %v203 = vunpack.c.h.bf16 %v109
  %v204 = vunpack.c.l.bf16 %v110
  %v205 = vunpack.c.h.bf16 %v110
  %v206 = vunpack.c.l.bf16 %v111
  %v207 = vunpack.c.h.bf16 %v111
  %v208 = vunpack.c.l.bf16 %v112
  %v209 = vunpack.c.h.bf16 %v112
  %v210 = vunpack.c.l.bf16 %v113
  %v211 = vunpack.c.h.bf16 %v113
  %v212 = vunpack.c.l.bf16 %v114
  %v213 = vunpack.c.h.bf16 %v114
  %v214 = vunpack.c.l.bf16 %v115
  %v215 = vunpack.c.h.bf16 %v115
  %v216 = vunpack.c.l.bf16 %v116
  %v217 = vunpack.c.h.bf16 %v116
  %v218 = vunpack.c.l.bf16 %v117
  %v219 = vunpack.c.h.bf16 %v117
  %v220 = vunpack.c.l.bf16 %v118
  %v221 = vunpack.c.h.bf16 %v118
  %v222 = vunpack.c.l.bf16 %v119
  %v223 = vunpack.c.h.bf16 %v119
  %v224 = vunpack.c.l.bf16 %v120
  %v225 = vunpack.c.h.bf16 %v120
  %v226 = vunpack.c.l.bf16 %v121
  %v227 = vunpack.c.h.bf16 %v121
  %v228 = vunpack.c.l.bf16 %v122
  %v229 = vunpack.c.h.bf16 %v122
  %v230 = vunpack.c.l.bf16 %v123
  %v231 = vunpack.c.h.bf16 %v123
  %v232 = vunpack.c.l.bf16 %v124
  %v233 = vunpack.c.h.bf16 %v124
  %v234 = vunpack.c.l.bf16 %v125
  %v235 = vunpack.c.h.bf16 %v125
  %v236 = vunpack.c.l.bf16 %v126
  %v237 = vunpack.c.h.bf16 %v126
  %v238 = vunpack.c.l.bf16 %v127
  %v239 = vunpack.c.h.bf16 %v127
  %v240 = vunpack.c.l.bf16 %v128
  %v241 = vunpack.c.h.bf16 %v128
  %v242 = vunpack.c.l.bf16 %v129
  %v243 = vunpack.c.h.bf16 %v129
  %v244 = vunpack.c.l.bf16 %v130
  %v245 = vunpack.c.h.bf16 %v130
  %v246 = vunpack.c.l.bf16 %v131
  %v247 = vunpack.c.h.bf16 %v131
  %v248 = vunpack.c.l.bf16 %v132
  %v249 = vunpack.c.h.bf16 %v132
  %v250 = vunpack.c.l.bf16 %v133
  %v251 = vunpack.c.h.bf16 %v133
  %v252 = vunpack.c.l.bf16 %v134
  %v253 = vunpack.c.h.bf16 %v134
  %v254 = vunpack.c.l.bf16 %v135
  %v255 = vunpack.c.h.bf16 %v135
  %v256 = vunpack.c.l.bf16 %v136
  %v257 = vunpack.c.h.bf16 %v136
  %v258 = vunpack.c.l.bf16 %v137
  %v259 = vunpack.c.h.bf16 %v137
  %v260 = vunpack.c.l.bf16 %v138
  %v261 = vunpack.c.h.bf16 %v138
  %v262 = vunpack.c.l.bf16 %v139
  %v263 = vunpack.c.h.bf16 %v139
  %v264 = vunpack.c.l.bf16 %v140
  %v265 = vunpack.c.h.bf16 %v140
  %v266 = vunpack.c.l.bf16 %v141
  %v267 = vunpack.c.h.bf16 %v141
  %v268 = vunpack.c.l.bf16 %v142
  %v269 = vunpack.c.h.bf16 %v142
  %v270 = vunpack.c.l.bf16 %v143
  %v271 = vunpack.c.h.bf16 %v143
  %273 = vset.pattern.permute.xlu0 0
  %274 = vperm.xlu0 %273, %v16
  %v275 = vpop.permute.xlu0 %274
  %278 = vset.pattern.permute.xlu0 0
  %279 = vperm.xlu0 %278, %v17
  %v280 = vpop.permute.xlu0 %279
  %283 = vset.pattern.permute.xlu0 0
  %284 = vperm.xlu0 %283, %v18
  %v285 = vpop.permute.xlu0 %284
  %288 = vset.pattern.permute.xlu0 0
  %289 = vperm.xlu0 %288, %v19
  %v290 = vpop.permute.xlu0 %289
  %293 = vset.pattern.permute.xlu0 0
  %294 = vperm.xlu0 %293, %v20
  %v295 = vpop.permute.xlu0 %294
  %298 = vset.pattern.permute.xlu0 0
  %299 = vperm.xlu0 %298, %v21
  %v300 = vpop.permute.xlu0 %299
  %303 = vset.pattern.permute.xlu0 0
  %304 = vperm.xlu0 %303, %v22
  %v305 = vpop.permute.xlu0 %304
  %308 = vset.pattern.permute.xlu0 0
  %309 = vperm.xlu0 %308, %v23
  %v310 = vpop.permute.xlu0 %309
  %313 = vset.pattern.permute.xlu0 0
  %314 = vperm.xlu0 %313, %v24
  %v315 = vpop.permute.xlu0 %314
  %318 = vset.pattern.permute.xlu0 0
  %319 = vperm.xlu0 %318, %v25
  %v320 = vpop.permute.xlu0 %319
  %323 = vset.pattern.permute.xlu0 0
  %324 = vperm.xlu0 %323, %v26
  %v325 = vpop.permute.xlu0 %324
  %328 = vset.pattern.permute.xlu0 0
  %329 = vperm.xlu0 %328, %v27
  %v330 = vpop.permute.xlu0 %329
  %333 = vset.pattern.permute.xlu0 0
  %334 = vperm.xlu0 %333, %v28
  %v335 = vpop.permute.xlu0 %334
  %338 = vset.pattern.permute.xlu0 0
  %339 = vperm.xlu0 %338, %v29
  %v340 = vpop.permute.xlu0 %339
  %343 = vset.pattern.permute.xlu0 0
  %344 = vperm.xlu0 %343, %v30
  %v345 = vpop.permute.xlu0 %344
  %348 = vset.pattern.permute.xlu0 0
  %349 = vperm.xlu0 %348, %v31
  %v350 = vpop.permute.xlu0 %349
  %353 = vset.pattern.permute.xlu0 0
  %354 = vperm.xlu0 %353, %v32
  %v355 = vpop.permute.xlu0 %354
  %358 = vset.pattern.permute.xlu0 0
  %359 = vperm.xlu0 %358, %v33
  %v360 = vpop.permute.xlu0 %359
  %363 = vset.pattern.permute.xlu0 0
  %364 = vperm.xlu0 %363, %v34
  %v365 = vpop.permute.xlu0 %364
  %368 = vset.pattern.permute.xlu0 0
  %369 = vperm.xlu0 %368, %v35
  %v370 = vpop.permute.xlu0 %369
  %373 = vset.pattern.permute.xlu0 0
  %374 = vperm.xlu0 %373, %v36
  %v375 = vpop.permute.xlu0 %374
  %378 = vset.pattern.permute.xlu0 0
  %379 = vperm.xlu0 %378, %v37
  %v380 = vpop.permute.xlu0 %379
  %383 = vset.pattern.permute.xlu0 0
  %384 = vperm.xlu0 %383, %v38
  %v385 = vpop.permute.xlu0 %384
  %388 = vset.pattern.permute.xlu0 0
  %389 = vperm.xlu0 %388, %v39
  %v390 = vpop.permute.xlu0 %389
  %393 = vset.pattern.permute.xlu0 0
  %394 = vperm.xlu0 %393, %v40
  %v395 = vpop.permute.xlu0 %394
  %398 = vset.pattern.permute.xlu0 0
  %399 = vperm.xlu0 %398, %v41
  %v400 = vpop.permute.xlu0 %399
  %403 = vset.pattern.permute.xlu0 0
  %404 = vperm.xlu0 %403, %v42
  %v405 = vpop.permute.xlu0 %404
  %408 = vset.pattern.permute.xlu0 0
  %409 = vperm.xlu0 %408, %v43
  %v410 = vpop.permute.xlu0 %409
  %413 = vset.pattern.permute.xlu0 0
  %414 = vperm.xlu0 %413, %v44
  %v415 = vpop.permute.xlu0 %414
  %418 = vset.pattern.permute.xlu0 0
  %419 = vperm.xlu0 %418, %v45
  %v420 = vpop.permute.xlu0 %419
  %423 = vset.pattern.permute.xlu0 0
  %424 = vperm.xlu0 %423, %v46
  %v425 = vpop.permute.xlu0 %424
  %428 = vset.pattern.permute.xlu0 0
  %429 = vperm.xlu0 %428, %v47
  %v430 = vpop.permute.xlu0 %429
  %433 = vset.pattern.permute.xlu0 0
  %434 = vperm.xlu0 %433, %v48
  %v435 = vpop.permute.xlu0 %434
  %438 = vset.pattern.permute.xlu0 0
  %439 = vperm.xlu0 %438, %v49
  %v440 = vpop.permute.xlu0 %439
  %443 = vset.pattern.permute.xlu0 0
  %444 = vperm.xlu0 %443, %v50
  %v445 = vpop.permute.xlu0 %444
  %448 = vset.pattern.permute.xlu0 0
  %449 = vperm.xlu0 %448, %v51
  %v450 = vpop.permute.xlu0 %449
  %453 = vset.pattern.permute.xlu0 0
  %454 = vperm.xlu0 %453, %v52
  %v455 = vpop.permute.xlu0 %454
  %458 = vset.pattern.permute.xlu0 0
  %459 = vperm.xlu0 %458, %v53
  %v460 = vpop.permute.xlu0 %459
  %463 = vset.pattern.permute.xlu0 0
  %464 = vperm.xlu0 %463, %v54
  %v465 = vpop.permute.xlu0 %464
  %468 = vset.pattern.permute.xlu0 0
  %469 = vperm.xlu0 %468, %v55
  %v470 = vpop.permute.xlu0 %469
  %473 = vset.pattern.permute.xlu0 0
  %474 = vperm.xlu0 %473, %v56
  %v475 = vpop.permute.xlu0 %474
  %478 = vset.pattern.permute.xlu0 0
  %479 = vperm.xlu0 %478, %v57
  %v480 = vpop.permute.xlu0 %479
  %483 = vset.pattern.permute.xlu0 0
  %484 = vperm.xlu0 %483, %v58
  %v485 = vpop.permute.xlu0 %484
  %488 = vset.pattern.permute.xlu0 0
  %489 = vperm.xlu0 %488, %v59
  %v490 = vpop.permute.xlu0 %489
  %493 = vset.pattern.permute.xlu0 0
  %494 = vperm.xlu0 %493, %v60
  %v495 = vpop.permute.xlu0 %494
  %498 = vset.pattern.permute.xlu0 0
  %499 = vperm.xlu0 %498, %v61
  %v500 = vpop.permute.xlu0 %499
  %503 = vset.pattern.permute.xlu0 0
  %504 = vperm.xlu0 %503, %v62
  %v505 = vpop.permute.xlu0 %504
  %508 = vset.pattern.permute.xlu0 0
  %509 = vperm.xlu0 %508, %v63
  %v510 = vpop.permute.xlu0 %509
  %513 = vset.pattern.permute.xlu0 0
  %514 = vperm.xlu0 %513, %v64
  %v515 = vpop.permute.xlu0 %514
  %518 = vset.pattern.permute.xlu0 0
  %519 = vperm.xlu0 %518, %v65
  %v520 = vpop.permute.xlu0 %519
  %523 = vset.pattern.permute.xlu0 0
  %524 = vperm.xlu0 %523, %v66
  %v525 = vpop.permute.xlu0 %524
  %528 = vset.pattern.permute.xlu0 0
  %529 = vperm.xlu0 %528, %v67
  %v530 = vpop.permute.xlu0 %529
  %533 = vset.pattern.permute.xlu0 0
  %534 = vperm.xlu0 %533, %v68
  %v535 = vpop.permute.xlu0 %534
  %538 = vset.pattern.permute.xlu0 0
  %539 = vperm.xlu0 %538, %v69
  %v540 = vpop.permute.xlu0 %539
  %543 = vset.pattern.permute.xlu0 0
  %544 = vperm.xlu0 %543, %v70
  %v545 = vpop.permute.xlu0 %544
  %548 = vset.pattern.permute.xlu0 0
  %549 = vperm.xlu0 %548, %v71
  %v550 = vpop.permute.xlu0 %549
  %553 = vset.pattern.permute.xlu0 0
  %554 = vperm.xlu0 %553, %v72
  %v555 = vpop.permute.xlu0 %554
  %558 = vset.pattern.permute.xlu0 0
  %559 = vperm.xlu0 %558, %v73
  %v560 = vpop.permute.xlu0 %559
  %563 = vset.pattern.permute.xlu0 0
  %564 = vperm.xlu0 %563, %v74
  %v565 = vpop.permute.xlu0 %564
  %568 = vset.pattern.permute.xlu0 0
  %569 = vperm.xlu0 %568, %v75
  %v570 = vpop.permute.xlu0 %569
  %573 = vset.pattern.permute.xlu0 0
  %574 = vperm.xlu0 %573, %v76
  %v575 = vpop.permute.xlu0 %574
  %578 = vset.pattern.permute.xlu0 0
  %579 = vperm.xlu0 %578, %v77
  %v580 = vpop.permute.xlu0 %579
  %583 = vset.pattern.permute.xlu0 0
  %584 = vperm.xlu0 %583, %v78
  %v585 = vpop.permute.xlu0 %584
  %588 = vset.pattern.permute.xlu0 0
  %589 = vperm.xlu0 %588, %v79
  %v590 = vpop.permute.xlu0 %589
  %v592 = vmul.f32 %v275, %v144
  %v593 = vmul.f32 %v275, %v145
  %v594 = vmul.f32 %v280, %v146
  %v595 = vmul.f32 %v280, %v147
  %v596 = vmul.f32 %v285, %v148
  %v597 = vmul.f32 %v285, %v149
  %v598 = vmul.f32 %v290, %v150
  %v599 = vmul.f32 %v290, %v151
  %v600 = vmul.f32 %v295, %v152
  %v601 = vmul.f32 %v295, %v153
  %v602 = vmul.f32 %v300, %v154
  %v603 = vmul.f32 %v300, %v155
  %v604 = vmul.f32 %v305, %v156
  %v605 = vmul.f32 %v305, %v157
  %v606 = vmul.f32 %v310, %v158
  %v607 = vmul.f32 %v310, %v159
  %v608 = vmul.f32 %v315, %v160
  %v609 = vmul.f32 %v315, %v161
  %v610 = vmul.f32 %v320, %v162
  %v611 = vmul.f32 %v320, %v163
  %v612 = vmul.f32 %v325, %v164
  %v613 = vmul.f32 %v325, %v165
  %v614 = vmul.f32 %v330, %v166
  %v615 = vmul.f32 %v330, %v167
  %v616 = vmul.f32 %v335, %v168
  %v617 = vmul.f32 %v335, %v169
  %v618 = vmul.f32 %v340, %v170
  %v619 = vmul.f32 %v340, %v171
  %v620 = vmul.f32 %v345, %v172
  %v621 = vmul.f32 %v345, %v173
  %v622 = vmul.f32 %v350, %v174
  %v623 = vmul.f32 %v350, %v175
  %v624 = vmul.f32 %v355, %v176
  %v625 = vmul.f32 %v355, %v177
  %v626 = vmul.f32 %v360, %v178
  %v627 = vmul.f32 %v360, %v179
  %v628 = vmul.f32 %v365, %v180
  %v629 = vmul.f32 %v365, %v181
  %v630 = vmul.f32 %v370, %v182
  %v631 = vmul.f32 %v370, %v183
  %v632 = vmul.f32 %v375, %v184
  %v633 = vmul.f32 %v375, %v185
  %v634 = vmul.f32 %v380, %v186
  %v635 = vmul.f32 %v380, %v187
  %v636 = vmul.f32 %v385, %v188
  %v637 = vmul.f32 %v385, %v189
  %v638 = vmul.f32 %v390, %v190
  %v639 = vmul.f32 %v390, %v191
  %v640 = vmul.f32 %v395, %v192
  %v641 = vmul.f32 %v395, %v193
  %v642 = vmul.f32 %v400, %v194
  %v643 = vmul.f32 %v400, %v195
  %v644 = vmul.f32 %v405, %v196
  %v645 = vmul.f32 %v405, %v197
  %v646 = vmul.f32 %v410, %v198
  %v647 = vmul.f32 %v410, %v199
  %v648 = vmul.f32 %v415, %v200
  %v649 = vmul.f32 %v415, %v201
  %v650 = vmul.f32 %v420, %v202
  %v651 = vmul.f32 %v420, %v203
  %v652 = vmul.f32 %v425, %v204
  %v653 = vmul.f32 %v425, %v205
  %v654 = vmul.f32 %v430, %v206
  %v655 = vmul.f32 %v430, %v207
  %v656 = vmul.f32 %v435, %v208
  %v657 = vmul.f32 %v435, %v209
  %v658 = vmul.f32 %v440, %v210
  %v659 = vmul.f32 %v440, %v211
  %v660 = vmul.f32 %v445, %v212
  %v661 = vmul.f32 %v445, %v213
  %v662 = vmul.f32 %v450, %v214
  %v663 = vmul.f32 %v450, %v215
  %v664 = vmul.f32 %v455, %v216
  %v665 = vmul.f32 %v455, %v217
  %v666 = vmul.f32 %v460, %v218
  %v667 = vmul.f32 %v460, %v219
  %v668 = vmul.f32 %v465, %v220
  %v669 = vmul.f32 %v465, %v221
  %v670 = vmul.f32 %v470, %v222
  %v671 = vmul.f32 %v470, %v223
  %v672 = vmul.f32 %v475, %v224
  %v673 = vmul.f32 %v475, %v225
  %v674 = vmul.f32 %v480, %v226
  %v675 = vmul.f32 %v480, %v227
  %v676 = vmul.f32 %v485, %v228
  %v677 = vmul.f32 %v485, %v229
  %v678 = vmul.f32 %v490, %v230
  %v679 = vmul.f32 %v490, %v231
  %v680 = vmul.f32 %v495, %v232
  %v681 = vmul.f32 %v495, %v233
  %v682 = vmul.f32 %v500, %v234
  %v683 = vmul.f32 %v500, %v235
  %v684 = vmul.f32 %v505, %v236
  %v685 = vmul.f32 %v505, %v237
  %v686 = vmul.f32 %v510, %v238
  %v687 = vmul.f32 %v510, %v239
  %v688 = vmul.f32 %v515, %v240
  %v689 = vmul.f32 %v515, %v241
  %v690 = vmul.f32 %v520, %v242
  %v691 = vmul.f32 %v520, %v243
  %v692 = vmul.f32 %v525, %v244
  %v693 = vmul.f32 %v525, %v245
  %v694 = vmul.f32 %v530, %v246
  %v695 = vmul.f32 %v530, %v247
  %v696 = vmul.f32 %v535, %v248
  %v697 = vmul.f32 %v535, %v249
  %v698 = vmul.f32 %v540, %v250
  %v699 = vmul.f32 %v540, %v251
  %v700 = vmul.f32 %v545, %v252
  %v701 = vmul.f32 %v545, %v253
  %v702 = vmul.f32 %v550, %v254
  %v703 = vmul.f32 %v550, %v255
  %v704 = vmul.f32 %v555, %v256
  %v705 = vmul.f32 %v555, %v257
  %v706 = vmul.f32 %v560, %v258
  %v707 = vmul.f32 %v560, %v259
  %v708 = vmul.f32 %v565, %v260
  %v709 = vmul.f32 %v565, %v261
  %v710 = vmul.f32 %v570, %v262
  %v711 = vmul.f32 %v570, %v263
  %v712 = vmul.f32 %v575, %v264
  %v713 = vmul.f32 %v575, %v265
  %v714 = vmul.f32 %v580, %v266
  %v715 = vmul.f32 %v580, %v267
  %v716 = vmul.f32 %v585, %v268
  %v717 = vmul.f32 %v585, %v269
  %v718 = vmul.f32 %v590, %v270
  %v719 = vmul.f32 %v590, %v271
  %v720 = vadd.f32 %v592, %v594
  %v721 = vadd.f32 %v720, %v596
  %v722 = vadd.f32 %v721, %v598
  %v723 = vadd.f32 %v722, %v600
  %v724 = vadd.f32 %v723, %v602
  %v725 = vadd.f32 %v724, %v604
  %v726 = vadd.f32 %v725, %v606
  %v727 = vadd.f32 %v726, %v608
  %v728 = vadd.f32 %v727, %v610
  %v729 = vadd.f32 %v728, %v612
  %v730 = vadd.f32 %v729, %v614
  %v731 = vadd.f32 %v730, %v616
  %v732 = vadd.f32 %v731, %v618
  %v733 = vadd.f32 %v732, %v620
  %v734 = vadd.f32 %v733, %v622
  %v735 = vadd.f32 %v734, %v624
  %v736 = vadd.f32 %v735, %v626
  %v737 = vadd.f32 %v736, %v628
  %v738 = vadd.f32 %v737, %v630
  %v739 = vadd.f32 %v738, %v632
  %v740 = vadd.f32 %v739, %v634
  %v741 = vadd.f32 %v740, %v636
  %v742 = vadd.f32 %v741, %v638
  %v743 = vadd.f32 %v742, %v640
  %v744 = vadd.f32 %v743, %v642
  %v745 = vadd.f32 %v744, %v644
  %v746 = vadd.f32 %v745, %v646
  %v747 = vadd.f32 %v746, %v648
  %v748 = vadd.f32 %v747, %v650
  %v749 = vadd.f32 %v748, %v652
  %v750 = vadd.f32 %v749, %v654
  %v751 = vadd.f32 %v750, %v656
  %v752 = vadd.f32 %v751, %v658
  %v753 = vadd.f32 %v752, %v660
  %v754 = vadd.f32 %v753, %v662
  %v755 = vadd.f32 %v754, %v664
  %v756 = vadd.f32 %v755, %v666
  %v757 = vadd.f32 %v756, %v668
  %v758 = vadd.f32 %v757, %v670
  %v759 = vadd.f32 %v758, %v672
  %v760 = vadd.f32 %v759, %v674
  %v761 = vadd.f32 %v760, %v676
  %v762 = vadd.f32 %v761, %v678
  %v763 = vadd.f32 %v762, %v680
  %v764 = vadd.f32 %v763, %v682
  %v765 = vadd.f32 %v764, %v684
  %v766 = vadd.f32 %v765, %v686
  %v767 = vadd.f32 %v766, %v688
  %v768 = vadd.f32 %v767, %v690
  %v769 = vadd.f32 %v768, %v692
  %v770 = vadd.f32 %v769, %v694
  %v771 = vadd.f32 %v770, %v696
  %v772 = vadd.f32 %v771, %v698
  %v773 = vadd.f32 %v772, %v700
  %v774 = vadd.f32 %v773, %v702
  %v775 = vadd.f32 %v774, %v704
  %v776 = vadd.f32 %v775, %v706
  %v777 = vadd.f32 %v776, %v708
  %v778 = vadd.f32 %v777, %v710
  %v779 = vadd.f32 %v778, %v712
  %v780 = vadd.f32 %v779, %v714
  %v781 = vadd.f32 %v780, %v716
  %v782 = vadd.f32 %v781, %v718
  %v783 = vrot.slane %v782, 4
  %v784 = vadd.f32 %v782, %v783
  %v785 = vrot.slane %v784, 2
  %v786 = vadd.f32 %v784, %v785
  %v787 = vrot.slane %v786, 1
  %v788 = vadd.f32 %v786, %v787
  %v789 = vadd.f32 %v593, %v595
  %v790 = vadd.f32 %v789, %v597
  %v791 = vadd.f32 %v790, %v599
  %v792 = vadd.f32 %v791, %v601
  %v793 = vadd.f32 %v792, %v603
  %v794 = vadd.f32 %v793, %v605
  %v795 = vadd.f32 %v794, %v607
  %v796 = vadd.f32 %v795, %v609
  %v797 = vadd.f32 %v796, %v611
  %v798 = vadd.f32 %v797, %v613
  %v799 = vadd.f32 %v798, %v615
  %v800 = vadd.f32 %v799, %v617
  %v801 = vadd.f32 %v800, %v619
  %v802 = vadd.f32 %v801, %v621
  %v803 = vadd.f32 %v802, %v623
  %v804 = vadd.f32 %v803, %v625
  %v805 = vadd.f32 %v804, %v627
  %v806 = vadd.f32 %v805, %v629
  %v807 = vadd.f32 %v806, %v631
  %v808 = vadd.f32 %v807, %v633
  %v809 = vadd.f32 %v808, %v635
  %v810 = vadd.f32 %v809, %v637
  %v811 = vadd.f32 %v810, %v639
  %v812 = vadd.f32 %v811, %v641
  %v813 = vadd.f32 %v812, %v643
  %v814 = vadd.f32 %v813, %v645
  %v815 = vadd.f32 %v814, %v647
  %v816 = vadd.f32 %v815, %v649
  %v817 = vadd.f32 %v816, %v651
  %v818 = vadd.f32 %v817, %v653
  %v819 = vadd.f32 %v818, %v655
  %v820 = vadd.f32 %v819, %v657
  %v821 = vadd.f32 %v820, %v659
  %v822 = vadd.f32 %v821, %v661
  %v823 = vadd.f32 %v822, %v663
  %v824 = vadd.f32 %v823, %v665
  %v825 = vadd.f32 %v824, %v667
  %v826 = vadd.f32 %v825, %v669
  %v827 = vadd.f32 %v826, %v671
  %v828 = vadd.f32 %v827, %v673
  %v829 = vadd.f32 %v828, %v675
  %v830 = vadd.f32 %v829, %v677
  %v831 = vadd.f32 %v830, %v679
  %v832 = vadd.f32 %v831, %v681
  %v833 = vadd.f32 %v832, %v683
  %v834 = vadd.f32 %v833, %v685
  %v835 = vadd.f32 %v834, %v687
  %v836 = vadd.f32 %v835, %v689
  %v837 = vadd.f32 %v836, %v691
  %v838 = vadd.f32 %v837, %v693
  %v839 = vadd.f32 %v838, %v695
  %v840 = vadd.f32 %v839, %v697
  %v841 = vadd.f32 %v840, %v699
  %v842 = vadd.f32 %v841, %v701
  %v843 = vadd.f32 %v842, %v703
  %v844 = vadd.f32 %v843, %v705
  %v845 = vadd.f32 %v844, %v707
  %v846 = vadd.f32 %v845, %v709
  %v847 = vadd.f32 %v846, %v711
  %v848 = vadd.f32 %v847, %v713
  %v849 = vadd.f32 %v848, %v715
  %v850 = vadd.f32 %v849, %v717
  %v851 = vadd.f32 %v850, %v719
  %v852 = vrot.slane %v851, 4
  %v853 = vadd.f32 %v851, %v852
  %v854 = vrot.slane %v853, 2
  %v855 = vadd.f32 %v853, %v854
  %v856 = vrot.slane %v855, 1
  %v857 = vadd.f32 %v855, %v856
  %v858 = vld [vmem:[#allocation2] sm:$0x1]
  %860 = vset.pattern.permute.xlu0 0
  %861 = vperm.xlu0 %860, %v858
  %v862 = vpop.permute.xlu0 %861
  %v864 = vlaneseq
  %v865 = vshrl.u32 %v864, 7
  %v866 = vsub.s32 0, %v865
  %v867 = vrot.slane %v862, %v866
  %v868 = vadd.f32 %v788, %v867
  %v869 = vadd.f32 %v857, %v867
  %v872 = vcombine.low %v868, %v869
  %v874 = vunpack.c.l.s4 1966171168
  %v875 = vunpack.c.0.s8 %v874
  %v876 = vlaneseq
  %v877 = vshrl.u32 %v876, 7
  %v878 = vsub.s32 %v875, %v877
  %v879 = vrot.slane %v872, %v878
  %v881 = vunpack.c.l.s4 1966171168
  %v882 = vunpack.c.0.s8 %v881
  %v883 = vlaneseq
  %v884 = vshrl.u32 %v883, 7
  %v885 = vsub.s32 %v882, %v884
  %v886 = vrot.slane %v879, %v885
  %v888 = vlaneseq
  %vm889 = vcmp.ge.s32.totalorder %v888, 0
  %vm890 = vcmp.lt.s32.totalorder %v888, 256
  %vm891 = vmand %vm889, %vm890
  %892 = vst.msk [vmem:[%s3] sm:$0x3] %vm891, %v886
  // Predicated region
  $region14: #{_lambda_.9} parent=0 // pred_check
    _
  $region15: #{_lambda_.9} parent=0 // pred_check_branch
    %894 = sbr.rel (0) target = $region17
  $region16: #{_lambda_.9} parent=0 // pred_region
    _
  $region17: #{_lambda_.9} parent=0 // pred_fallthru
    _
  // Predicated region
  $region18: #{_lambda_.9} parent=0 // pred_check
    _
  $region19: #{_lambda_.9} parent=0 // pred_check_branch
    %896 = sbr.rel (0) target = $region21
  $region20: #{_lambda_.9} parent=0 // pred_region
    _
  $region21: #{_lambda_.9} parent=0 // pred_fallthru
    _

</llo_original>
